<compile_context>
chip_gen: v6e
topology: v6e:2x2x1
jax: 0.10.0
libtpu: 0.0.40
codegen_flags: <defaults>
</compile_context>

<pallas_src>
import jax
import jax.numpy as jnp
from jax.experimental import pallas as pl
from jax.experimental.pallas import tpu as pltpu

_LANE = 128


def _vmem_limit_bytes():
    """Generation-aware scoped-VMEM cap.

    v7x has 64 MiB physical VMEM -> stay around 48 MiB; v5e/v6e have 128 MiB
    -> allow 64 MiB (well above the 16/32 MiB scoped defaults)."""
    try:
        cap = pltpu.get_tpu_info().vmem_capacity_bytes
    except Exception:
        cap = 96 * 1024 * 1024            # conservative fallback
    return int(min(96 * 1024 * 1024, max(48 * 1024 * 1024, cap // 2)))


_VMEM_LIMIT = _vmem_limit_bytes()


# ---------------------------------------------------------------------------
# Kernel
# ---------------------------------------------------------------------------
def _res_layers_kernel(x_ref, w1_ref, w2_ref, b_ref, out_ref):
    """One (batch-block, layer) grid step of the fused ResLayers stack.

    x_ref  : (TN, H, W, C) f32  input batch block (only consumed at layer 0)
    w1_ref : (9L, C, C)  bf16   conv-1 taps, all layers, BN scale folded in
    w2_ref : (9L, C, C)  bf16   conv-2 taps, all layers, BN scale folded in
    b_ref  : (2L, 1, C)  f32    folded BN biases: [2l]=conv1, [2l+1]=conv2
    out_ref: (TN, H, W, C) f32  activation carry (resident across layer axis)
    """
    layer = pl.program_id(1)

    # First layer of each batch block: seed the activation carry.
    @pl.when(layer == 0)
    def _():
        out_ref[...] = x_ref[...]

    x = out_ref[...]                              # (TN, H, W, C) f32
    TN, H, W, C = x.shape
    M = TN * H * W

    # Zero pads for the spatial shifts, hoisted out of both conv calls
    # (JAX does not CSE broadcast_in_dim).
    zrow = jnp.zeros((TN, 1, W, C), jnp.bfloat16)
    zcol = jnp.zeros((TN, H, 1, C), jnp.bfloat16)

    def conv3x3(act, w_ref, bias):
        """3x3 same-padding conv: 9 shifted (M,C)@(C,C) MXU matmuls, f32 acc."""
        a = act.astype(jnp.bfloat16)
        # rows[dh][n, h] = a[n, h + dh - 1]   (zero outside the image)
        rows = (
            jnp.concatenate([zrow, a[:, :H - 1]], axis=1),
            a,
            jnp.concatenate([a[:, 1:], zrow], axis=1),
        )
        acc = jnp.zeros((M, C), jnp.float32)
        for dh in range(3):
            r = rows[dh]
            # cols[dw][n, h, w] = rows[dh][n, h, w + dw - 1]
            cols = (
                jnp.concatenate([zcol, r[:, :, :W - 1]], axis=2),
                r,
                jnp.concatenate([r[:, :, 1:], zcol], axis=2),
            )
            for dw in range(3):
                tap = dh * 3 + dw
                acc = acc + jnp.dot(
                    cols[dw].reshape(M, C),
                    w_ref[layer * 9 + tap],       # dynamic first-axis load
                    preferred_element_type=jnp.float32)
        return (acc + bias).reshape(TN, H, W, C)

    b1 = b_ref[layer * 2]                         # (1, C) f32
    b2 = b_ref[layer * 2 + 1]

    h = jnp.maximum(conv3x3(x, w1_ref, b1), 0.0)  # conv1 + BN + ReLU
    y = conv3x3(h, w2_ref, b2)                    # conv2 + BN
    out_ref[...] = jnp.maximum(y + x, 0.0)        # residual + ReLU


# ---------------------------------------------------------------------------
# Host-side wrapper
# ---------------------------------------------------------------------------
def _pick_batch_tile(n, h, w):
    """Pick TN so M = TN*H*W >= 256 (MXU rows); prefer an even number of >= 2
    batch blocks so both v7x TensorCores get work on the 'parallel' axis."""
    desired = min(max(1, pl.cdiv(256, h * w)), n)
    for tn in range(desired, 0, -1):
        nb = pl.cdiv(n, tn)
        if nb >= 2 and nb % 2 == 0:
            return tn
    return desired


@jax.jit
def res_layers_forward(x_nchw, w1, w2, b):
    """ResLayers forward. x_nchw: (N, C, H, W) float32 (PyTorch layout)."""
    N, C, H, W = x_nchw.shape
    Cp = w1.shape[-1]
    L = w1.shape[0] // 9

    x = jnp.transpose(x_nchw, (0, 2, 3, 1)).astype(jnp.float32)      # -> NHWC
    if Cp != C:                                                      # lane pad
        x = jnp.pad(x, ((0, 0), (0, 0), (0, 0), (0, Cp - C)))

    tn = _pick_batch_tile(N, H, W)
    nb = pl.cdiv(N, tn)
    if nb * tn != N:                                                 # batch pad
        x = jnp.pad(x, ((0, nb * tn - N), (0, 0), (0, 0), (0, 0)))

    act_spec = pl.BlockSpec((tn, H, W, Cp), lambda n, l: (n, 0, 0, 0))
    w_spec = pl.BlockSpec((9 * L, Cp, Cp), lambda n, l: (0, 0, 0))   # resident
    b_spec = pl.BlockSpec((2 * L, 1, Cp), lambda n, l: (0, 0, 0))    # resident

    out = pl.pallas_call(
        _res_layers_kernel,
        out_shape=jax.ShapeDtypeStruct((nb * tn, H, W, Cp), jnp.float32),
        grid_spec=pltpu.PrefetchScalarGridSpec(
            num_scalar_prefetch=0,
            grid=(nb, L),                          # (batch blocks, layers)
            in_specs=[act_spec, w_spec, w_spec, b_spec],
            out_specs=act_spec,                    # carry across the layer axis
        ),
        compiler_params=pltpu.CompilerParams(
            dimension_semantics=("parallel", "arbitrary"),
            vmem_limit_bytes=_VMEM_LIMIT,
        ),
    )(x, w1, w2, b)

    return jnp.transpose(out[:N, :, :, :C], (0, 3, 1, 2))            # -> NCHW


# ---------------------------------------------------------------------------
# Parameters (eval-mode BN folded into the conv weights / bias)
# ---------------------------------------------------------------------------
def init_params(key, channels, size, *, eps=1e-5):
    """Per-layer folded parameters.

    Returns a list of `size` tuples (w1, b1, w2, b2):
      w*: (9, C_in, C_out) float32 taps (row = dh*3+dw), BN scale folded in
      b*: (C,) float32 folded bias.
    """
    C = channels
    bound = (C * 9) ** -0.5                      # PyTorch Conv2d default bound
    layers = []
    for _ in range(size):
        convs = []
        for _ in range(2):
            key, kw, kb, kg, kbt, km, kv = jax.random.split(key, 7)
            w = jax.random.uniform(kw, (C, C, 3, 3), jnp.float32, -bound, bound)
            cb = jax.random.uniform(kb, (C,), jnp.float32, -bound, bound)
            # Non-trivial (post-training-like) BN statistics, eval mode.
            gamma = jax.random.uniform(kg, (C,), jnp.float32, 0.5, 1.5)
            beta = jax.random.uniform(kbt, (C,), jnp.float32, -0.3, 0.3)
            mean = 0.1 * jax.random.normal(km, (C,), jnp.float32)
            var = jax.random.uniform(kv, (C,), jnp.float32, 0.5, 1.5)
            scale = gamma * jax.lax.rsqrt(var + eps)
            # (C_out, C_in, 3, 3) -> (dh, dw, C_in, C_out) -> (9, C_in, C_out)
            w_taps = jnp.transpose(w, (2, 3, 1, 0)).reshape(9, C, C)
            convs.append((w_taps * scale[None, None, :],
                          (cb - mean) * scale + beta))
        (w1, b1), (w2, b2) = convs
        layers.append((w1, b1, w2, b2))
    return layers


def pack_params(params, *, compute_dtype=jnp.bfloat16, lane=_LANE):
    """Pack per-layer params into the kernel layout, zero-padding channels to a
    multiple of 128 lanes.

      w1, w2 : (9*L, Cp, Cp) compute_dtype   rows [9l:9l+9] = layer l taps
      b      : (2*L, 1, Cp)  float32         [2l] = conv1 bias, [2l+1] = conv2
    """
    C = params[0][0].shape[-1]
    Cp = pl.cdiv(C, lane) * lane
    pc = Cp - C

    def pad_w(w):
        return jnp.pad(w, ((0, 0), (0, pc), (0, pc)))

    def pad_b(bv):
        return jnp.pad(bv, (0, pc)).reshape(1, Cp)

    w1 = jnp.concatenate([pad_w(w) for (w, _, _, _) in params], axis=0)
    w2 = jnp.concatenate([pad_w(w) for (_, _, w, _) in params], axis=0)
    b = jnp.stack([pad_b(bv) for p in params for bv in (p[1], p[3])], axis=0)
    return w1.astype(compute_dtype), w2.astype(compute_dtype), b


# ---------------------------------------------------------------------------
# Pure-JAX reference (same folded-BN / bf16-operand math, run by XLA)
# ---------------------------------------------------------------------------
def ref_forward(x_nchw, params):
    x = jnp.transpose(x_nchw, (0, 2, 3, 1)).astype(jnp.float32)
    N, H, W, C = x.shape

    def conv3x3(a, w_taps, bias):
        ap = jnp.pad(a, ((0, 0), (1, 1), (1, 1), (0, 0))).astype(jnp.bfloat16)
        y = jnp.zeros_like(a)
        for dh in range(3):
            for dw in range(3):
                xs = ap[:, dh:dh + H, dw:dw + W, :]
                y = y + jnp.einsum(
                    "nhwc,cd->nhwd", xs,
                    w_taps[dh * 3 + dw].astype(jnp.bfloat16),
                    preferred_element_type=jnp.float32)
        return y + bias

    for (w1, b1, w2, b2) in params:
        h = jax.nn.relu(conv3x3(x, w1, b1))
        x = jax.nn.relu(conv3x3(h, w2, b2) + x)
    return jnp.transpose(x, (0, 3, 1, 2))


# ---------------------------------------------------------------------------
if __name__ == "__main__":
    key = jax.random.PRNGKey(0)
    N, C, H, W = 8, 32, 8, 8       # NCHW demo shapes
    SIZE = 3                       # number of ResLayer blocks

    key, kx = jax.random.split(key)
    x = jax.random.normal(kx, (N, C, H, W), jnp.float32)
    params = init_params(key, C, SIZE)
    w1, w2, b = pack_params(params)

    out = res_layers_forward(x, w1, w2, b)
    jax.block_until_ready(out)

    ref = ref_forward(x, params)
    assert out.shape == (N, C, H, W)
    assert bool(jnp.all(out >= 0.0))                       # final ReLU
    max_err = float(jnp.max(jnp.abs(out - ref)))
    assert max_err < 1e-2, f"kernel vs reference mismatch: {max_err}"
    print("KERNEL_OK")
</pallas_src>

<mosaic_0001>
module attributes {stable_mosaic.version = 11 : i64} {
  func.func @_res_layers_kernel(%arg0: i32, %arg1: i32, %arg2: memref<4x8x8x128xf32, #tpu.memory_space<vmem>>, %arg3: memref<27x128x128xbf16, #tpu.memory_space<vmem>>, %arg4: memref<27x128x128xbf16, #tpu.memory_space<vmem>>, %arg5: memref<6x1x128xf32, #tpu.memory_space<vmem>>, %arg6: memref<4x8x8x128xf32, #tpu.memory_space<vmem>>) attributes {dimension_semantics = [#tpu.dimension_semantics<parallel>, #tpu.dimension_semantics<arbitrary>], iteration_bounds = array<i64: 2, 3>, scalar_prefetch = 0 : i64, scratch_operands = 0 : i64, tpu.core_type = #tpu.core_type<tc>, window_params = [{transform_indices = @transform_0, window_bounds = array<i64: 4, 8, 8, 128>}, {pipeline_mode = #tpu.pipeline_mode<synchronous>, transform_indices = @transform_1, window_bounds = array<i64: 27, 128, 128>}, {pipeline_mode = #tpu.pipeline_mode<synchronous>, transform_indices = @transform_2, window_bounds = array<i64: 27, 128, 128>}, {pipeline_mode = #tpu.pipeline_mode<synchronous>, transform_indices = @transform_3, window_bounds = array<i64: 6, 1, 128>}, {transform_indices = @transform_4, window_bounds = array<i64: 4, 8, 8, 128>}]} {
    %c0_i32 = arith.constant 0 : i32
    %0 = arith.cmpi eq, %arg1, %c0_i32 : i32
    %1 = arith.extui %0 : i1 to i32
    %c0_i32_0 = arith.constant 0 : i32
    %2 = arith.cmpi ne, %1, %c0_i32_0 : i32
    scf.if %2 {
      %c0_101 = arith.constant 0 : index
      %c0_102 = arith.constant 0 : index
      %c0_103 = arith.constant 0 : index
      %c0_104 = arith.constant 0 : index
      %207 = vector.load %arg2[%c0_101, %c0_102, %c0_103, %c0_104] : memref<4x8x8x128xf32, #tpu.memory_space<vmem>>, vector<4x8x8x128xf32>
      %c0_105 = arith.constant 0 : index
      %c0_106 = arith.constant 0 : index
      %c0_107 = arith.constant 0 : index
      %c0_108 = arith.constant 0 : index
      %208 = vector.load %arg6[%c0_105, %c0_106, %c0_107, %c0_108] : memref<4x8x8x128xf32, #tpu.memory_space<vmem>>, vector<4x8x8x128xf32>
      tpu.vector_store %arg6[%c0_105, %c0_106, %c0_107, %c0_108], %207 {strides = array<i32>} : memref<4x8x8x128xf32, #tpu.memory_space<vmem>>, vector<4x8x8x128xf32>,
    } else {
    }
    %c0 = arith.constant 0 : index
    %c0_1 = arith.constant 0 : index
    %c0_2 = arith.constant 0 : index
    %c0_3 = arith.constant 0 : index
    %3 = vector.load %arg6[%c0, %c0_1, %c0_2, %c0_3] : memref<4x8x8x128xf32, #tpu.memory_space<vmem>>, vector<4x8x8x128xf32>
    %cst = arith.constant 0.000000e+00 : bf16
    %4 = vector.broadcast %cst : bf16 to vector<4x1x8x128xbf16>
    %cst_4 = arith.constant 0.000000e+00 : bf16
    %5 = vector.broadcast %cst_4 : bf16 to vector<4x8x1x128xbf16>
    %c2_i32 = arith.constant 2 : i32
    %6 = arith.muli %arg1, %c2_i32 : i32
    %7 = arith.index_cast %6 : i32 to index
    %c0_5 = arith.constant 0 : index
    %c0_6 = arith.constant 0 : index
    %8 = vector.load %arg5[%7, %c0_5, %c0_6] : memref<6x1x128xf32, #tpu.memory_space<vmem>>, vector<1x1x128xf32>
    %9 = vector.shape_cast %8 : vector<1x1x128xf32> to vector<1x128xf32>
    %c2_i32_7 = arith.constant 2 : i32
    %10 = arith.muli %arg1, %c2_i32_7 : i32
    %c1_i32 = arith.constant 1 : i32
    %11 = arith.addi %10, %c1_i32 : i32
    %12 = arith.index_cast %11 : i32 to index
    %c0_8 = arith.constant 0 : index
    %c0_9 = arith.constant 0 : index
    %13 = vector.load %arg5[%12, %c0_8, %c0_9] : memref<6x1x128xf32, #tpu.memory_space<vmem>>, vector<1x1x128xf32>
    %14 = vector.shape_cast %13 : vector<1x1x128xf32> to vector<1x128xf32>
    %15 = arith.truncf %3 : vector<4x8x8x128xf32> to vector<4x8x8x128xbf16>
    %16 = vector.extract_strided_slice %15 {offsets = [0, 0, 0, 0], sizes = [4, 7, 8, 128], strides = [1, 1, 1, 1]} : vector<4x8x8x128xbf16> to vector<4x7x8x128xbf16>
    %17 = tpu.concatenate %4, %16 in 1 : vector<4x1x8x128xbf16>, vector<4x7x8x128xbf16> -> vector<4x8x8x128xbf16>
    %18 = vector.extract_strided_slice %15 {offsets = [0, 1, 0, 0], sizes = [4, 7, 8, 128], strides = [1, 1, 1, 1]} : vector<4x8x8x128xbf16> to vector<4x7x8x128xbf16>
    %19 = tpu.concatenate %18, %4 in 1 : vector<4x7x8x128xbf16>, vector<4x1x8x128xbf16> -> vector<4x8x8x128xbf16>
    %cst_10 = arith.constant 0.000000e+00 : f32
    %20 = vector.broadcast %cst_10 : f32 to vector<256x128xf32>
    %21 = vector.extract_strided_slice %17 {offsets = [0, 0, 0, 0], sizes = [4, 8, 7, 128], strides = [1, 1, 1, 1]} : vector<4x8x8x128xbf16> to vector<4x8x7x128xbf16>
    %22 = tpu.concatenate %5, %21 in 2 : vector<4x8x1x128xbf16>, vector<4x8x7x128xbf16> -> vector<4x8x8x128xbf16>
    %23 = vector.extract_strided_slice %17 {offsets = [0, 0, 1, 0], sizes = [4, 8, 7, 128], strides = [1, 1, 1, 1]} : vector<4x8x8x128xbf16> to vector<4x8x7x128xbf16>
    %24 = tpu.concatenate %23, %5 in 2 : vector<4x8x7x128xbf16>, vector<4x8x1x128xbf16> -> vector<4x8x8x128xbf16>
    %25 = vector.shape_cast %22 : vector<4x8x8x128xbf16> to vector<256x128xbf16>
    %c9_i32 = arith.constant 9 : i32
    %26 = arith.muli %arg1, %c9_i32 : i32
    %c0_i32_11 = arith.constant 0 : i32
    %27 = arith.addi %26, %c0_i32_11 : i32
    %28 = arith.index_cast %27 : i32 to index
    %c0_12 = arith.constant 0 : index
    %c0_13 = arith.constant 0 : index
    %29 = vector.load %arg3[%28, %c0_12, %c0_13] : memref<27x128x128xbf16, #tpu.memory_space<vmem>>, vector<1x128x128xbf16>
    %30 = vector.shape_cast %29 : vector<1x128x128xbf16> to vector<128x128xbf16>
    %cst_14 = arith.constant dense<0.000000e+00> : vector<256x128xf32>
    %31 = tpu.matmul %25, %30, %cst_14 {dimension_numbers = #tpu.dot_dimension_numbers<[1], [0], [0], [1], [0, 0, 1, 1], [], []>} : vector<256x128xbf16>, vector<128x128xbf16>, vector<256x128xf32> -> vector<256x128xf32>
    %32 = arith.addf %20, %31 : vector<256x128xf32>
    %33 = vector.shape_cast %17 : vector<4x8x8x128xbf16> to vector<256x128xbf16>
    %c9_i32_15 = arith.constant 9 : i32
    %34 = arith.muli %arg1, %c9_i32_15 : i32
    %c1_i32_16 = arith.constant 1 : i32
    %35 = arith.addi %34, %c1_i32_16 : i32
    %36 = arith.index_cast %35 : i32 to index
    %c0_17 = arith.constant 0 : index
    %c0_18 = arith.constant 0 : index
    %37 = vector.load %arg3[%36, %c0_17, %c0_18] : memref<27x128x128xbf16, #tpu.memory_space<vmem>>, vector<1x128x128xbf16>
    %38 = vector.shape_cast %37 : vector<1x128x128xbf16> to vector<128x128xbf16>
    %cst_19 = arith.constant dense<0.000000e+00> : vector<256x128xf32>
    %39 = tpu.matmul %33, %38, %cst_19 {dimension_numbers = #tpu.dot_dimension_numbers<[1], [0], [0], [1], [0, 0, 1, 1], [], []>} : vector<256x128xbf16>, vector<128x128xbf16>, vector<256x128xf32> -> vector<256x128xf32>
    %40 = arith.addf %32, %39 : vector<256x128xf32>
    %41 = vector.shape_cast %24 : vector<4x8x8x128xbf16> to vector<256x128xbf16>
    %c9_i32_20 = arith.constant 9 : i32
    %42 = arith.muli %arg1, %c9_i32_20 : i32
    %c2_i32_21 = arith.constant 2 : i32
    %43 = arith.addi %42, %c2_i32_21 : i32
    %44 = arith.index_cast %43 : i32 to index
    %c0_22 = arith.constant 0 : index
    %c0_23 = arith.constant 0 : index
    %45 = vector.load %arg3[%44, %c0_22, %c0_23] : memref<27x128x128xbf16, #tpu.memory_space<vmem>>, vector<1x128x128xbf16>
    %46 = vector.shape_cast %45 : vector<1x128x128xbf16> to vector<128x128xbf16>
    %cst_24 = arith.constant dense<0.000000e+00> : vector<256x128xf32>
    %47 = tpu.matmul %41, %46, %cst_24 {dimension_numbers = #tpu.dot_dimension_numbers<[1], [0], [0], [1], [0, 0, 1, 1], [], []>} : vector<256x128xbf16>, vector<128x128xbf16>, vector<256x128xf32> -> vector<256x128xf32>
    %48 = arith.addf %40, %47 : vector<256x128xf32>
    %49 = vector.extract_strided_slice %15 {offsets = [0, 0, 0, 0], sizes = [4, 8, 7, 128], strides = [1, 1, 1, 1]} : vector<4x8x8x128xbf16> to vector<4x8x7x128xbf16>
    %50 = tpu.concatenate %5, %49 in 2 : vector<4x8x1x128xbf16>, vector<4x8x7x128xbf16> -> vector<4x8x8x128xbf16>
    %51 = vector.extract_strided_slice %15 {offsets = [0, 0, 1, 0], sizes = [4, 8, 7, 128], strides = [1, 1, 1, 1]} : vector<4x8x8x128xbf16> to vector<4x8x7x128xbf16>
    %52 = tpu.concatenate %51, %5 in 2 : vector<4x8x7x128xbf16>, vector<4x8x1x128xbf16> -> vector<4x8x8x128xbf16>
    %53 = vector.shape_cast %50 : vector<4x8x8x128xbf16> to vector<256x128xbf16>
    %c9_i32_25 = arith.constant 9 : i32
    %54 = arith.muli %arg1, %c9_i32_25 : i32
    %c3_i32 = arith.constant 3 : i32
    %55 = arith.addi %54, %c3_i32 : i32
    %56 = arith.index_cast %55 : i32 to index
    %c0_26 = arith.constant 0 : index
    %c0_27 = arith.constant 0 : index
    %57 = vector.load %arg3[%56, %c0_26, %c0_27] : memref<27x128x128xbf16, #tpu.memory_space<vmem>>, vector<1x128x128xbf16>
    %58 = vector.shape_cast %57 : vector<1x128x128xbf16> to vector<128x128xbf16>
    %cst_28 = arith.constant dense<0.000000e+00> : vector<256x128xf32>
    %59 = tpu.matmul %53, %58, %cst_28 {dimension_numbers = #tpu.dot_dimension_numbers<[1], [0], [0], [1], [0, 0, 1, 1], [], []>} : vector<256x128xbf16>, vector<128x128xbf16>, vector<256x128xf32> -> vector<256x128xf32>
    %60 = arith.addf %48, %59 : vector<256x128xf32>
    %61 = vector.shape_cast %15 : vector<4x8x8x128xbf16> to vector<256x128xbf16>
    %c9_i32_29 = arith.constant 9 : i32
    %62 = arith.muli %arg1, %c9_i32_29 : i32
    %c4_i32 = arith.constant 4 : i32
    %63 = arith.addi %62, %c4_i32 : i32
    %64 = arith.index_cast %63 : i32 to index
    %c0_30 = arith.constant 0 : index
    %c0_31 = arith.constant 0 : index
    %65 = vector.load %arg3[%64, %c0_30, %c0_31] : memref<27x128x128xbf16, #tpu.memory_space<vmem>>, vector<1x128x128xbf16>
    %66 = vector.shape_cast %65 : vector<1x128x128xbf16> to vector<128x128xbf16>
    %cst_32 = arith.constant dense<0.000000e+00> : vector<256x128xf32>
    %67 = tpu.matmul %61, %66, %cst_32 {dimension_numbers = #tpu.dot_dimension_numbers<[1], [0], [0], [1], [0, 0, 1, 1], [], []>} : vector<256x128xbf16>, vector<128x128xbf16>, vector<256x128xf32> -> vector<256x128xf32>
    %68 = arith.addf %60, %67 : vector<256x128xf32>
    %69 = vector.shape_cast %52 : vector<4x8x8x128xbf16> to vector<256x128xbf16>
    %c9_i32_33 = arith.constant 9 : i32
    %70 = arith.muli %arg1, %c9_i32_33 : i32
    %c5_i32 = arith.constant 5 : i32
    %71 = arith.addi %70, %c5_i32 : i32
    %72 = arith.index_cast %71 : i32 to index
    %c0_34 = arith.constant 0 : index
    %c0_35 = arith.constant 0 : index
    %73 = vector.load %arg3[%72, %c0_34, %c0_35] : memref<27x128x128xbf16, #tpu.memory_space<vmem>>, vector<1x128x128xbf16>
    %74 = vector.shape_cast %73 : vector<1x128x128xbf16> to vector<128x128xbf16>
    %cst_36 = arith.constant dense<0.000000e+00> : vector<256x128xf32>
    %75 = tpu.matmul %69, %74, %cst_36 {dimension_numbers = #tpu.dot_dimension_numbers<[1], [0], [0], [1], [0, 0, 1, 1], [], []>} : vector<256x128xbf16>, vector<128x128xbf16>, vector<256x128xf32> -> vector<256x128xf32>
    %76 = arith.addf %68, %75 : vector<256x128xf32>
    %77 = vector.extract_strided_slice %19 {offsets = [0, 0, 0, 0], sizes = [4, 8, 7, 128], strides = [1, 1, 1, 1]} : vector<4x8x8x128xbf16> to vector<4x8x7x128xbf16>
    %78 = tpu.concatenate %5, %77 in 2 : vector<4x8x1x128xbf16>, vector<4x8x7x128xbf16> -> vector<4x8x8x128xbf16>
    %79 = vector.extract_strided_slice %19 {offsets = [0, 0, 1, 0], sizes = [4, 8, 7, 128], strides = [1, 1, 1, 1]} : vector<4x8x8x128xbf16> to vector<4x8x7x128xbf16>
    %80 = tpu.concatenate %79, %5 in 2 : vector<4x8x7x128xbf16>, vector<4x8x1x128xbf16> -> vector<4x8x8x128xbf16>
    %81 = vector.shape_cast %78 : vector<4x8x8x128xbf16> to vector<256x128xbf16>
    %c9_i32_37 = arith.constant 9 : i32
    %82 = arith.muli %arg1, %c9_i32_37 : i32
    %c6_i32 = arith.constant 6 : i32
    %83 = arith.addi %82, %c6_i32 : i32
    %84 = arith.index_cast %83 : i32 to index
    %c0_38 = arith.constant 0 : index
    %c0_39 = arith.constant 0 : index
    %85 = vector.load %arg3[%84, %c0_38, %c0_39] : memref<27x128x128xbf16, #tpu.memory_space<vmem>>, vector<1x128x128xbf16>
    %86 = vector.shape_cast %85 : vector<1x128x128xbf16> to vector<128x128xbf16>
    %cst_40 = arith.constant dense<0.000000e+00> : vector<256x128xf32>
    %87 = tpu.matmul %81, %86, %cst_40 {dimension_numbers = #tpu.dot_dimension_numbers<[1], [0], [0], [1], [0, 0, 1, 1], [], []>} : vector<256x128xbf16>, vector<128x128xbf16>, vector<256x128xf32> -> vector<256x128xf32>
    %88 = arith.addf %76, %87 : vector<256x128xf32>
    %89 = vector.shape_cast %19 : vector<4x8x8x128xbf16> to vector<256x128xbf16>
    %c9_i32_41 = arith.constant 9 : i32
    %90 = arith.muli %arg1, %c9_i32_41 : i32
    %c7_i32 = arith.constant 7 : i32
    %91 = arith.addi %90, %c7_i32 : i32
    %92 = arith.index_cast %91 : i32 to index
    %c0_42 = arith.constant 0 : index
    %c0_43 = arith.constant 0 : index
    %93 = vector.load %arg3[%92, %c0_42, %c0_43] : memref<27x128x128xbf16, #tpu.memory_space<vmem>>, vector<1x128x128xbf16>
    %94 = vector.shape_cast %93 : vector<1x128x128xbf16> to vector<128x128xbf16>
    %cst_44 = arith.constant dense<0.000000e+00> : vector<256x128xf32>
    %95 = tpu.matmul %89, %94, %cst_44 {dimension_numbers = #tpu.dot_dimension_numbers<[1], [0], [0], [1], [0, 0, 1, 1], [], []>} : vector<256x128xbf16>, vector<128x128xbf16>, vector<256x128xf32> -> vector<256x128xf32>
    %96 = arith.addf %88, %95 : vector<256x128xf32>
    %97 = vector.shape_cast %80 : vector<4x8x8x128xbf16> to vector<256x128xbf16>
    %c9_i32_45 = arith.constant 9 : i32
    %98 = arith.muli %arg1, %c9_i32_45 : i32
    %c8_i32 = arith.constant 8 : i32
    %99 = arith.addi %98, %c8_i32 : i32
    %100 = arith.index_cast %99 : i32 to index
    %c0_46 = arith.constant 0 : index
    %c0_47 = arith.constant 0 : index
    %101 = vector.load %arg3[%100, %c0_46, %c0_47] : memref<27x128x128xbf16, #tpu.memory_space<vmem>>, vector<1x128x128xbf16>
    %102 = vector.shape_cast %101 : vector<1x128x128xbf16> to vector<128x128xbf16>
    %cst_48 = arith.constant dense<0.000000e+00> : vector<256x128xf32>
    %103 = tpu.matmul %97, %102, %cst_48 {dimension_numbers = #tpu.dot_dimension_numbers<[1], [0], [0], [1], [0, 0, 1, 1], [], []>} : vector<256x128xbf16>, vector<128x128xbf16>, vector<256x128xf32> -> vector<256x128xf32>
    %104 = arith.addf %96, %103 : vector<256x128xf32>
    %105 = vector.broadcast %9 : vector<1x128xf32> to vector<256x128xf32>
    %106 = arith.addf %104, %105 : vector<256x128xf32>
    %107 = vector.shape_cast %106 : vector<256x128xf32> to vector<4x8x8x128xf32>
    %cst_49 = arith.constant 0.000000e+00 : f32
    %108 = vector.broadcast %cst_49 : f32 to vector<4x8x8x128xf32>
    %109 = arith.maximumf %107, %108 : vector<4x8x8x128xf32>
    %110 = arith.truncf %109 : vector<4x8x8x128xf32> to vector<4x8x8x128xbf16>
    %111 = vector.extract_strided_slice %110 {offsets = [0, 0, 0, 0], sizes = [4, 7, 8, 128], strides = [1, 1, 1, 1]} : vector<4x8x8x128xbf16> to vector<4x7x8x128xbf16>
    %112 = tpu.concatenate %4, %111 in 1 : vector<4x1x8x128xbf16>, vector<4x7x8x128xbf16> -> vector<4x8x8x128xbf16>
    %113 = vector.extract_strided_slice %110 {offsets = [0, 1, 0, 0], sizes = [4, 7, 8, 128], strides = [1, 1, 1, 1]} : vector<4x8x8x128xbf16> to vector<4x7x8x128xbf16>
    %114 = tpu.concatenate %113, %4 in 1 : vector<4x7x8x128xbf16>, vector<4x1x8x128xbf16> -> vector<4x8x8x128xbf16>
    %cst_50 = arith.constant 0.000000e+00 : f32
    %115 = vector.broadcast %cst_50 : f32 to vector<256x128xf32>
    %116 = vector.extract_strided_slice %112 {offsets = [0, 0, 0, 0], sizes = [4, 8, 7, 128], strides = [1, 1, 1, 1]} : vector<4x8x8x128xbf16> to vector<4x8x7x128xbf16>
    %117 = tpu.concatenate %5, %116 in 2 : vector<4x8x1x128xbf16>, vector<4x8x7x128xbf16> -> vector<4x8x8x128xbf16>
    %118 = vector.extract_strided_slice %112 {offsets = [0, 0, 1, 0], sizes = [4, 8, 7, 128], strides = [1, 1, 1, 1]} : vector<4x8x8x128xbf16> to vector<4x8x7x128xbf16>
    %119 = tpu.concatenate %118, %5 in 2 : vector<4x8x7x128xbf16>, vector<4x8x1x128xbf16> -> vector<4x8x8x128xbf16>
    %120 = vector.shape_cast %117 : vector<4x8x8x128xbf16> to vector<256x128xbf16>
    %c9_i32_51 = arith.constant 9 : i32
    %121 = arith.muli %arg1, %c9_i32_51 : i32
    %c0_i32_52 = arith.constant 0 : i32
    %122 = arith.addi %121, %c0_i32_52 : i32
    %123 = arith.index_cast %122 : i32 to index
    %c0_53 = arith.constant 0 : index
    %c0_54 = arith.constant 0 : index
    %124 = vector.load %arg4[%123, %c0_53, %c0_54] : memref<27x128x128xbf16, #tpu.memory_space<vmem>>, vector<1x128x128xbf16>
    %125 = vector.shape_cast %124 : vector<1x128x128xbf16> to vector<128x128xbf16>
    %cst_55 = arith.constant dense<0.000000e+00> : vector<256x128xf32>
    %126 = tpu.matmul %120, %125, %cst_55 {dimension_numbers = #tpu.dot_dimension_numbers<[1], [0], [0], [1], [0, 0, 1, 1], [], []>} : vector<256x128xbf16>, vector<128x128xbf16>, vector<256x128xf32> -> vector<256x128xf32>
    %127 = arith.addf %115, %126 : vector<256x128xf32>
    %128 = vector.shape_cast %112 : vector<4x8x8x128xbf16> to vector<256x128xbf16>
    %c9_i32_56 = arith.constant 9 : i32
    %129 = arith.muli %arg1, %c9_i32_56 : i32
    %c1_i32_57 = arith.constant 1 : i32
    %130 = arith.addi %129, %c1_i32_57 : i32
    %131 = arith.index_cast %130 : i32 to index
    %c0_58 = arith.constant 0 : index
    %c0_59 = arith.constant 0 : index
    %132 = vector.load %arg4[%131, %c0_58, %c0_59] : memref<27x128x128xbf16, #tpu.memory_space<vmem>>, vector<1x128x128xbf16>
    %133 = vector.shape_cast %132 : vector<1x128x128xbf16> to vector<128x128xbf16>
    %cst_60 = arith.constant dense<0.000000e+00> : vector<256x128xf32>
    %134 = tpu.matmul %128, %133, %cst_60 {dimension_numbers = #tpu.dot_dimension_numbers<[1], [0], [0], [1], [0, 0, 1, 1], [], []>} : vector<256x128xbf16>, vector<128x128xbf16>, vector<256x128xf32> -> vector<256x128xf32>
    %135 = arith.addf %127, %134 : vector<256x128xf32>
    %136 = vector.shape_cast %119 : vector<4x8x8x128xbf16> to vector<256x128xbf16>
    %c9_i32_61 = arith.constant 9 : i32
    %137 = arith.muli %arg1, %c9_i32_61 : i32
    %c2_i32_62 = arith.constant 2 : i32
    %138 = arith.addi %137, %c2_i32_62 : i32
    %139 = arith.index_cast %138 : i32 to index
    %c0_63 = arith.constant 0 : index
    %c0_64 = arith.constant 0 : index
    %140 = vector.load %arg4[%139, %c0_63, %c0_64] : memref<27x128x128xbf16, #tpu.memory_space<vmem>>, vector<1x128x128xbf16>
    %141 = vector.shape_cast %140 : vector<1x128x128xbf16> to vector<128x128xbf16>
    %cst_65 = arith.constant dense<0.000000e+00> : vector<256x128xf32>
    %142 = tpu.matmul %136, %141, %cst_65 {dimension_numbers = #tpu.dot_dimension_numbers<[1], [0], [0], [1], [0, 0, 1, 1], [], []>} : vector<256x128xbf16>, vector<128x128xbf16>, vector<256x128xf32> -> vector<256x128xf32>
    %143 = arith.addf %135, %142 : vector<256x128xf32>
    %144 = vector.extract_strided_slice %110 {offsets = [0, 0, 0, 0], sizes = [4, 8, 7, 128], strides = [1, 1, 1, 1]} : vector<4x8x8x128xbf16> to vector<4x8x7x128xbf16>
    %145 = tpu.concatenate %5, %144 in 2 : vector<4x8x1x128xbf16>, vector<4x8x7x128xbf16> -> vector<4x8x8x128xbf16>
    %146 = vector.extract_strided_slice %110 {offsets = [0, 0, 1, 0], sizes = [4, 8, 7, 128], strides = [1, 1, 1, 1]} : vector<4x8x8x128xbf16> to vector<4x8x7x128xbf16>
    %147 = tpu.concatenate %146, %5 in 2 : vector<4x8x7x128xbf16>, vector<4x8x1x128xbf16> -> vector<4x8x8x128xbf16>
    %148 = vector.shape_cast %145 : vector<4x8x8x128xbf16> to vector<256x128xbf16>
    %c9_i32_66 = arith.constant 9 : i32
    %149 = arith.muli %arg1, %c9_i32_66 : i32
    %c3_i32_67 = arith.constant 3 : i32
    %150 = arith.addi %149, %c3_i32_67 : i32
    %151 = arith.index_cast %150 : i32 to index
    %c0_68 = arith.constant 0 : index
    %c0_69 = arith.constant 0 : index
    %152 = vector.load %arg4[%151, %c0_68, %c0_69] : memref<27x128x128xbf16, #tpu.memory_space<vmem>>, vector<1x128x128xbf16>
    %153 = vector.shape_cast %152 : vector<1x128x128xbf16> to vector<128x128xbf16>
    %cst_70 = arith.constant dense<0.000000e+00> : vector<256x128xf32>
    %154 = tpu.matmul %148, %153, %cst_70 {dimension_numbers = #tpu.dot_dimension_numbers<[1], [0], [0], [1], [0, 0, 1, 1], [], []>} : vector<256x128xbf16>, vector<128x128xbf16>, vector<256x128xf32> -> vector<256x128xf32>
    %155 = arith.addf %143, %154 : vector<256x128xf32>
    %156 = vector.shape_cast %110 : vector<4x8x8x128xbf16> to vector<256x128xbf16>
    %c9_i32_71 = arith.constant 9 : i32
    %157 = arith.muli %arg1, %c9_i32_71 : i32
    %c4_i32_72 = arith.constant 4 : i32
    %158 = arith.addi %157, %c4_i32_72 : i32
    %159 = arith.index_cast %158 : i32 to index
    %c0_73 = arith.constant 0 : index
    %c0_74 = arith.constant 0 : index
    %160 = vector.load %arg4[%159, %c0_73, %c0_74] : memref<27x128x128xbf16, #tpu.memory_space<vmem>>, vector<1x128x128xbf16>
    %161 = vector.shape_cast %160 : vector<1x128x128xbf16> to vector<128x128xbf16>
    %cst_75 = arith.constant dense<0.000000e+00> : vector<256x128xf32>
    %162 = tpu.matmul %156, %161, %cst_75 {dimension_numbers = #tpu.dot_dimension_numbers<[1], [0], [0], [1], [0, 0, 1, 1], [], []>} : vector<256x128xbf16>, vector<128x128xbf16>, vector<256x128xf32> -> vector<256x128xf32>
    %163 = arith.addf %155, %162 : vector<256x128xf32>
    %164 = vector.shape_cast %147 : vector<4x8x8x128xbf16> to vector<256x128xbf16>
    %c9_i32_76 = arith.constant 9 : i32
    %165 = arith.muli %arg1, %c9_i32_76 : i32
    %c5_i32_77 = arith.constant 5 : i32
    %166 = arith.addi %165, %c5_i32_77 : i32
    %167 = arith.index_cast %166 : i32 to index
    %c0_78 = arith.constant 0 : index
    %c0_79 = arith.constant 0 : index
    %168 = vector.load %arg4[%167, %c0_78, %c0_79] : memref<27x128x128xbf16, #tpu.memory_space<vmem>>, vector<1x128x128xbf16>
    %169 = vector.shape_cast %168 : vector<1x128x128xbf16> to vector<128x128xbf16>
    %cst_80 = arith.constant dense<0.000000e+00> : vector<256x128xf32>
    %170 = tpu.matmul %164, %169, %cst_80 {dimension_numbers = #tpu.dot_dimension_numbers<[1], [0], [0], [1], [0, 0, 1, 1], [], []>} : vector<256x128xbf16>, vector<128x128xbf16>, vector<256x128xf32> -> vector<256x128xf32>
    %171 = arith.addf %163, %170 : vector<256x128xf32>
    %172 = vector.extract_strided_slice %114 {offsets = [0, 0, 0, 0], sizes = [4, 8, 7, 128], strides = [1, 1, 1, 1]} : vector<4x8x8x128xbf16> to vector<4x8x7x128xbf16>
    %173 = tpu.concatenate %5, %172 in 2 : vector<4x8x1x128xbf16>, vector<4x8x7x128xbf16> -> vector<4x8x8x128xbf16>
    %174 = vector.extract_strided_slice %114 {offsets = [0, 0, 1, 0], sizes = [4, 8, 7, 128], strides = [1, 1, 1, 1]} : vector<4x8x8x128xbf16> to vector<4x8x7x128xbf16>
    %175 = tpu.concatenate %174, %5 in 2 : vector<4x8x7x128xbf16>, vector<4x8x1x128xbf16> -> vector<4x8x8x128xbf16>
    %176 = vector.shape_cast %173 : vector<4x8x8x128xbf16> to vector<256x128xbf16>
    %c9_i32_81 = arith.constant 9 : i32
    %177 = arith.muli %arg1, %c9_i32_81 : i32
    %c6_i32_82 = arith.constant 6 : i32
    %178 = arith.addi %177, %c6_i32_82 : i32
    %179 = arith.index_cast %178 : i32 to index
    %c0_83 = arith.constant 0 : index
    %c0_84 = arith.constant 0 : index
    %180 = vector.load %arg4[%179, %c0_83, %c0_84] : memref<27x128x128xbf16, #tpu.memory_space<vmem>>, vector<1x128x128xbf16>
    %181 = vector.shape_cast %180 : vector<1x128x128xbf16> to vector<128x128xbf16>
    %cst_85 = arith.constant dense<0.000000e+00> : vector<256x128xf32>
    %182 = tpu.matmul %176, %181, %cst_85 {dimension_numbers = #tpu.dot_dimension_numbers<[1], [0], [0], [1], [0, 0, 1, 1], [], []>} : vector<256x128xbf16>, vector<128x128xbf16>, vector<256x128xf32> -> vector<256x128xf32>
    %183 = arith.addf %171, %182 : vector<256x128xf32>
    %184 = vector.shape_cast %114 : vector<4x8x8x128xbf16> to vector<256x128xbf16>
    %c9_i32_86 = arith.constant 9 : i32
    %185 = arith.muli %arg1, %c9_i32_86 : i32
    %c7_i32_87 = arith.constant 7 : i32
    %186 = arith.addi %185, %c7_i32_87 : i32
    %187 = arith.index_cast %186 : i32 to index
    %c0_88 = arith.constant 0 : index
    %c0_89 = arith.constant 0 : index
    %188 = vector.load %arg4[%187, %c0_88, %c0_89] : memref<27x128x128xbf16, #tpu.memory_space<vmem>>, vector<1x128x128xbf16>
    %189 = vector.shape_cast %188 : vector<1x128x128xbf16> to vector<128x128xbf16>
    %cst_90 = arith.constant dense<0.000000e+00> : vector<256x128xf32>
    %190 = tpu.matmul %184, %189, %cst_90 {dimension_numbers = #tpu.dot_dimension_numbers<[1], [0], [0], [1], [0, 0, 1, 1], [], []>} : vector<256x128xbf16>, vector<128x128xbf16>, vector<256x128xf32> -> vector<256x128xf32>
    %191 = arith.addf %183, %190 : vector<256x128xf32>
    %192 = vector.shape_cast %175 : vector<4x8x8x128xbf16> to vector<256x128xbf16>
    %c9_i32_91 = arith.constant 9 : i32
    %193 = arith.muli %arg1, %c9_i32_91 : i32
    %c8_i32_92 = arith.constant 8 : i32
    %194 = arith.addi %193, %c8_i32_92 : i32
    %195 = arith.index_cast %194 : i32 to index
    %c0_93 = arith.constant 0 : index
    %c0_94 = arith.constant 0 : index
    %196 = vector.load %arg4[%195, %c0_93, %c0_94] : memref<27x128x128xbf16, #tpu.memory_space<vmem>>, vector<1x128x128xbf16>
    %197 = vector.shape_cast %196 : vector<1x128x128xbf16> to vector<128x128xbf16>
    %cst_95 = arith.constant dense<0.000000e+00> : vector<256x128xf32>
    %198 = tpu.matmul %192, %197, %cst_95 {dimension_numbers = #tpu.dot_dimension_numbers<[1], [0], [0], [1], [0, 0, 1, 1], [], []>} : vector<256x128xbf16>, vector<128x128xbf16>, vector<256x128xf32> -> vector<256x128xf32>
    %199 = arith.addf %191, %198 : vector<256x128xf32>
    %200 = vector.broadcast %14 : vector<1x128xf32> to vector<256x128xf32>
    %201 = arith.addf %199, %200 : vector<256x128xf32>
    %202 = vector.shape_cast %201 : vector<256x128xf32> to vector<4x8x8x128xf32>
    %203 = arith.addf %202, %3 : vector<4x8x8x128xf32>
    %cst_96 = arith.constant 0.000000e+00 : f32
    %204 = vector.broadcast %cst_96 : f32 to vector<4x8x8x128xf32>
    %205 = arith.maximumf %203, %204 : vector<4x8x8x128xf32>
    %c0_97 = arith.constant 0 : index
    %c0_98 = arith.constant 0 : index
    %c0_99 = arith.constant 0 : index
    %c0_100 = arith.constant 0 : index
    %206 = vector.load %arg6[%c0_97, %c0_98, %c0_99, %c0_100] : memref<4x8x8x128xf32, #tpu.memory_space<vmem>>, vector<4x8x8x128xf32>
    tpu.vector_store %arg6[%c0_97, %c0_98, %c0_99, %c0_100], %205 {strides = array<i32>} : memref<4x8x8x128xf32, #tpu.memory_space<vmem>>, vector<4x8x8x128xf32>,
    return
  }
  func.func @transform_0(%arg0: i32, %arg1: i32) -> (i32, i32, i32, i32) {
    %c0_i32 = arith.constant 0 : i32
    %c0_i32_0 = arith.constant 0 : i32
    %c0_i32_1 = arith.constant 0 : i32
    %c0_i32_2 = arith.constant 0 : i32
    return %arg0, %c0_i32, %c0_i32_0, %c0_i32_1 : i32, i32, i32, i32
  }
  func.func @transform_1(%arg0: i32, %arg1: i32) -> (i32, i32, i32) {
    %c0_i32 = arith.constant 0 : i32
    %c0_i32_0 = arith.constant 0 : i32
    %c0_i32_1 = arith.constant 0 : i32
    %c0_i32_2 = arith.constant 0 : i32
    return %c0_i32, %c0_i32_0, %c0_i32_1 : i32, i32, i32
  }
  func.func @transform_2(%arg0: i32, %arg1: i32) -> (i32, i32, i32) {
    %c0_i32 = arith.constant 0 : i32
    %c0_i32_0 = arith.constant 0 : i32
    %c0_i32_1 = arith.constant 0 : i32
    %c0_i32_2 = arith.constant 0 : i32
    return %c0_i32, %c0_i32_0, %c0_i32_1 : i32, i32, i32
  }
  func.func @transform_3(%arg0: i32, %arg1: i32) -> (i32, i32, i32) {
    %c0_i32 = arith.constant 0 : i32
    %c0_i32_0 = arith.constant 0 : i32
    %c0_i32_1 = arith.constant 0 : i32
    %c0_i32_2 = arith.constant 0 : i32
    return %c0_i32, %c0_i32_0, %c0_i32_1 : i32, i32, i32
  }
  func.func @transform_4(%arg0: i32, %arg1: i32) -> (i32, i32, i32, i32) {
    %c0_i32 = arith.constant 0 : i32
    %c0_i32_0 = arith.constant 0 : i32
    %c0_i32_1 = arith.constant 0 : i32
    %c0_i32_2 = arith.constant 0 : i32
    return %arg0, %c0_i32, %c0_i32_0, %c0_i32_1 : i32, i32, i32, i32
  }
}

</mosaic_0001>

<llo_original>
// kernel: res_layers_forward.1
$region0: #{res_layers_forward.1}
  #allocation0 [shape = 'u32[]', space=smem, size = 0x4, offset = 0x4, fixed_abs, tag = 'smem constant byte address 0x4 - core index']
  #allocation1 [shape = 'u32[144,128]{1,0:T(1,128)}', space=vmem, size = 0x12000, scoped, tag = 'internal scratch']
  %s0 = inlined_call_operand.vmem [shape: f32[8,8,8,128], index: 0, kind: input, shape index: {}]
  %s1 = inlined_call_operand.hbm [shape: bf16[27,128,128], index: 1, kind: input, shape index: {}]
  %s2 = inlined_call_operand.hbm [shape: bf16[27,128,128], index: 2, kind: input, shape index: {}]
  %s3 = inlined_call_operand.vmem [shape: f32[6,1,128], index: 3, kind: input, shape index: {}]
  %s4 = inlined_call_operand.vmem [shape: f32[8,8,8,128], index: 4, kind: output, shape index: {}]
  %s5 = sld [smem:[#allocation0]]
  $region61: #{res_layers_forward.1} parent=0
    _
  %s7 = ssub.s32 1, %s5
  %s8 = scalar_select 0, %s7, %s5
  $region1: #{res_layers_forward.1} parent=0
    #allocation2 [shape = 'u8[884736]{0}', space=vmem, size = 0xd8000, scoped, tag = 'input window, operand 1, single buffered']
    #allocation3 [shape = 's32[2]{0}', space=sflag, size = 0x8, scoped, tag = 'scoped memory for res_layers_forward.1']
    #allocation4 [shape = 'u8[884736]{0}', space=vmem, size = 0xd8000, scoped, tag = 'input window, operand 2, single buffered']
    #allocation5 [shape = 's32[1]{0}', space=sflag, size = 0x4, scoped, tag = 'scoped memory for res_layers_forward.1']
    %9 = vsyncpa [#allocation3], 0
    %10 = vsyncpa [#allocation5], 0
    loop: start=0, step=1, limit=8
    $region2: #{res_layers_forward.1} parent=1 // loop_pre_header
      _
    $region3: #{res_layers_forward.1} parent=1 // loop_header
      %s12 = sphi 0, %s16
      %p13 = scmp.ge.s32.totalorder %s12, 8
      %s19 = sphi 0, %s31
      %s20 = sphi 0, %s27
      %s21 = sphi 0, %s19
      %s22 = sphi 0, %s20
      %s23 = sphi 0, %s21
      %s24 = sphi 0, %s22
      %s34 = sphi 0, %s36
      %s37 = sphi 0, %s34
      %s38 = sphi 0, %s37
      %s54 = sphi 0, %s38
      %s58 = sphi 0, %s58
      %s60 = sphi 0, %s58
      %s61 = sphi 0, %s60
      %s75 = sphi 0, %s61
      %s79 = sphi 0, %s79
      %s81 = sphi 0, %s79
      %s82 = sphi 0, %s81
      %s96 = sphi 0, %s82
      %s100 = sphi 0, %s100
      %s102 = sphi 0, %s100
      %s103 = sphi 0, %s102
      %s117 = sphi 0, %s103
      %s123 = sphi 0, %s125
      %s126 = sphi 0, %s123
      %s127 = sphi 0, %s126
      %s143 = sphi 0, %s127
    $region4: #{res_layers_forward.1} parent=1 // loop_header_branch
      %15 = sbr.rel (%p13) target = $region8
    $region5: #{res_layers_forward.1} parent=1 // loop_body
      %s17 = ssub.s32 %s12, 1
      %s18 = ssub.s32 %s12, 2
      %s25 = sadd.s32 1, %s20
      %p26 = scmp.ge.s32.totalorder %s25, 3
      %s27 = scalar_select %p26, 0, %s25
      %s28 = sadd.s32 1, %s19
      %s29 = scalar_select %p26, %s28, %s19
      %p30 = scmp.ge.s32.totalorder %s29, 2
      %s31 = scalar_select %p30, 0, %s29
      %s32 = ssub.s32 %s19, %s31
      %p33 = scmp.eq.s32.totalorder %s32, 0
      %s35 = sadd.s32 %s34, 1
      %s36 = scalar_select %p33, %s34, %s35
      %p39 = pneg %p33
      %p40 = scmp.eq.s32.totalorder %s12, 5
      %p41 = por %p39, %p40
      %p42 = scmp.ne.s32.totalorder %s34, %s37
      %p43 = scmp.eq.s32.totalorder %s12, 0
      %p44 = por %p42, %p43
      %p45 = scmp.ne.s32.totalorder %s34, %s37
      %p46 = scmp.eq.s32.totalorder %s17, 5
      %p47 = por %p45, %p46
      %p48 = scmp.ne.s32.totalorder %s37, %s38
      %p49 = scmp.eq.s32.totalorder %s17, 0
      %p50 = por %p48, %p49
      %p51 = scmp.ne.s32.totalorder %s37, %s38
      %p52 = scmp.eq.s32.totalorder %s18, 5
      %p53 = por %p51, %p52
      %p55 = scmp.ne.s32.totalorder %s38, %s54
      %p56 = scmp.eq.s32.totalorder %s18, 0
      %p57 = por %p55, %p56
      %s59 = sadd.s32 %s58, 1
      %p62 = scmp.eq.s32.totalorder %s12, 5
      %p63 = scmp.ne.s32.totalorder %s58, %s60
      %p64 = scmp.eq.s32.totalorder %s12, 0
      %p65 = por %p63, %p64
      %p66 = scmp.ne.s32.totalorder %s58, %s60
      %p67 = scmp.eq.s32.totalorder %s17, 5
      %p68 = por %p66, %p67
      %p69 = scmp.ne.s32.totalorder %s60, %s61
      %p70 = scmp.eq.s32.totalorder %s17, 0
      %p71 = por %p69, %p70
      %p72 = scmp.ne.s32.totalorder %s60, %s61
      %p73 = scmp.eq.s32.totalorder %s18, 5
      %p74 = por %p72, %p73
      %p76 = scmp.ne.s32.totalorder %s61, %s75
      %p77 = scmp.eq.s32.totalorder %s18, 0
      %p78 = por %p76, %p77
      %s80 = sadd.s32 %s79, 1
      %p83 = scmp.eq.s32.totalorder %s12, 5
      %p84 = scmp.ne.s32.totalorder %s79, %s81
      %p85 = scmp.eq.s32.totalorder %s12, 0
      %p86 = por %p84, %p85
      %p87 = scmp.ne.s32.totalorder %s79, %s81
      %p88 = scmp.eq.s32.totalorder %s17, 5
      %p89 = por %p87, %p88
      %p90 = scmp.ne.s32.totalorder %s81, %s82
      %p91 = scmp.eq.s32.totalorder %s17, 0
      %p92 = por %p90, %p91
      %p93 = scmp.ne.s32.totalorder %s81, %s82
      %p94 = scmp.eq.s32.totalorder %s18, 5
      %p95 = por %p93, %p94
      %p97 = scmp.ne.s32.totalorder %s82, %s96
      %p98 = scmp.eq.s32.totalorder %s18, 0
      %p99 = por %p97, %p98
      %s101 = sadd.s32 %s100, 1
      %p104 = scmp.eq.s32.totalorder %s12, 5
      %p105 = scmp.ne.s32.totalorder %s100, %s102
      %p106 = scmp.eq.s32.totalorder %s12, 0
      %p107 = por %p105, %p106
      %p108 = scmp.ne.s32.totalorder %s100, %s102
      %p109 = scmp.eq.s32.totalorder %s17, 5
      %p110 = por %p108, %p109
      %p111 = scmp.ne.s32.totalorder %s102, %s103
      %p112 = scmp.eq.s32.totalorder %s17, 0
      %p113 = por %p111, %p112
      %p114 = scmp.ne.s32.totalorder %s102, %s103
      %p115 = scmp.eq.s32.totalorder %s18, 5
      %p116 = por %p114, %p115
      %p118 = scmp.ne.s32.totalorder %s103, %s117
      %p119 = scmp.eq.s32.totalorder %s18, 0
      %p120 = por %p118, %p119
      %s121 = ssub.s32 %s19, %s31
      %p122 = scmp.eq.s32.totalorder %s121, 0
      %s124 = sadd.s32 %s123, 1
      %s125 = scalar_select %p122, %s123, %s124
      %p128 = pneg %p122
      %p129 = scmp.eq.s32.totalorder %s12, 5
      %p130 = por %p128, %p129
      %p131 = scmp.ne.s32.totalorder %s123, %s126
      %p132 = scmp.eq.s32.totalorder %s12, 0
      %p133 = por %p131, %p132
      %p134 = scmp.ne.s32.totalorder %s123, %s126
      %p135 = scmp.eq.s32.totalorder %s17, 5
      %p136 = por %p134, %p135
      %p137 = scmp.ne.s32.totalorder %s126, %s127
      %p138 = scmp.eq.s32.totalorder %s17, 0
      %p139 = por %p137, %p138
      %p140 = scmp.ne.s32.totalorder %s126, %s127
      %p141 = scmp.eq.s32.totalorder %s18, 5
      %p142 = por %p140, %p141
      %p144 = scmp.ne.s32.totalorder %s127, %s143
      %p145 = scmp.eq.s32.totalorder %s18, 0
      %p146 = por %p144, %p145
      %p147 = scmp.le.s32.totalorder 1, %s12
      %p148 = scmp.lt.s32.totalorder %s12, 7
      %p149 = pnand %p147, %p148
      %p150 = pneg %p149
      // Predicated region
      $region9: #{res_layers_forward.1} parent=5 // pred_check
        _
      $region10: #{res_layers_forward.1} parent=5 // pred_check_branch
        %152 = sbr.rel (%p149) target = $region12
      $region11: #{res_layers_forward.1} parent=5 // pred_region
        %s153 = ssub.s32 %s12, 1
        // Predicated region
        $region13: #{res_layers_forward.1} parent=11 // pred_check
          %p154 = pneg %p71
        $region14: #{res_layers_forward.1} parent=11 // pred_check_branch
          %156 = sbr.rel (%p154) target = $region16
        $region15: #{res_layers_forward.1} parent=11 // pred_region
          %s158 = ssub.s32 27648, 27648
          %159 = vsyncadd [#allocation3], %s158
          %s160 = sshll.u32 [#allocation2], 4
          %s161 = int_to_ptr.vmem [resolvable:$true] %s160
          %166 = dma.hbm_to_vmem [thread:$0]  %s1, 27648, %s161, [#allocation3], 64, 64, 4
        $region16: #{res_layers_forward.1} parent=11 // pred_fallthru
          _
        // Predicated region
        $region17: #{res_layers_forward.1} parent=11 // pred_check
          %p167 = pneg %p92
        $region18: #{res_layers_forward.1} parent=11 // pred_check_branch
          %169 = sbr.rel (%p167) target = $region20
        $region19: #{res_layers_forward.1} parent=11 // pred_region
          %s171 = ssub.s32 27648, 27648
          %172 = vsyncadd [#allocation5], %s171
          %s173 = sshll.u32 [#allocation4], 4
          %s174 = int_to_ptr.vmem [resolvable:$true] %s173
          %179 = dma.hbm_to_vmem [thread:$0]  %s2, 27648, %s174, [#allocation5], 64, 64, 4
        $region20: #{res_layers_forward.1} parent=11 // pred_fallthru
          _
        // Predicated region
        $region21: #{res_layers_forward.1} parent=11 // pred_check
          %p180 = pneg %p113
        $region22: #{res_layers_forward.1} parent=11 // pred_check_branch
          %182 = sbr.rel (%p180) target = $region24
        $region23: #{res_layers_forward.1} parent=11 // pred_region
          _
        $region24: #{res_layers_forward.1} parent=11 // pred_fallthru
          _
      $region12: #{res_layers_forward.1} parent=5 // pred_fallthru
        _
      %p183 = scmp.lt.s32.totalorder %s12, 6
      // Predicated region
      $region25: #{res_layers_forward.1} parent=5 // pred_check
        %p184 = pneg %p183
      $region26: #{res_layers_forward.1} parent=5 // pred_check_branch
        %186 = sbr.rel (%p184) target = $region28
      $region27: #{res_layers_forward.1} parent=5 // pred_region
        // Predicated region
        $region29: #{res_layers_forward.1} parent=27 // pred_check
          %p187 = pneg %p44
        $region30: #{res_layers_forward.1} parent=27 // pred_check_branch
          %189 = sbr.rel (%p187) target = $region32
        $region31: #{res_layers_forward.1} parent=27 // pred_region
          %s190 = smul.u32 4, %s19
          %p191 = scmp.lt.s32.totalorder %s190, 7
          %s192 = scalar_select %p191, %s190, 7
          %s193 = smul.addr %s192, 8
          %s194 = smul.addr %s193, 8
          %s195 = scalar_lea.vmem %s0, %s194
          %s196 = smul.u32 4, %s19
        $region32: #{res_layers_forward.1} parent=27 // pred_fallthru
          _
      $region28: #{res_layers_forward.1} parent=5 // pred_fallthru
        _
      %p197 = scmp.le.s32.totalorder 1, %s12
      %p198 = scmp.lt.s32.totalorder %s12, 7
      %p199 = pnand %p197, %p198
      %p200 = pneg %p199
      // Predicated region
      $region33: #{res_layers_forward.1} parent=5 // pred_check
        _
      $region34: #{res_layers_forward.1} parent=5 // pred_check_branch
        %202 = sbr.rel (%p199) target = $region36
      $region35: #{res_layers_forward.1} parent=5 // pred_region
        %s203 = ssub.s32 %s12, 1
        // Predicated region
        $region37: #{res_layers_forward.1} parent=35 // pred_check
          %p204 = pneg %p71
        $region38: #{res_layers_forward.1} parent=35 // pred_check_branch
          %206 = sbr.rel (%p204) target = $region40
        $region39: #{res_layers_forward.1} parent=35 // pred_region
          %207 = dma.done [#allocation3], 27648
        $region40: #{res_layers_forward.1} parent=35 // pred_fallthru
          _
        // Predicated region
        $region41: #{res_layers_forward.1} parent=35 // pred_check
          %p208 = pneg %p92
        $region42: #{res_layers_forward.1} parent=35 // pred_check_branch
          %210 = sbr.rel (%p208) target = $region44
        $region43: #{res_layers_forward.1} parent=35 // pred_region
          %211 = dma.done [#allocation5], 27648
        $region44: #{res_layers_forward.1} parent=35 // pred_fallthru
          _
        %s212 = smul.u32 4, %s21
        %p213 = scmp.lt.s32.totalorder %s212, 7
        %s214 = scalar_select %p213, %s212, 7
        %s215 = smul.addr %s214, 8
        %s216 = smul.addr %s215, 8
        %s217 = scalar_lea.vmem %s0, %s216
        %p218 = pneg %p50
        %p219 = pneg %p47
        %p220 = pneg %p71
        %p221 = pneg %p68
        %p222 = pneg %p92
        %p223 = pneg %p89
        %p224 = pneg %p113
        %p225 = pneg %p110
        %p226 = pneg %p139
        %p227 = pneg %p136
        %s228 = smul.u32 4, %s21
        %p229 = scmp.lt.s32.totalorder %s228, 7
        %s230 = scalar_select %p229, %s228, 7
        %s231 = smul.addr %s230, 8
        %s232 = smul.addr %s231, 8
        %s233 = scalar_lea.vmem %s4, %s232
        %s234 = smul.u32 4, %s21
        %p235 = scmp.lt.s32.totalorder %s234, 7
        %s236 = scalar_select %p235, %s234, 7
        %s237 = smul.addr %s236, 8
        %s238 = smul.addr %s237, 8
        %s239 = scalar_lea.vmem %s0, %s238
        %s240 = smul.u32 4, %s21
        %s241 = smul.u32 4, %s21
        %p242 = scmp.lt.s32.totalorder %s241, 7
        %s243 = scalar_select %p242, %s241, 7
        %s244 = smul.addr %s243, 8
        %s245 = smul.addr %s244, 8
        %s246 = scalar_lea.vmem %s4, %s245
        %s247 = smul.u32 4, %s21
        %p249 = scmp.eq.s32.totalorder %s22, 0
        // Predicated region
        $region45: #{res_layers_forward.1} parent=35 // pred_check
          %p250 = pneg %p249
        $region46: #{res_layers_forward.1} parent=35 // pred_check_branch
          %252 = sbr.rel (%p250) target = $region48
        $region47: #{res_layers_forward.1} parent=35 // pred_region
          %v253 = vld [vmem:[%s239] sm:$0xff]
          %v254 = vld [vmem:[%s239 + $0x8] sm:$0xff]
          %v255 = vld [vmem:[%s239 + $0x10] sm:$0xff]
          %v256 = vld [vmem:[%s239 + $0x18] sm:$0xff]
          %v257 = vld [vmem:[%s239 + $0x20] sm:$0xff]
          %v258 = vld [vmem:[%s239 + $0x28] sm:$0xff]
          %v259 = vld [vmem:[%s239 + $0x30] sm:$0xff]
          %v260 = vld [vmem:[%s239 + $0x38] sm:$0xff]
          %v261 = vld [vmem:[%s239 + $0x40] sm:$0xff]
          %v262 = vld [vmem:[%s239 + $0x48] sm:$0xff]
          %v263 = vld [vmem:[%s239 + $0x50] sm:$0xff]
          %v264 = vld [vmem:[%s239 + $0x58] sm:$0xff]
          %v265 = vld [vmem:[%s239 + $0x60] sm:$0xff]
          %v266 = vld [vmem:[%s239 + $0x68] sm:$0xff]
          %v267 = vld [vmem:[%s239 + $0x70] sm:$0xff]
          %v268 = vld [vmem:[%s239 + $0x78] sm:$0xff]
          %v269 = vld [vmem:[%s239 + $0x80] sm:$0xff]
          %v270 = vld [vmem:[%s239 + $0x88] sm:$0xff]
          %v271 = vld [vmem:[%s239 + $0x90] sm:$0xff]
          %v272 = vld [vmem:[%s239 + $0x98] sm:$0xff]
          %v273 = vld [vmem:[%s239 + $0xa0] sm:$0xff]
          %v274 = vld [vmem:[%s239 + $0xa8] sm:$0xff]
          %v275 = vld [vmem:[%s239 + $0xb0] sm:$0xff]
          %v276 = vld [vmem:[%s239 + $0xb8] sm:$0xff]
          %v277 = vld [vmem:[%s239 + $0xc0] sm:$0xff]
          %v278 = vld [vmem:[%s239 + $0xc8] sm:$0xff]
          %v279 = vld [vmem:[%s239 + $0xd0] sm:$0xff]
          %v280 = vld [vmem:[%s239 + $0xd8] sm:$0xff]
          %v281 = vld [vmem:[%s239 + $0xe0] sm:$0xff]
          %v282 = vld [vmem:[%s239 + $0xe8] sm:$0xff]
          %v283 = vld [vmem:[%s239 + $0xf0] sm:$0xff]
          %v284 = vld [vmem:[%s239 + $0xf8] sm:$0xff]
          %285 = vst [vmem:[%s246] sm:$0xff] %v253
          %286 = vst [vmem:[%s246 + $0x8] sm:$0xff] %v254
          %287 = vst [vmem:[%s246 + $0x10] sm:$0xff] %v255
          %288 = vst [vmem:[%s246 + $0x18] sm:$0xff] %v256
          %289 = vst [vmem:[%s246 + $0x20] sm:$0xff] %v257
          %290 = vst [vmem:[%s246 + $0x28] sm:$0xff] %v258
          %291 = vst [vmem:[%s246 + $0x30] sm:$0xff] %v259
          %292 = vst [vmem:[%s246 + $0x38] sm:$0xff] %v260
          %293 = vst [vmem:[%s246 + $0x40] sm:$0xff] %v261
          %294 = vst [vmem:[%s246 + $0x48] sm:$0xff] %v262
          %295 = vst [vmem:[%s246 + $0x50] sm:$0xff] %v263
          %296 = vst [vmem:[%s246 + $0x58] sm:$0xff] %v264
          %297 = vst [vmem:[%s246 + $0x60] sm:$0xff] %v265
          %298 = vst [vmem:[%s246 + $0x68] sm:$0xff] %v266
          %299 = vst [vmem:[%s246 + $0x70] sm:$0xff] %v267
          %300 = vst [vmem:[%s246 + $0x78] sm:$0xff] %v268
          %301 = vst [vmem:[%s246 + $0x80] sm:$0xff] %v269
          %302 = vst [vmem:[%s246 + $0x88] sm:$0xff] %v270
          %303 = vst [vmem:[%s246 + $0x90] sm:$0xff] %v271
          %304 = vst [vmem:[%s246 + $0x98] sm:$0xff] %v272
          %305 = vst [vmem:[%s246 + $0xa0] sm:$0xff] %v273
          %306 = vst [vmem:[%s246 + $0xa8] sm:$0xff] %v274
          %307 = vst [vmem:[%s246 + $0xb0] sm:$0xff] %v275
          %308 = vst [vmem:[%s246 + $0xb8] sm:$0xff] %v276
          %309 = vst [vmem:[%s246 + $0xc0] sm:$0xff] %v277
          %310 = vst [vmem:[%s246 + $0xc8] sm:$0xff] %v278
          %311 = vst [vmem:[%s246 + $0xd0] sm:$0xff] %v279
          %312 = vst [vmem:[%s246 + $0xd8] sm:$0xff] %v280
          %313 = vst [vmem:[%s246 + $0xe0] sm:$0xff] %v281
          %314 = vst [vmem:[%s246 + $0xe8] sm:$0xff] %v282
          %315 = vst [vmem:[%s246 + $0xf0] sm:$0xff] %v283
          %316 = vst [vmem:[%s246 + $0xf8] sm:$0xff] %v284
        $region48: #{res_layers_forward.1} parent=35 // pred_fallthru
          _
        %v317 = vld [vmem:[%s246] sm:$0xff]
        %v318 = vld [vmem:[%s246 + $0x8] sm:$0xff]
        %v319 = vld [vmem:[%s246 + $0x10] sm:$0xff]
        %v320 = vld [vmem:[%s246 + $0x18] sm:$0xff]
        %v321 = vld [vmem:[%s246 + $0x20] sm:$0xff]
        %v322 = vld [vmem:[%s246 + $0x28] sm:$0xff]
        %v323 = vld [vmem:[%s246 + $0x30] sm:$0xff]
        %v324 = vld [vmem:[%s246 + $0x38] sm:$0xff]
        %v325 = vld [vmem:[%s246 + $0x40] sm:$0xff]
        %v326 = vld [vmem:[%s246 + $0x48] sm:$0xff]
        %v327 = vld [vmem:[%s246 + $0x50] sm:$0xff]
        %v328 = vld [vmem:[%s246 + $0x58] sm:$0xff]
        %v329 = vld [vmem:[%s246 + $0x60] sm:$0xff]
        %v330 = vld [vmem:[%s246 + $0x68] sm:$0xff]
        %v331 = vld [vmem:[%s246 + $0x70] sm:$0xff]
        %v332 = vld [vmem:[%s246 + $0x78] sm:$0xff]
        %v333 = vld [vmem:[%s246 + $0x80] sm:$0xff]
        %v334 = vld [vmem:[%s246 + $0x88] sm:$0xff]
        %v335 = vld [vmem:[%s246 + $0x90] sm:$0xff]
        %v336 = vld [vmem:[%s246 + $0x98] sm:$0xff]
        %v337 = vld [vmem:[%s246 + $0xa0] sm:$0xff]
        %v338 = vld [vmem:[%s246 + $0xa8] sm:$0xff]
        %v339 = vld [vmem:[%s246 + $0xb0] sm:$0xff]
        %v340 = vld [vmem:[%s246 + $0xb8] sm:$0xff]
        %v341 = vld [vmem:[%s246 + $0xc0] sm:$0xff]
        %v342 = vld [vmem:[%s246 + $0xc8] sm:$0xff]
        %v343 = vld [vmem:[%s246 + $0xd0] sm:$0xff]
        %v344 = vld [vmem:[%s246 + $0xd8] sm:$0xff]
        %v345 = vld [vmem:[%s246 + $0xe0] sm:$0xff]
        %v346 = vld [vmem:[%s246 + $0xe8] sm:$0xff]
        %v347 = vld [vmem:[%s246 + $0xf0] sm:$0xff]
        %v348 = vld [vmem:[%s246 + $0xf8] sm:$0xff]
        %s349 = smul.u32 %s22, 2
        %s350 = scalar_lea.vmem %s3, %s349
        %v351 = vld [vmem:[%s350] sm:$0x1]
        %s352 = sadd.s32 %s349, 1
        %s353 = scalar_lea.vmem %s3, %s352
        %v354 = vld [vmem:[%s353] sm:$0x1]
        %v355 = vpack.c.bf16 %v317, %v317
        %v356 = vpack.c.bf16 %v318, %v318
        %v357 = vpack.c.bf16 %v319, %v319
        %v358 = vpack.c.bf16 %v320, %v320
        %v359 = vpack.c.bf16 %v321, %v321
        %v360 = vpack.c.bf16 %v322, %v322
        %v361 = vpack.c.bf16 %v323, %v323
        %v362 = vpack.c.bf16 %v324, %v324
        %v363 = vpack.c.bf16 %v325, %v325
        %v364 = vpack.c.bf16 %v326, %v326
        %v365 = vpack.c.bf16 %v327, %v327
        %v366 = vpack.c.bf16 %v328, %v328
        %v367 = vpack.c.bf16 %v329, %v329
        %v368 = vpack.c.bf16 %v330, %v330
        %v369 = vpack.c.bf16 %v331, %v331
        %v370 = vpack.c.bf16 %v332, %v332
        %v371 = vpack.c.bf16 %v333, %v333
        %v372 = vpack.c.bf16 %v334, %v334
        %v373 = vpack.c.bf16 %v335, %v335
        %v374 = vpack.c.bf16 %v336, %v336
        %v375 = vpack.c.bf16 %v337, %v337
        %v376 = vpack.c.bf16 %v338, %v338
        %v377 = vpack.c.bf16 %v339, %v339
        %v378 = vpack.c.bf16 %v340, %v340
        %v379 = vpack.c.bf16 %v341, %v341
        %v380 = vpack.c.bf16 %v342, %v342
        %v381 = vpack.c.bf16 %v343, %v343
        %v382 = vpack.c.bf16 %v344, %v344
        %v383 = vpack.c.bf16 %v345, %v345
        %v384 = vpack.c.bf16 %v346, %v346
        %v385 = vpack.c.bf16 %v347, %v347
        %v386 = vpack.c.bf16 %v348, %v348
        %v388 = vshrl.u32 0, 16
        %v390 = vrot.slane %v388, 7
        %v391 = vshll.u32 0, 16
        %v393 = vor.u32 %v390, %v391
        %v395 = vshrl.u32 %v355, 16
        %v397 = vrot.slane %v395, 7
        %v398 = vshll.u32 %v355, 16
        %v400 = vor.u32 %v397, %v398
        %v402 = vshrl.u32 %v356, 16
        %v404 = vrot.slane %v402, 7
        %v405 = vshll.u32 %v356, 16
        %v407 = vor.u32 %v404, %v405
        %v409 = vshrl.u32 %v357, 16
        %v411 = vrot.slane %v409, 7
        %v412 = vshll.u32 %v357, 16
        %v414 = vor.u32 %v411, %v412
        %v416 = vshrl.u32 %v358, 16
        %v418 = vrot.slane %v416, 7
        %v419 = vshll.u32 %v358, 16
        %v421 = vor.u32 %v418, %v419
        %v423 = vshrl.u32 %v359, 16
        %v425 = vrot.slane %v423, 7
        %v426 = vshll.u32 %v359, 16
        %v428 = vor.u32 %v425, %v426
        %v430 = vshrl.u32 %v360, 16
        %v432 = vrot.slane %v430, 7
        %v433 = vshll.u32 %v360, 16
        %v435 = vor.u32 %v432, %v433
        %v437 = vshrl.u32 %v361, 16
        %v439 = vrot.slane %v437, 7
        %v440 = vshll.u32 %v361, 16
        %v442 = vor.u32 %v439, %v440
        %v444 = vshrl.u32 %v363, 16
        %v446 = vrot.slane %v444, 7
        %v447 = vshll.u32 %v363, 16
        %v449 = vor.u32 %v446, %v447
        %v451 = vshrl.u32 %v364, 16
        %v453 = vrot.slane %v451, 7
        %v454 = vshll.u32 %v364, 16
        %v456 = vor.u32 %v453, %v454
        %v458 = vshrl.u32 %v365, 16
        %v460 = vrot.slane %v458, 7
        %v461 = vshll.u32 %v365, 16
        %v463 = vor.u32 %v460, %v461
        %v465 = vshrl.u32 %v366, 16
        %v467 = vrot.slane %v465, 7
        %v468 = vshll.u32 %v366, 16
        %v470 = vor.u32 %v467, %v468
        %v472 = vshrl.u32 %v367, 16
        %v474 = vrot.slane %v472, 7
        %v475 = vshll.u32 %v367, 16
        %v477 = vor.u32 %v474, %v475
        %v479 = vshrl.u32 %v368, 16
        %v481 = vrot.slane %v479, 7
        %v482 = vshll.u32 %v368, 16
        %v484 = vor.u32 %v481, %v482
        %v486 = vshrl.u32 %v369, 16
        %v488 = vrot.slane %v486, 7
        %v489 = vshll.u32 %v369, 16
        %v491 = vor.u32 %v488, %v489
        %v493 = vshrl.u32 %v371, 16
        %v495 = vrot.slane %v493, 7
        %v496 = vshll.u32 %v371, 16
        %v498 = vor.u32 %v495, %v496
        %v500 = vshrl.u32 %v372, 16
        %v502 = vrot.slane %v500, 7
        %v503 = vshll.u32 %v372, 16
        %v505 = vor.u32 %v502, %v503
        %v507 = vshrl.u32 %v373, 16
        %v509 = vrot.slane %v507, 7
        %v510 = vshll.u32 %v373, 16
        %v512 = vor.u32 %v509, %v510
        %v514 = vshrl.u32 %v374, 16
        %v516 = vrot.slane %v514, 7
        %v517 = vshll.u32 %v374, 16
        %v519 = vor.u32 %v516, %v517
        %v521 = vshrl.u32 %v375, 16
        %v523 = vrot.slane %v521, 7
        %v524 = vshll.u32 %v375, 16
        %v526 = vor.u32 %v523, %v524
        %v528 = vshrl.u32 %v376, 16
        %v530 = vrot.slane %v528, 7
        %v531 = vshll.u32 %v376, 16
        %v533 = vor.u32 %v530, %v531
        %v535 = vshrl.u32 %v377, 16
        %v537 = vrot.slane %v535, 7
        %v538 = vshll.u32 %v377, 16
        %v540 = vor.u32 %v537, %v538
        %v542 = vshrl.u32 %v379, 16
        %v544 = vrot.slane %v542, 7
        %v545 = vshll.u32 %v379, 16
        %v547 = vor.u32 %v544, %v545
        %v549 = vshrl.u32 %v380, 16
        %v551 = vrot.slane %v549, 7
        %v552 = vshll.u32 %v380, 16
        %v554 = vor.u32 %v551, %v552
        %v556 = vshrl.u32 %v381, 16
        %v558 = vrot.slane %v556, 7
        %v559 = vshll.u32 %v381, 16
        %v561 = vor.u32 %v558, %v559
        %v563 = vshrl.u32 %v382, 16
        %v565 = vrot.slane %v563, 7
        %v566 = vshll.u32 %v382, 16
        %v568 = vor.u32 %v565, %v566
        %v570 = vshrl.u32 %v383, 16
        %v572 = vrot.slane %v570, 7
        %v573 = vshll.u32 %v383, 16
        %v575 = vor.u32 %v572, %v573
        %v577 = vshrl.u32 %v384, 16
        %v579 = vrot.slane %v577, 7
        %v580 = vshll.u32 %v384, 16
        %v582 = vor.u32 %v579, %v580
        %v584 = vshrl.u32 %v385, 16
        %v586 = vrot.slane %v584, 7
        %v587 = vshll.u32 %v385, 16
        %v589 = vor.u32 %v586, %v587
        %vm619 = vcmask 1040384
        %vm620 = vsmask.f32 256
        %vm621 = vmand %vm619, %vm620
        %v622 = vsel %vm621, 0, %v393
        %v623 = vsel %vm621, 0, %v400
        %v624 = vsel %vm621, 0, %v407
        %v625 = vsel %vm621, 0, %v414
        %v626 = vsel %vm621, 0, %v421
        %v627 = vsel %vm621, 0, %v428
        %v628 = vsel %vm621, 0, %v435
        %v629 = vsel %vm621, 0, %v442
        %v630 = vsel %vm621, 0, %v449
        %v631 = vsel %vm621, 0, %v456
        %v632 = vsel %vm621, 0, %v463
        %v633 = vsel %vm621, 0, %v470
        %v634 = vsel %vm621, 0, %v477
        %v635 = vsel %vm621, 0, %v484
        %v636 = vsel %vm621, 0, %v491
        %v637 = vsel %vm621, 0, %v498
        %v638 = vsel %vm621, 0, %v505
        %v639 = vsel %vm621, 0, %v512
        %v640 = vsel %vm621, 0, %v519
        %v641 = vsel %vm621, 0, %v526
        %v642 = vsel %vm621, 0, %v533
        %v643 = vsel %vm621, 0, %v540
        %v644 = vsel %vm621, 0, %v547
        %v645 = vsel %vm621, 0, %v554
        %v646 = vsel %vm621, 0, %v561
        %v647 = vsel %vm621, 0, %v568
        %v648 = vsel %vm621, 0, %v575
        %v649 = vsel %vm621, 0, %v582
        %v650 = vsel %vm621, 0, %v589
        %v651 = vrot.slane %v391, 1
        %v652 = vor.u32 %v388, %v651
        %v653 = vrot.slane %v398, 1
        %v654 = vor.u32 %v395, %v653
        %v655 = vrot.slane %v405, 1
        %v656 = vor.u32 %v402, %v655
        %v657 = vrot.slane %v412, 1
        %v658 = vor.u32 %v409, %v657
        %v659 = vrot.slane %v419, 1
        %v660 = vor.u32 %v416, %v659
        %v661 = vrot.slane %v426, 1
        %v662 = vor.u32 %v423, %v661
        %v663 = vrot.slane %v433, 1
        %v664 = vor.u32 %v430, %v663
        %v665 = vrot.slane %v440, 1
        %v666 = vor.u32 %v437, %v665
        %v667 = vrot.slane %v447, 1
        %v668 = vor.u32 %v444, %v667
        %v669 = vrot.slane %v454, 1
        %v670 = vor.u32 %v451, %v669
        %v671 = vrot.slane %v461, 1
        %v672 = vor.u32 %v458, %v671
        %v673 = vrot.slane %v468, 1
        %v674 = vor.u32 %v465, %v673
        %v675 = vrot.slane %v475, 1
        %v676 = vor.u32 %v472, %v675
        %v677 = vrot.slane %v482, 1
        %v678 = vor.u32 %v479, %v677
        %v679 = vrot.slane %v489, 1
        %v680 = vor.u32 %v486, %v679
        %v681 = vrot.slane %v496, 1
        %v682 = vor.u32 %v493, %v681
        %v683 = vrot.slane %v503, 1
        %v684 = vor.u32 %v500, %v683
        %v685 = vrot.slane %v510, 1
        %v686 = vor.u32 %v507, %v685
        %v687 = vrot.slane %v517, 1
        %v688 = vor.u32 %v514, %v687
        %v689 = vrot.slane %v524, 1
        %v690 = vor.u32 %v521, %v689
        %v691 = vrot.slane %v531, 1
        %v692 = vor.u32 %v528, %v691
        %v693 = vrot.slane %v538, 1
        %v694 = vor.u32 %v535, %v693
        %v695 = vrot.slane %v545, 1
        %v696 = vor.u32 %v542, %v695
        %v697 = vrot.slane %v552, 1
        %v698 = vor.u32 %v549, %v697
        %v699 = vrot.slane %v559, 1
        %v700 = vor.u32 %v556, %v699
        %v701 = vrot.slane %v566, 1
        %v702 = vor.u32 %v563, %v701
        %v703 = vrot.slane %v573, 1
        %v704 = vor.u32 %v570, %v703
        %v705 = vrot.slane %v580, 1
        %v706 = vor.u32 %v577, %v705
        %v707 = vrot.slane %v587, 1
        %v708 = vor.u32 %v584, %v707
        %vm738 = vcmask 1043456
        %vm739 = vsmask.f32 3328
        %vm740 = vmand %vm738, %vm739
        %v741 = vsel %vm740, %v652, 0
        %v742 = vsel %vm740, %v654, 0
        %v743 = vsel %vm740, %v656, 0
        %v744 = vsel %vm740, %v658, 0
        %v745 = vsel %vm740, %v660, 0
        %v746 = vsel %vm740, %v662, 0
        %v747 = vsel %vm740, %v664, 0
        %v748 = vsel %vm740, %v666, 0
        %v749 = vsel %vm740, %v668, 0
        %v750 = vsel %vm740, %v670, 0
        %v751 = vsel %vm740, %v672, 0
        %v752 = vsel %vm740, %v674, 0
        %v753 = vsel %vm740, %v676, 0
        %v754 = vsel %vm740, %v678, 0
        %v755 = vsel %vm740, %v680, 0
        %v756 = vsel %vm740, %v682, 0
        %v757 = vsel %vm740, %v684, 0
        %v758 = vsel %vm740, %v686, 0
        %v759 = vsel %vm740, %v688, 0
        %v760 = vsel %vm740, %v690, 0
        %v761 = vsel %vm740, %v692, 0
        %v762 = vsel %vm740, %v694, 0
        %v763 = vsel %vm740, %v696, 0
        %v764 = vsel %vm740, %v698, 0
        %v765 = vsel %vm740, %v700, 0
        %v766 = vsel %vm740, %v702, 0
        %v767 = vsel %vm740, %v704, 0
        %v768 = vsel %vm740, %v706, 0
        %v769 = vsel %vm740, %v708, 0
        %s770 = smul.u32 %s22, 9
        %s771 = smul.u32 %s770, 16
        %s772 = smul.addr %s771, 4
        %s773 = scalar_lea.vmem [#allocation2], %s772
        %v774 = vld [vmem:[%s773] sm:$0xf]
        %v775 = vld [vmem:[%s773 + $0x4] sm:$0xf]
        %v776 = vld [vmem:[%s773 + $0x8] sm:$0xf]
        %v777 = vld [vmem:[%s773 + $0xc] sm:$0xf]
        %v778 = vld [vmem:[%s773 + $0x10] sm:$0xf]
        %v779 = vld [vmem:[%s773 + $0x14] sm:$0xf]
        %v780 = vld [vmem:[%s773 + $0x18] sm:$0xf]
        %v781 = vld [vmem:[%s773 + $0x1c] sm:$0xf]
        %v782 = vld [vmem:[%s773 + $0x20] sm:$0xf]
        %v783 = vld [vmem:[%s773 + $0x24] sm:$0xf]
        %v784 = vld [vmem:[%s773 + $0x28] sm:$0xf]
        %v785 = vld [vmem:[%s773 + $0x2c] sm:$0xf]
        %v786 = vld [vmem:[%s773 + $0x30] sm:$0xf]
        %v787 = vld [vmem:[%s773 + $0x34] sm:$0xf]
        %v788 = vld [vmem:[%s773 + $0x38] sm:$0xf]
        %v789 = vld [vmem:[%s773 + $0x3c] sm:$0xf]
        %s790 = sadd.s32 %s770, 1
        %s791 = smul.u32 %s790, 16
        %s792 = smul.addr %s791, 4
        %s793 = scalar_lea.vmem [#allocation2], %s792
        %v794 = vld [vmem:[%s793] sm:$0xf]
        %v795 = vld [vmem:[%s793 + $0x4] sm:$0xf]
        %v796 = vld [vmem:[%s793 + $0x8] sm:$0xf]
        %v797 = vld [vmem:[%s793 + $0xc] sm:$0xf]
        %v798 = vld [vmem:[%s793 + $0x10] sm:$0xf]
        %v799 = vld [vmem:[%s793 + $0x14] sm:$0xf]
        %v800 = vld [vmem:[%s793 + $0x18] sm:$0xf]
        %v801 = vld [vmem:[%s793 + $0x1c] sm:$0xf]
        %v802 = vld [vmem:[%s793 + $0x20] sm:$0xf]
        %v803 = vld [vmem:[%s793 + $0x24] sm:$0xf]
        %v804 = vld [vmem:[%s793 + $0x28] sm:$0xf]
        %v805 = vld [vmem:[%s793 + $0x2c] sm:$0xf]
        %v806 = vld [vmem:[%s793 + $0x30] sm:$0xf]
        %v807 = vld [vmem:[%s793 + $0x34] sm:$0xf]
        %v808 = vld [vmem:[%s793 + $0x38] sm:$0xf]
        %v809 = vld [vmem:[%s793 + $0x3c] sm:$0xf]
        %v839 = vunpack.c.l.b16 0
        %v840 = vunpack.c.l.b16 %v355
        %v841 = vunpack.c.l.b16 %v356
        %v842 = vunpack.c.l.b16 %v357
        %v843 = vunpack.c.l.b16 %v358
        %v844 = vunpack.c.l.b16 %v359
        %v845 = vunpack.c.l.b16 %v360
        %v846 = vunpack.c.l.b16 %v361
        %v847 = vunpack.c.l.b16 %v363
        %v848 = vunpack.c.l.b16 %v364
        %v849 = vunpack.c.l.b16 %v365
        %v850 = vunpack.c.l.b16 %v366
        %v851 = vunpack.c.l.b16 %v367
        %v852 = vunpack.c.l.b16 %v368
        %v853 = vunpack.c.l.b16 %v369
        %v854 = vunpack.c.l.b16 %v371
        %v855 = vunpack.c.l.b16 %v372
        %v856 = vunpack.c.l.b16 %v373
        %v857 = vunpack.c.l.b16 %v374
        %v858 = vunpack.c.l.b16 %v375
        %v859 = vunpack.c.l.b16 %v376
        %v860 = vunpack.c.l.b16 %v377
        %v861 = vunpack.c.l.b16 %v379
        %v862 = vunpack.c.l.b16 %v380
        %v863 = vunpack.c.l.b16 %v381
        %v864 = vunpack.c.l.b16 %v382
        %v865 = vunpack.c.l.b16 %v383
        %v866 = vunpack.c.l.b16 %v384
        %v867 = vunpack.c.l.b16 %v385
        %v868 = vpack.c.b16 %v840, %v839
        %v869 = vpack.c.b16 %v842, %v841
        %v870 = vpack.c.b16 %v844, %v843
        %v871 = vpack.c.b16 %v846, %v845
        %v872 = vpack.c.b16 %v847, %v839
        %v873 = vpack.c.b16 %v849, %v848
        %v874 = vpack.c.b16 %v851, %v850
        %v875 = vpack.c.b16 %v853, %v852
        %v876 = vpack.c.b16 %v854, %v839
        %v877 = vpack.c.b16 %v856, %v855
        %v878 = vpack.c.b16 %v858, %v857
        %v879 = vpack.c.b16 %v860, %v859
        %v880 = vpack.c.b16 %v861, %v839
        %v881 = vpack.c.b16 %v863, %v862
        %v882 = vpack.c.b16 %v865, %v864
        %v883 = vpack.c.b16 %v867, %v866
        %v916 = vunpack.c.l.b16 %v794
        %v917 = vunpack.c.l.b16 %v795
        %v918 = vunpack.c.l.b16 %v796
        %v919 = vunpack.c.l.b16 %v797
        %v920 = vunpack.c.l.b16 %v798
        %v921 = vunpack.c.l.b16 %v799
        %v922 = vunpack.c.l.b16 %v800
        %v923 = vunpack.c.l.b16 %v801
        %v924 = vunpack.c.l.b16 %v802
        %v925 = vunpack.c.l.b16 %v803
        %v926 = vunpack.c.l.b16 %v804
        %v927 = vunpack.c.l.b16 %v805
        %v928 = vunpack.c.l.b16 %v806
        %v929 = vunpack.c.l.b16 %v807
        %v930 = vunpack.c.l.b16 %v808
        %v931 = vunpack.c.l.b16 %v809
        %v932 = vpack.c.b16 %v917, %v916
        %v933 = vpack.c.b16 %v919, %v918
        %v934 = vpack.c.b16 %v921, %v920
        %v935 = vpack.c.b16 %v923, %v922
        %v936 = vpack.c.b16 %v925, %v924
        %v937 = vpack.c.b16 %v927, %v926
        %v938 = vpack.c.b16 %v929, %v928
        %v939 = vpack.c.b16 %v931, %v930
        %948 = vmatprep.subr.bf16.mxu0 0
        %949 = vmatpush1.bf16.msra.mxu0 %v939
        %950 = vmatprep.subr.bf16.mxu0 0
        %951 = vmatpush1.bf16.msra.mxu0 %v938
        %952 = vmatprep.subr.bf16.mxu0 0
        %953 = vmatpush1.bf16.msra.mxu0 %v937
        %954 = vmatprep.subr.bf16.mxu0 0
        %955 = vmatpush1.bf16.msra.mxu0 %v936
        %956 = vmatprep.subr.bf16.mxu0 0
        %957 = vmatpush1.bf16.msra.mxu0 %v935
        %958 = vmatprep.subr.bf16.mxu0 0
        %959 = vmatpush1.bf16.msra.mxu0 %v934
        %960 = vmatprep.subr.bf16.mxu0 0
        %961 = vmatpush1.bf16.msra.mxu0 %v933
        %962 = vmatprep.subr.bf16.mxu0 0
        %963 = vmatpush1.bf16.msra.mxu0 %v932
        %964 = vmatprep.subr.bf16.mxu0 0
        %965 = vmatpush2.bf16.msra.mxu0 0
        %966 = vmatprep.subr.bf16.mxu0 0
        %967 = vmatpush2.bf16.msra.mxu0 0
        %968 = vmatprep.subr.bf16.mxu0 0
        %969 = vmatpush2.bf16.msra.mxu0 0
        %970 = vmatprep.subr.bf16.mxu0 0
        %971 = vmatpush2.bf16.msra.mxu0 0
        %972 = vmatprep.subr.bf16.mxu0 0
        %973 = vmatpush2.bf16.msra.mxu0 0
        %974 = vmatprep.subr.bf16.mxu0 0
        %975 = vmatpush2.bf16.msra.mxu0 0
        %976 = vmatprep.subr.bf16.mxu0 0
        %977 = vmatpush2.bf16.msra.mxu0 0
        %978 = vmatprep.subr.bf16.mxu0 0
        %979 = vmatpush2.bf16.msra.mxu0 0
        %980 = vmatprep.mubr.bf16.mxu0 0
        %981 = vmatmul.mubr.bf16.gmra.mxu0 %v868
        %v982 = vpop.f32.mrf.mxu0
        %v983 = vadd.f32 0.0, %v982
        %v984 = vpop.f32.mrf.mxu0
        %v985 = vpop.f32.mrf.mxu0
        %v986 = vadd.f32 0.0, %v985
        %v987 = vpop.f32.mrf.mxu0
        %988 = vmatprep.mubr.bf16.mxu0 0
        %989 = vmatmul.mubr.bf16.gmra.mxu0 %v869
        %v990 = vpop.f32.mrf.mxu0
        %v991 = vadd.f32 0.0, %v990
        %v992 = vpop.f32.mrf.mxu0
        %v993 = vpop.f32.mrf.mxu0
        %v994 = vadd.f32 0.0, %v993
        %v995 = vpop.f32.mrf.mxu0
        %996 = vmatprep.mubr.bf16.mxu0 0
        %997 = vmatmul.mubr.bf16.gmra.mxu0 %v870
        %v998 = vpop.f32.mrf.mxu0
        %v999 = vadd.f32 0.0, %v998
        %v1000 = vpop.f32.mrf.mxu0
        %v1001 = vpop.f32.mrf.mxu0
        %v1002 = vadd.f32 0.0, %v1001
        %v1003 = vpop.f32.mrf.mxu0
        %1004 = vmatprep.mubr.bf16.mxu0 0
        %1005 = vmatmul.mubr.bf16.gmra.mxu0 %v871
        %v1006 = vpop.f32.mrf.mxu0
        %v1007 = vadd.f32 0.0, %v1006
        %v1008 = vpop.f32.mrf.mxu0
        %v1009 = vpop.f32.mrf.mxu0
        %v1010 = vadd.f32 0.0, %v1009
        %v1011 = vpop.f32.mrf.mxu0
        %1012 = vmatprep.mubr.bf16.mxu0 0
        %1013 = vmatmul.mubr.bf16.gmra.mxu0 %v872
        %v1014 = vpop.f32.mrf.mxu0
        %v1015 = vadd.f32 0.0, %v1014
        %v1016 = vpop.f32.mrf.mxu0
        %v1017 = vpop.f32.mrf.mxu0
        %v1018 = vadd.f32 0.0, %v1017
        %v1019 = vpop.f32.mrf.mxu0
        %1020 = vmatprep.mubr.bf16.mxu0 0
        %1021 = vmatmul.mubr.bf16.gmra.mxu0 %v873
        %v1022 = vpop.f32.mrf.mxu0
        %v1023 = vadd.f32 0.0, %v1022
        %v1024 = vpop.f32.mrf.mxu0
        %v1025 = vpop.f32.mrf.mxu0
        %v1026 = vadd.f32 0.0, %v1025
        %v1027 = vpop.f32.mrf.mxu0
        %1028 = vmatprep.mubr.bf16.mxu0 0
        %1029 = vmatmul.mubr.bf16.gmra.mxu0 %v874
        %v1030 = vpop.f32.mrf.mxu0
        %v1031 = vadd.f32 0.0, %v1030
        %v1032 = vpop.f32.mrf.mxu0
        %v1033 = vpop.f32.mrf.mxu0
        %v1034 = vadd.f32 0.0, %v1033
        %v1035 = vpop.f32.mrf.mxu0
        %1036 = vmatprep.mubr.bf16.mxu0 0
        %1037 = vmatmul.mubr.bf16.gmra.mxu0 %v875
        %v1038 = vpop.f32.mrf.mxu0
        %v1039 = vadd.f32 0.0, %v1038
        %v1040 = vpop.f32.mrf.mxu0
        %v1041 = vpop.f32.mrf.mxu0
        %v1042 = vadd.f32 0.0, %v1041
        %v1043 = vpop.f32.mrf.mxu0
        %1044 = vmatprep.mubr.bf16.mxu0 0
        %1045 = vmatmul.mubr.bf16.gmra.mxu0 %v876
        %v1046 = vpop.f32.mrf.mxu0
        %v1047 = vadd.f32 0.0, %v1046
        %v1048 = vpop.f32.mrf.mxu0
        %v1049 = vpop.f32.mrf.mxu0
        %v1050 = vadd.f32 0.0, %v1049
        %v1051 = vpop.f32.mrf.mxu0
        %1052 = vmatprep.mubr.bf16.mxu0 0
        %1053 = vmatmul.mubr.bf16.gmra.mxu0 %v877
        %v1054 = vpop.f32.mrf.mxu0
        %v1055 = vadd.f32 0.0, %v1054
        %v1056 = vpop.f32.mrf.mxu0
        %v1057 = vpop.f32.mrf.mxu0
        %v1058 = vadd.f32 0.0, %v1057
        %v1059 = vpop.f32.mrf.mxu0
        %1060 = vmatprep.mubr.bf16.mxu0 0
        %1061 = vmatmul.mubr.bf16.gmra.mxu0 %v878
        %v1062 = vpop.f32.mrf.mxu0
        %v1063 = vadd.f32 0.0, %v1062
        %v1064 = vpop.f32.mrf.mxu0
        %v1065 = vpop.f32.mrf.mxu0
        %v1066 = vadd.f32 0.0, %v1065
        %v1067 = vpop.f32.mrf.mxu0
        %1068 = vmatprep.mubr.bf16.mxu0 0
        %1069 = vmatmul.mubr.bf16.gmra.mxu0 %v879
        %v1070 = vpop.f32.mrf.mxu0
        %v1071 = vadd.f32 0.0, %v1070
        %v1072 = vpop.f32.mrf.mxu0
        %v1073 = vpop.f32.mrf.mxu0
        %v1074 = vadd.f32 0.0, %v1073
        %v1075 = vpop.f32.mrf.mxu0
        %1076 = vmatprep.mubr.bf16.mxu0 0
        %1077 = vmatmul.mubr.bf16.gmra.mxu0 %v880
        %v1078 = vpop.f32.mrf.mxu0
        %v1079 = vadd.f32 0.0, %v1078
        %v1080 = vpop.f32.mrf.mxu0
        %v1081 = vpop.f32.mrf.mxu0
        %v1082 = vadd.f32 0.0, %v1081
        %v1083 = vpop.f32.mrf.mxu0
        %1084 = vmatprep.mubr.bf16.mxu0 0
        %1085 = vmatmul.mubr.bf16.gmra.mxu0 %v881
        %v1086 = vpop.f32.mrf.mxu0
        %v1087 = vadd.f32 0.0, %v1086
        %v1088 = vpop.f32.mrf.mxu0
        %v1089 = vpop.f32.mrf.mxu0
        %v1090 = vadd.f32 0.0, %v1089
        %v1091 = vpop.f32.mrf.mxu0
        %1092 = vmatprep.mubr.bf16.mxu0 0
        %1093 = vmatmul.mubr.bf16.gmra.mxu0 %v882
        %v1094 = vpop.f32.mrf.mxu0
        %v1095 = vadd.f32 0.0, %v1094
        %v1096 = vpop.f32.mrf.mxu0
        %v1097 = vpop.f32.mrf.mxu0
        %v1098 = vadd.f32 0.0, %v1097
        %v1099 = vpop.f32.mrf.mxu0
        %1100 = vmatprep.mubr.bf16.mxu0 0
        %1101 = vmatmul.mubr.bf16.gmra.mxu0 %v883
        %v1102 = vpop.f32.mrf.mxu0
        %v1103 = vadd.f32 0.0, %v1102
        %v1104 = vpop.f32.mrf.mxu0
        %v1105 = vpop.f32.mrf.mxu0
        %v1106 = vadd.f32 0.0, %v1105
        %v1107 = vpop.f32.mrf.mxu0
        %1108 = vdwg.mxu0
        %v1138 = vunpack.c.l.b16 %v622
        %v1139 = vunpack.c.l.b16 %v623
        %v1140 = vunpack.c.l.b16 %v624
        %v1141 = vunpack.c.l.b16 %v625
        %v1142 = vunpack.c.l.b16 %v626
        %v1143 = vunpack.c.l.b16 %v627
        %v1144 = vunpack.c.l.b16 %v628
        %v1145 = vunpack.c.l.b16 %v629
        %v1146 = vunpack.c.l.b16 %v630
        %v1147 = vunpack.c.l.b16 %v631
        %v1148 = vunpack.c.l.b16 %v632
        %v1149 = vunpack.c.l.b16 %v633
        %v1150 = vunpack.c.l.b16 %v634
        %v1151 = vunpack.c.l.b16 %v635
        %v1152 = vunpack.c.l.b16 %v636
        %v1153 = vunpack.c.l.b16 %v637
        %v1154 = vunpack.c.l.b16 %v638
        %v1155 = vunpack.c.l.b16 %v639
        %v1156 = vunpack.c.l.b16 %v640
        %v1157 = vunpack.c.l.b16 %v641
        %v1158 = vunpack.c.l.b16 %v642
        %v1159 = vunpack.c.l.b16 %v643
        %v1160 = vunpack.c.l.b16 %v644
        %v1161 = vunpack.c.l.b16 %v645
        %v1162 = vunpack.c.l.b16 %v646
        %v1163 = vunpack.c.l.b16 %v647
        %v1164 = vunpack.c.l.b16 %v648
        %v1165 = vunpack.c.l.b16 %v649
        %v1166 = vunpack.c.l.b16 %v650
        %v1167 = vpack.c.b16 %v1139, %v1138
        %v1168 = vpack.c.b16 %v1141, %v1140
        %v1169 = vpack.c.b16 %v1143, %v1142
        %v1170 = vpack.c.b16 %v1145, %v1144
        %v1171 = vpack.c.b16 %v1146, %v1138
        %v1172 = vpack.c.b16 %v1148, %v1147
        %v1173 = vpack.c.b16 %v1150, %v1149
        %v1174 = vpack.c.b16 %v1152, %v1151
        %v1175 = vpack.c.b16 %v1153, %v1138
        %v1176 = vpack.c.b16 %v1155, %v1154
        %v1177 = vpack.c.b16 %v1157, %v1156
        %v1178 = vpack.c.b16 %v1159, %v1158
        %v1179 = vpack.c.b16 %v1160, %v1138
        %v1180 = vpack.c.b16 %v1162, %v1161
        %v1181 = vpack.c.b16 %v1164, %v1163
        %v1182 = vpack.c.b16 %v1166, %v1165
        %v1215 = vunpack.c.l.b16 %v774
        %v1216 = vunpack.c.l.b16 %v775
        %v1217 = vunpack.c.l.b16 %v776
        %v1218 = vunpack.c.l.b16 %v777
        %v1219 = vunpack.c.l.b16 %v778
        %v1220 = vunpack.c.l.b16 %v779
        %v1221 = vunpack.c.l.b16 %v780
        %v1222 = vunpack.c.l.b16 %v781
        %v1223 = vunpack.c.l.b16 %v782
        %v1224 = vunpack.c.l.b16 %v783
        %v1225 = vunpack.c.l.b16 %v784
        %v1226 = vunpack.c.l.b16 %v785
        %v1227 = vunpack.c.l.b16 %v786
        %v1228 = vunpack.c.l.b16 %v787
        %v1229 = vunpack.c.l.b16 %v788
        %v1230 = vunpack.c.l.b16 %v789
        %v1231 = vpack.c.b16 %v1216, %v1215
        %v1232 = vpack.c.b16 %v1218, %v1217
        %v1233 = vpack.c.b16 %v1220, %v1219
        %v1234 = vpack.c.b16 %v1222, %v1221
        %v1235 = vpack.c.b16 %v1224, %v1223
        %v1236 = vpack.c.b16 %v1226, %v1225
        %v1237 = vpack.c.b16 %v1228, %v1227
        %v1238 = vpack.c.b16 %v1230, %v1229
        %1247 = vmatprep.subr.bf16.mxu0 0
        %1248 = vmatpush1.bf16.msra.mxu0 %v1238
        %1249 = vmatprep.subr.bf16.mxu0 0
        %1250 = vmatpush1.bf16.msra.mxu0 %v1237
        %1251 = vmatprep.subr.bf16.mxu0 0
        %1252 = vmatpush1.bf16.msra.mxu0 %v1236
        %1253 = vmatprep.subr.bf16.mxu0 0
        %1254 = vmatpush1.bf16.msra.mxu0 %v1235
        %1255 = vmatprep.subr.bf16.mxu0 0
        %1256 = vmatpush1.bf16.msra.mxu0 %v1234
        %1257 = vmatprep.subr.bf16.mxu0 0
        %1258 = vmatpush1.bf16.msra.mxu0 %v1233
        %1259 = vmatprep.subr.bf16.mxu0 0
        %1260 = vmatpush1.bf16.msra.mxu0 %v1232
        %1261 = vmatprep.subr.bf16.mxu0 0
        %1262 = vmatpush1.bf16.msra.mxu0 %v1231
        %1263 = vmatprep.subr.bf16.mxu0 0
        %1264 = vmatpush2.bf16.msra.mxu0 0
        %1265 = vmatprep.subr.bf16.mxu0 0
        %1266 = vmatpush2.bf16.msra.mxu0 0
        %1267 = vmatprep.subr.bf16.mxu0 0
        %1268 = vmatpush2.bf16.msra.mxu0 0
        %1269 = vmatprep.subr.bf16.mxu0 0
        %1270 = vmatpush2.bf16.msra.mxu0 0
        %1271 = vmatprep.subr.bf16.mxu0 0
        %1272 = vmatpush2.bf16.msra.mxu0 0
        %1273 = vmatprep.subr.bf16.mxu0 0
        %1274 = vmatpush2.bf16.msra.mxu0 0
        %1275 = vmatprep.subr.bf16.mxu0 0
        %1276 = vmatpush2.bf16.msra.mxu0 0
        %1277 = vmatprep.subr.bf16.mxu0 0
        %1278 = vmatpush2.bf16.msra.mxu0 0
        %1279 = vmatprep.mubr.bf16.mxu0 0
        %1280 = vmatmul.mubr.bf16.gmra.mxu0 %v1167
        %v1281 = vpop.f32.mrf.mxu0
        %v1282 = vadd.f32 %v983, %v1281
        %v1283 = vpop.f32.mrf.mxu0
        %v1284 = vpop.f32.mrf.mxu0
        %v1285 = vadd.f32 %v986, %v1284
        %v1286 = vpop.f32.mrf.mxu0
        %1287 = vmatprep.mubr.bf16.mxu0 0
        %1288 = vmatmul.mubr.bf16.gmra.mxu0 %v1168
        %v1289 = vpop.f32.mrf.mxu0
        %v1290 = vadd.f32 %v991, %v1289
        %v1291 = vpop.f32.mrf.mxu0
        %v1292 = vpop.f32.mrf.mxu0
        %v1293 = vadd.f32 %v994, %v1292
        %v1294 = vpop.f32.mrf.mxu0
        %1295 = vmatprep.mubr.bf16.mxu0 0
        %1296 = vmatmul.mubr.bf16.gmra.mxu0 %v1169
        %v1297 = vpop.f32.mrf.mxu0
        %v1298 = vadd.f32 %v999, %v1297
        %v1299 = vpop.f32.mrf.mxu0
        %v1300 = vpop.f32.mrf.mxu0
        %v1301 = vadd.f32 %v1002, %v1300
        %v1302 = vpop.f32.mrf.mxu0
        %1303 = vmatprep.mubr.bf16.mxu0 0
        %1304 = vmatmul.mubr.bf16.gmra.mxu0 %v1170
        %v1305 = vpop.f32.mrf.mxu0
        %v1306 = vadd.f32 %v1007, %v1305
        %v1307 = vpop.f32.mrf.mxu0
        %v1308 = vpop.f32.mrf.mxu0
        %v1309 = vadd.f32 %v1010, %v1308
        %v1310 = vpop.f32.mrf.mxu0
        %1311 = vmatprep.mubr.bf16.mxu0 0
        %1312 = vmatmul.mubr.bf16.gmra.mxu0 %v1171
        %v1313 = vpop.f32.mrf.mxu0
        %v1314 = vadd.f32 %v1015, %v1313
        %v1315 = vpop.f32.mrf.mxu0
        %v1316 = vpop.f32.mrf.mxu0
        %v1317 = vadd.f32 %v1018, %v1316
        %v1318 = vpop.f32.mrf.mxu0
        %1319 = vmatprep.mubr.bf16.mxu0 0
        %1320 = vmatmul.mubr.bf16.gmra.mxu0 %v1172
        %v1321 = vpop.f32.mrf.mxu0
        %v1322 = vadd.f32 %v1023, %v1321
        %v1323 = vpop.f32.mrf.mxu0
        %v1324 = vpop.f32.mrf.mxu0
        %v1325 = vadd.f32 %v1026, %v1324
        %v1326 = vpop.f32.mrf.mxu0
        %1327 = vmatprep.mubr.bf16.mxu0 0
        %1328 = vmatmul.mubr.bf16.gmra.mxu0 %v1173
        %v1329 = vpop.f32.mrf.mxu0
        %v1330 = vadd.f32 %v1031, %v1329
        %v1331 = vpop.f32.mrf.mxu0
        %v1332 = vpop.f32.mrf.mxu0
        %v1333 = vadd.f32 %v1034, %v1332
        %v1334 = vpop.f32.mrf.mxu0
        %1335 = vmatprep.mubr.bf16.mxu0 0
        %1336 = vmatmul.mubr.bf16.gmra.mxu0 %v1174
        %v1337 = vpop.f32.mrf.mxu0
        %v1338 = vadd.f32 %v1039, %v1337
        %v1339 = vpop.f32.mrf.mxu0
        %v1340 = vpop.f32.mrf.mxu0
        %v1341 = vadd.f32 %v1042, %v1340
        %v1342 = vpop.f32.mrf.mxu0
        %1343 = vmatprep.mubr.bf16.mxu0 0
        %1344 = vmatmul.mubr.bf16.gmra.mxu0 %v1175
        %v1345 = vpop.f32.mrf.mxu0
        %v1346 = vadd.f32 %v1047, %v1345
        %v1347 = vpop.f32.mrf.mxu0
        %v1348 = vpop.f32.mrf.mxu0
        %v1349 = vadd.f32 %v1050, %v1348
        %v1350 = vpop.f32.mrf.mxu0
        %1351 = vmatprep.mubr.bf16.mxu0 0
        %1352 = vmatmul.mubr.bf16.gmra.mxu0 %v1176
        %v1353 = vpop.f32.mrf.mxu0
        %v1354 = vadd.f32 %v1055, %v1353
        %v1355 = vpop.f32.mrf.mxu0
        %v1356 = vpop.f32.mrf.mxu0
        %v1357 = vadd.f32 %v1058, %v1356
        %v1358 = vpop.f32.mrf.mxu0
        %1359 = vmatprep.mubr.bf16.mxu0 0
        %1360 = vmatmul.mubr.bf16.gmra.mxu0 %v1177
        %v1361 = vpop.f32.mrf.mxu0
        %v1362 = vadd.f32 %v1063, %v1361
        %v1363 = vpop.f32.mrf.mxu0
        %v1364 = vpop.f32.mrf.mxu0
        %v1365 = vadd.f32 %v1066, %v1364
        %v1366 = vpop.f32.mrf.mxu0
        %1367 = vmatprep.mubr.bf16.mxu0 0
        %1368 = vmatmul.mubr.bf16.gmra.mxu0 %v1178
        %v1369 = vpop.f32.mrf.mxu0
        %v1370 = vadd.f32 %v1071, %v1369
        %v1371 = vpop.f32.mrf.mxu0
        %v1372 = vpop.f32.mrf.mxu0
        %v1373 = vadd.f32 %v1074, %v1372
        %v1374 = vpop.f32.mrf.mxu0
        %1375 = vmatprep.mubr.bf16.mxu0 0
        %1376 = vmatmul.mubr.bf16.gmra.mxu0 %v1179
        %v1377 = vpop.f32.mrf.mxu0
        %v1378 = vadd.f32 %v1079, %v1377
        %v1379 = vpop.f32.mrf.mxu0
        %v1380 = vpop.f32.mrf.mxu0
        %v1381 = vadd.f32 %v1082, %v1380
        %v1382 = vpop.f32.mrf.mxu0
        %1383 = vmatprep.mubr.bf16.mxu0 0
        %1384 = vmatmul.mubr.bf16.gmra.mxu0 %v1180
        %v1385 = vpop.f32.mrf.mxu0
        %v1386 = vadd.f32 %v1087, %v1385
        %v1387 = vpop.f32.mrf.mxu0
        %v1388 = vpop.f32.mrf.mxu0
        %v1389 = vadd.f32 %v1090, %v1388
        %v1390 = vpop.f32.mrf.mxu0
        %1391 = vmatprep.mubr.bf16.mxu0 0
        %1392 = vmatmul.mubr.bf16.gmra.mxu0 %v1181
        %v1393 = vpop.f32.mrf.mxu0
        %v1394 = vadd.f32 %v1095, %v1393
        %v1395 = vpop.f32.mrf.mxu0
        %v1396 = vpop.f32.mrf.mxu0
        %v1397 = vadd.f32 %v1098, %v1396
        %v1398 = vpop.f32.mrf.mxu0
        %1399 = vmatprep.mubr.bf16.mxu0 0
        %1400 = vmatmul.mubr.bf16.gmra.mxu0 %v1182
        %v1401 = vpop.f32.mrf.mxu0
        %v1402 = vadd.f32 %v1103, %v1401
        %v1403 = vpop.f32.mrf.mxu0
        %v1404 = vpop.f32.mrf.mxu0
        %v1405 = vadd.f32 %v1106, %v1404
        %v1406 = vpop.f32.mrf.mxu0
        %1407 = vdwg.mxu0
        %s1408 = sadd.s32 %s770, 2
        %s1409 = smul.u32 %s1408, 16
        %s1410 = smul.addr %s1409, 4
        %s1411 = scalar_lea.vmem [#allocation2], %s1410
        %v1412 = vld [vmem:[%s1411] sm:$0xf]
        %v1413 = vld [vmem:[%s1411 + $0x4] sm:$0xf]
        %v1414 = vld [vmem:[%s1411 + $0x8] sm:$0xf]
        %v1415 = vld [vmem:[%s1411 + $0xc] sm:$0xf]
        %v1416 = vld [vmem:[%s1411 + $0x10] sm:$0xf]
        %v1417 = vld [vmem:[%s1411 + $0x14] sm:$0xf]
        %v1418 = vld [vmem:[%s1411 + $0x18] sm:$0xf]
        %v1419 = vld [vmem:[%s1411 + $0x1c] sm:$0xf]
        %v1420 = vld [vmem:[%s1411 + $0x20] sm:$0xf]
        %v1421 = vld [vmem:[%s1411 + $0x24] sm:$0xf]
        %v1422 = vld [vmem:[%s1411 + $0x28] sm:$0xf]
        %v1423 = vld [vmem:[%s1411 + $0x2c] sm:$0xf]
        %v1424 = vld [vmem:[%s1411 + $0x30] sm:$0xf]
        %v1425 = vld [vmem:[%s1411 + $0x34] sm:$0xf]
        %v1426 = vld [vmem:[%s1411 + $0x38] sm:$0xf]
        %v1427 = vld [vmem:[%s1411 + $0x3c] sm:$0xf]
        %v1457 = vunpack.c.l.b16 %v741
        %v1458 = vunpack.c.l.b16 %v742
        %v1459 = vunpack.c.l.b16 %v743
        %v1460 = vunpack.c.l.b16 %v744
        %v1461 = vunpack.c.l.b16 %v745
        %v1462 = vunpack.c.l.b16 %v746
        %v1463 = vunpack.c.l.b16 %v747
        %v1464 = vunpack.c.l.b16 %v748
        %v1465 = vunpack.c.l.b16 %v749
        %v1466 = vunpack.c.l.b16 %v750
        %v1467 = vunpack.c.l.b16 %v751
        %v1468 = vunpack.c.l.b16 %v752
        %v1469 = vunpack.c.l.b16 %v753
        %v1470 = vunpack.c.l.b16 %v754
        %v1471 = vunpack.c.l.b16 %v755
        %v1472 = vunpack.c.l.b16 %v756
        %v1473 = vunpack.c.l.b16 %v757
        %v1474 = vunpack.c.l.b16 %v758
        %v1475 = vunpack.c.l.b16 %v759
        %v1476 = vunpack.c.l.b16 %v760
        %v1477 = vunpack.c.l.b16 %v761
        %v1478 = vunpack.c.l.b16 %v762
        %v1479 = vunpack.c.l.b16 %v763
        %v1480 = vunpack.c.l.b16 %v764
        %v1481 = vunpack.c.l.b16 %v765
        %v1482 = vunpack.c.l.b16 %v766
        %v1483 = vunpack.c.l.b16 %v767
        %v1484 = vunpack.c.l.b16 %v768
        %v1485 = vunpack.c.l.b16 %v769
        %v1486 = vpack.c.b16 %v1458, %v1457
        %v1487 = vpack.c.b16 %v1460, %v1459
        %v1488 = vpack.c.b16 %v1462, %v1461
        %v1489 = vpack.c.b16 %v1464, %v1463
        %v1490 = vpack.c.b16 %v1465, %v1457
        %v1491 = vpack.c.b16 %v1467, %v1466
        %v1492 = vpack.c.b16 %v1469, %v1468
        %v1493 = vpack.c.b16 %v1471, %v1470
        %v1494 = vpack.c.b16 %v1472, %v1457
        %v1495 = vpack.c.b16 %v1474, %v1473
        %v1496 = vpack.c.b16 %v1476, %v1475
        %v1497 = vpack.c.b16 %v1478, %v1477
        %v1498 = vpack.c.b16 %v1479, %v1457
        %v1499 = vpack.c.b16 %v1481, %v1480
        %v1500 = vpack.c.b16 %v1483, %v1482
        %v1501 = vpack.c.b16 %v1485, %v1484
        %v1534 = vunpack.c.l.b16 %v1412
        %v1535 = vunpack.c.l.b16 %v1413
        %v1536 = vunpack.c.l.b16 %v1414
        %v1537 = vunpack.c.l.b16 %v1415
        %v1538 = vunpack.c.l.b16 %v1416
        %v1539 = vunpack.c.l.b16 %v1417
        %v1540 = vunpack.c.l.b16 %v1418
        %v1541 = vunpack.c.l.b16 %v1419
        %v1542 = vunpack.c.l.b16 %v1420
        %v1543 = vunpack.c.l.b16 %v1421
        %v1544 = vunpack.c.l.b16 %v1422
        %v1545 = vunpack.c.l.b16 %v1423
        %v1546 = vunpack.c.l.b16 %v1424
        %v1547 = vunpack.c.l.b16 %v1425
        %v1548 = vunpack.c.l.b16 %v1426
        %v1549 = vunpack.c.l.b16 %v1427
        %v1550 = vpack.c.b16 %v1535, %v1534
        %v1551 = vpack.c.b16 %v1537, %v1536
        %v1552 = vpack.c.b16 %v1539, %v1538
        %v1553 = vpack.c.b16 %v1541, %v1540
        %v1554 = vpack.c.b16 %v1543, %v1542
        %v1555 = vpack.c.b16 %v1545, %v1544
        %v1556 = vpack.c.b16 %v1547, %v1546
        %v1557 = vpack.c.b16 %v1549, %v1548
        %1566 = vmatprep.subr.bf16.mxu0 0
        %1567 = vmatpush1.bf16.msra.mxu0 %v1557
        %1568 = vmatprep.subr.bf16.mxu0 0
        %1569 = vmatpush1.bf16.msra.mxu0 %v1556
        %1570 = vmatprep.subr.bf16.mxu0 0
        %1571 = vmatpush1.bf16.msra.mxu0 %v1555
        %1572 = vmatprep.subr.bf16.mxu0 0
        %1573 = vmatpush1.bf16.msra.mxu0 %v1554
        %1574 = vmatprep.subr.bf16.mxu0 0
        %1575 = vmatpush1.bf16.msra.mxu0 %v1553
        %1576 = vmatprep.subr.bf16.mxu0 0
        %1577 = vmatpush1.bf16.msra.mxu0 %v1552
        %1578 = vmatprep.subr.bf16.mxu0 0
        %1579 = vmatpush1.bf16.msra.mxu0 %v1551
        %1580 = vmatprep.subr.bf16.mxu0 0
        %1581 = vmatpush1.bf16.msra.mxu0 %v1550
        %1582 = vmatprep.subr.bf16.mxu0 0
        %1583 = vmatpush2.bf16.msra.mxu0 0
        %1584 = vmatprep.subr.bf16.mxu0 0
        %1585 = vmatpush2.bf16.msra.mxu0 0
        %1586 = vmatprep.subr.bf16.mxu0 0
        %1587 = vmatpush2.bf16.msra.mxu0 0
        %1588 = vmatprep.subr.bf16.mxu0 0
        %1589 = vmatpush2.bf16.msra.mxu0 0
        %1590 = vmatprep.subr.bf16.mxu0 0
        %1591 = vmatpush2.bf16.msra.mxu0 0
        %1592 = vmatprep.subr.bf16.mxu0 0
        %1593 = vmatpush2.bf16.msra.mxu0 0
        %1594 = vmatprep.subr.bf16.mxu0 0
        %1595 = vmatpush2.bf16.msra.mxu0 0
        %1596 = vmatprep.subr.bf16.mxu0 0
        %1597 = vmatpush2.bf16.msra.mxu0 0
        %1598 = vmatprep.mubr.bf16.mxu0 0
        %1599 = vmatmul.mubr.bf16.gmra.mxu0 %v1486
        %v1600 = vpop.f32.mrf.mxu0
        %v1601 = vadd.f32 0.0, %v1600
        %v1602 = vpop.f32.mrf.mxu0
        %v1603 = vpop.f32.mrf.mxu0
        %v1604 = vadd.f32 0.0, %v1603
        %v1605 = vpop.f32.mrf.mxu0
        %1606 = vmatprep.mubr.bf16.mxu0 0
        %1607 = vmatmul.mubr.bf16.gmra.mxu0 %v1487
        %v1608 = vpop.f32.mrf.mxu0
        %v1609 = vadd.f32 0.0, %v1608
        %v1610 = vpop.f32.mrf.mxu0
        %v1611 = vpop.f32.mrf.mxu0
        %v1612 = vadd.f32 0.0, %v1611
        %v1613 = vpop.f32.mrf.mxu0
        %1614 = vmatprep.mubr.bf16.mxu0 0
        %1615 = vmatmul.mubr.bf16.gmra.mxu0 %v1488
        %v1616 = vpop.f32.mrf.mxu0
        %v1617 = vadd.f32 0.0, %v1616
        %v1618 = vpop.f32.mrf.mxu0
        %v1619 = vpop.f32.mrf.mxu0
        %v1620 = vadd.f32 0.0, %v1619
        %v1621 = vpop.f32.mrf.mxu0
        %1622 = vmatprep.mubr.bf16.mxu0 0
        %1623 = vmatmul.mubr.bf16.gmra.mxu0 %v1489
        %v1624 = vpop.f32.mrf.mxu0
        %v1625 = vadd.f32 0.0, %v1624
        %v1626 = vpop.f32.mrf.mxu0
        %v1627 = vpop.f32.mrf.mxu0
        %v1628 = vadd.f32 0.0, %v1627
        %v1629 = vpop.f32.mrf.mxu0
        %1630 = vmatprep.mubr.bf16.mxu0 0
        %1631 = vmatmul.mubr.bf16.gmra.mxu0 %v1490
        %v1632 = vpop.f32.mrf.mxu0
        %v1633 = vadd.f32 0.0, %v1632
        %v1634 = vpop.f32.mrf.mxu0
        %v1635 = vpop.f32.mrf.mxu0
        %v1636 = vadd.f32 0.0, %v1635
        %v1637 = vpop.f32.mrf.mxu0
        %1638 = vmatprep.mubr.bf16.mxu0 0
        %1639 = vmatmul.mubr.bf16.gmra.mxu0 %v1491
        %v1640 = vpop.f32.mrf.mxu0
        %v1641 = vadd.f32 0.0, %v1640
        %v1642 = vpop.f32.mrf.mxu0
        %v1643 = vpop.f32.mrf.mxu0
        %v1644 = vadd.f32 0.0, %v1643
        %v1645 = vpop.f32.mrf.mxu0
        %1646 = vmatprep.mubr.bf16.mxu0 0
        %1647 = vmatmul.mubr.bf16.gmra.mxu0 %v1492
        %v1648 = vpop.f32.mrf.mxu0
        %v1649 = vadd.f32 0.0, %v1648
        %v1650 = vpop.f32.mrf.mxu0
        %v1651 = vpop.f32.mrf.mxu0
        %v1652 = vadd.f32 0.0, %v1651
        %v1653 = vpop.f32.mrf.mxu0
        %1654 = vmatprep.mubr.bf16.mxu0 0
        %1655 = vmatmul.mubr.bf16.gmra.mxu0 %v1493
        %v1656 = vpop.f32.mrf.mxu0
        %v1657 = vadd.f32 0.0, %v1656
        %v1658 = vpop.f32.mrf.mxu0
        %v1659 = vpop.f32.mrf.mxu0
        %v1660 = vadd.f32 0.0, %v1659
        %v1661 = vpop.f32.mrf.mxu0
        %1662 = vmatprep.mubr.bf16.mxu0 0
        %1663 = vmatmul.mubr.bf16.gmra.mxu0 %v1494
        %v1664 = vpop.f32.mrf.mxu0
        %v1665 = vadd.f32 0.0, %v1664
        %v1666 = vpop.f32.mrf.mxu0
        %v1667 = vpop.f32.mrf.mxu0
        %v1668 = vadd.f32 0.0, %v1667
        %v1669 = vpop.f32.mrf.mxu0
        %1670 = vmatprep.mubr.bf16.mxu0 0
        %1671 = vmatmul.mubr.bf16.gmra.mxu0 %v1495
        %v1672 = vpop.f32.mrf.mxu0
        %v1673 = vadd.f32 0.0, %v1672
        %v1674 = vpop.f32.mrf.mxu0
        %v1675 = vpop.f32.mrf.mxu0
        %v1676 = vadd.f32 0.0, %v1675
        %v1677 = vpop.f32.mrf.mxu0
        %1678 = vmatprep.mubr.bf16.mxu0 0
        %1679 = vmatmul.mubr.bf16.gmra.mxu0 %v1496
        %v1680 = vpop.f32.mrf.mxu0
        %v1681 = vadd.f32 0.0, %v1680
        %v1682 = vpop.f32.mrf.mxu0
        %v1683 = vpop.f32.mrf.mxu0
        %v1684 = vadd.f32 0.0, %v1683
        %v1685 = vpop.f32.mrf.mxu0
        %1686 = vmatprep.mubr.bf16.mxu0 0
        %1687 = vmatmul.mubr.bf16.gmra.mxu0 %v1497
        %v1688 = vpop.f32.mrf.mxu0
        %v1689 = vadd.f32 0.0, %v1688
        %v1690 = vpop.f32.mrf.mxu0
        %v1691 = vpop.f32.mrf.mxu0
        %v1692 = vadd.f32 0.0, %v1691
        %v1693 = vpop.f32.mrf.mxu0
        %1694 = vmatprep.mubr.bf16.mxu0 0
        %1695 = vmatmul.mubr.bf16.gmra.mxu0 %v1498
        %v1696 = vpop.f32.mrf.mxu0
        %v1697 = vadd.f32 0.0, %v1696
        %v1698 = vpop.f32.mrf.mxu0
        %v1699 = vpop.f32.mrf.mxu0
        %v1700 = vadd.f32 0.0, %v1699
        %v1701 = vpop.f32.mrf.mxu0
        %1702 = vmatprep.mubr.bf16.mxu0 0
        %1703 = vmatmul.mubr.bf16.gmra.mxu0 %v1499
        %v1704 = vpop.f32.mrf.mxu0
        %v1705 = vadd.f32 0.0, %v1704
        %v1706 = vpop.f32.mrf.mxu0
        %v1707 = vpop.f32.mrf.mxu0
        %v1708 = vadd.f32 0.0, %v1707
        %v1709 = vpop.f32.mrf.mxu0
        %1710 = vmatprep.mubr.bf16.mxu0 0
        %1711 = vmatmul.mubr.bf16.gmra.mxu0 %v1500
        %v1712 = vpop.f32.mrf.mxu0
        %v1713 = vadd.f32 0.0, %v1712
        %v1714 = vpop.f32.mrf.mxu0
        %v1715 = vpop.f32.mrf.mxu0
        %v1716 = vadd.f32 0.0, %v1715
        %v1717 = vpop.f32.mrf.mxu0
        %1718 = vmatprep.mubr.bf16.mxu0 0
        %1719 = vmatmul.mubr.bf16.gmra.mxu0 %v1501
        %v1720 = vpop.f32.mrf.mxu0
        %v1721 = vadd.f32 0.0, %v1720
        %v1722 = vpop.f32.mrf.mxu0
        %v1723 = vpop.f32.mrf.mxu0
        %v1724 = vadd.f32 0.0, %v1723
        %v1725 = vpop.f32.mrf.mxu0
        %1726 = vdwg.mxu0
        %v1727 = vadd.f32 %v1282, %v1601
        %v1728 = vadd.f32 %v1285, %v1604
        %v1729 = vadd.f32 %v1290, %v1609
        %v1730 = vadd.f32 %v1293, %v1612
        %v1731 = vadd.f32 %v1298, %v1617
        %v1732 = vadd.f32 %v1301, %v1620
        %v1733 = vadd.f32 %v1306, %v1625
        %v1734 = vadd.f32 %v1309, %v1628
        %v1735 = vadd.f32 %v1314, %v1633
        %v1736 = vadd.f32 %v1317, %v1636
        %v1737 = vadd.f32 %v1322, %v1641
        %v1738 = vadd.f32 %v1325, %v1644
        %v1739 = vadd.f32 %v1330, %v1649
        %v1740 = vadd.f32 %v1333, %v1652
        %v1741 = vadd.f32 %v1338, %v1657
        %v1742 = vadd.f32 %v1341, %v1660
        %v1743 = vadd.f32 %v1346, %v1665
        %v1744 = vadd.f32 %v1349, %v1668
        %v1745 = vadd.f32 %v1354, %v1673
        %v1746 = vadd.f32 %v1357, %v1676
        %v1747 = vadd.f32 %v1362, %v1681
        %v1748 = vadd.f32 %v1365, %v1684
        %v1749 = vadd.f32 %v1370, %v1689
        %v1750 = vadd.f32 %v1373, %v1692
        %v1751 = vadd.f32 %v1378, %v1697
        %v1752 = vadd.f32 %v1381, %v1700
        %v1753 = vadd.f32 %v1386, %v1705
        %v1754 = vadd.f32 %v1389, %v1708
        %v1755 = vadd.f32 %v1394, %v1713
        %v1756 = vadd.f32 %v1397, %v1716
        %v1757 = vadd.f32 %v1402, %v1721
        %v1758 = vadd.f32 %v1405, %v1724
        %v1760 = vshrl.u32 %v362, 16
        %v1762 = vrot.slane %v1760, 7
        %v1763 = vshll.u32 %v362, 16
        %v1765 = vor.u32 %v1762, %v1763
        %v1767 = vshrl.u32 %v370, 16
        %v1769 = vrot.slane %v1767, 7
        %v1770 = vshll.u32 %v370, 16
        %v1772 = vor.u32 %v1769, %v1770
        %v1774 = vshrl.u32 %v378, 16
        %v1776 = vrot.slane %v1774, 7
        %v1777 = vshll.u32 %v378, 16
        %v1779 = vor.u32 %v1776, %v1777
        %v1781 = vshrl.u32 %v386, 16
        %v1783 = vrot.slane %v1781, 7
        %v1784 = vshll.u32 %v386, 16
        %v1786 = vor.u32 %v1783, %v1784
        %v1791 = vsel %vm621, 0, %v1765
        %v1792 = vsel %vm621, 0, %v1772
        %v1793 = vsel %vm621, 0, %v1779
        %v1794 = vsel %vm621, 0, %v1786
        %v1795 = vrot.slane %v1763, 1
        %v1796 = vor.u32 %v1760, %v1795
        %v1797 = vrot.slane %v1770, 1
        %v1798 = vor.u32 %v1767, %v1797
        %v1799 = vrot.slane %v1777, 1
        %v1800 = vor.u32 %v1774, %v1799
        %v1801 = vrot.slane %v1784, 1
        %v1802 = vor.u32 %v1781, %v1801
        %v1807 = vsel %vm740, %v1796, 0
        %v1808 = vsel %vm740, %v1798, 0
        %v1809 = vsel %vm740, %v1800, 0
        %v1810 = vsel %vm740, %v1802, 0
        %s1811 = sadd.s32 %s770, 3
        %s1812 = smul.u32 %s1811, 16
        %s1813 = smul.addr %s1812, 4
        %s1814 = scalar_lea.vmem [#allocation2], %s1813
        %v1815 = vld [vmem:[%s1814] sm:$0xf]
        %v1816 = vld [vmem:[%s1814 + $0x4] sm:$0xf]
        %v1817 = vld [vmem:[%s1814 + $0x8] sm:$0xf]
        %v1818 = vld [vmem:[%s1814 + $0xc] sm:$0xf]
        %v1819 = vld [vmem:[%s1814 + $0x10] sm:$0xf]
        %v1820 = vld [vmem:[%s1814 + $0x14] sm:$0xf]
        %v1821 = vld [vmem:[%s1814 + $0x18] sm:$0xf]
        %v1822 = vld [vmem:[%s1814 + $0x1c] sm:$0xf]
        %v1823 = vld [vmem:[%s1814 + $0x20] sm:$0xf]
        %v1824 = vld [vmem:[%s1814 + $0x24] sm:$0xf]
        %v1825 = vld [vmem:[%s1814 + $0x28] sm:$0xf]
        %v1826 = vld [vmem:[%s1814 + $0x2c] sm:$0xf]
        %v1827 = vld [vmem:[%s1814 + $0x30] sm:$0xf]
        %v1828 = vld [vmem:[%s1814 + $0x34] sm:$0xf]
        %v1829 = vld [vmem:[%s1814 + $0x38] sm:$0xf]
        %v1830 = vld [vmem:[%s1814 + $0x3c] sm:$0xf]
        %v1835 = vunpack.c.l.b16 %v1791
        %v1836 = vunpack.c.l.b16 %v1792
        %v1837 = vunpack.c.l.b16 %v1793
        %v1838 = vunpack.c.l.b16 %v1794
        %v1839 = vpack.c.b16 %v1140, %v1139
        %v1840 = vpack.c.b16 %v1142, %v1141
        %v1841 = vpack.c.b16 %v1144, %v1143
        %v1842 = vpack.c.b16 %v1835, %v1145
        %v1843 = vpack.c.b16 %v1147, %v1146
        %v1844 = vpack.c.b16 %v1149, %v1148
        %v1845 = vpack.c.b16 %v1151, %v1150
        %v1846 = vpack.c.b16 %v1836, %v1152
        %v1847 = vpack.c.b16 %v1154, %v1153
        %v1848 = vpack.c.b16 %v1156, %v1155
        %v1849 = vpack.c.b16 %v1158, %v1157
        %v1850 = vpack.c.b16 %v1837, %v1159
        %v1851 = vpack.c.b16 %v1161, %v1160
        %v1852 = vpack.c.b16 %v1163, %v1162
        %v1853 = vpack.c.b16 %v1165, %v1164
        %v1854 = vpack.c.b16 %v1838, %v1166
        %v1887 = vunpack.c.l.b16 %v1815
        %v1888 = vunpack.c.l.b16 %v1816
        %v1889 = vunpack.c.l.b16 %v1817
        %v1890 = vunpack.c.l.b16 %v1818
        %v1891 = vunpack.c.l.b16 %v1819
        %v1892 = vunpack.c.l.b16 %v1820
        %v1893 = vunpack.c.l.b16 %v1821
        %v1894 = vunpack.c.l.b16 %v1822
        %v1895 = vunpack.c.l.b16 %v1823
        %v1896 = vunpack.c.l.b16 %v1824
        %v1897 = vunpack.c.l.b16 %v1825
        %v1898 = vunpack.c.l.b16 %v1826
        %v1899 = vunpack.c.l.b16 %v1827
        %v1900 = vunpack.c.l.b16 %v1828
        %v1901 = vunpack.c.l.b16 %v1829
        %v1902 = vunpack.c.l.b16 %v1830
        %v1903 = vpack.c.b16 %v1888, %v1887
        %v1904 = vpack.c.b16 %v1890, %v1889
        %v1905 = vpack.c.b16 %v1892, %v1891
        %v1906 = vpack.c.b16 %v1894, %v1893
        %v1907 = vpack.c.b16 %v1896, %v1895
        %v1908 = vpack.c.b16 %v1898, %v1897
        %v1909 = vpack.c.b16 %v1900, %v1899
        %v1910 = vpack.c.b16 %v1902, %v1901
        %1919 = vmatprep.subr.bf16.mxu0 0
        %1920 = vmatpush1.bf16.msra.mxu0 %v1910
        %1921 = vmatprep.subr.bf16.mxu0 0
        %1922 = vmatpush1.bf16.msra.mxu0 %v1909
        %1923 = vmatprep.subr.bf16.mxu0 0
        %1924 = vmatpush1.bf16.msra.mxu0 %v1908
        %1925 = vmatprep.subr.bf16.mxu0 0
        %1926 = vmatpush1.bf16.msra.mxu0 %v1907
        %1927 = vmatprep.subr.bf16.mxu0 0
        %1928 = vmatpush1.bf16.msra.mxu0 %v1906
        %1929 = vmatprep.subr.bf16.mxu0 0
        %1930 = vmatpush1.bf16.msra.mxu0 %v1905
        %1931 = vmatprep.subr.bf16.mxu0 0
        %1932 = vmatpush1.bf16.msra.mxu0 %v1904
        %1933 = vmatprep.subr.bf16.mxu0 0
        %1934 = vmatpush1.bf16.msra.mxu0 %v1903
        %1935 = vmatprep.subr.bf16.mxu0 0
        %1936 = vmatpush2.bf16.msra.mxu0 0
        %1937 = vmatprep.subr.bf16.mxu0 0
        %1938 = vmatpush2.bf16.msra.mxu0 0
        %1939 = vmatprep.subr.bf16.mxu0 0
        %1940 = vmatpush2.bf16.msra.mxu0 0
        %1941 = vmatprep.subr.bf16.mxu0 0
        %1942 = vmatpush2.bf16.msra.mxu0 0
        %1943 = vmatprep.subr.bf16.mxu0 0
        %1944 = vmatpush2.bf16.msra.mxu0 0
        %1945 = vmatprep.subr.bf16.mxu0 0
        %1946 = vmatpush2.bf16.msra.mxu0 0
        %1947 = vmatprep.subr.bf16.mxu0 0
        %1948 = vmatpush2.bf16.msra.mxu0 0
        %1949 = vmatprep.subr.bf16.mxu0 0
        %1950 = vmatpush2.bf16.msra.mxu0 0
        %1951 = vmatprep.mubr.bf16.mxu0 0
        %1952 = vmatmul.mubr.bf16.gmra.mxu0 %v1839
        %v1953 = vpop.f32.mrf.mxu0
        %v1954 = vadd.f32 0.0, %v1953
        %v1955 = vpop.f32.mrf.mxu0
        %v1956 = vpop.f32.mrf.mxu0
        %v1957 = vadd.f32 0.0, %v1956
        %v1958 = vpop.f32.mrf.mxu0
        %1959 = vmatprep.mubr.bf16.mxu0 0
        %1960 = vmatmul.mubr.bf16.gmra.mxu0 %v1840
        %v1961 = vpop.f32.mrf.mxu0
        %v1962 = vadd.f32 0.0, %v1961
        %v1963 = vpop.f32.mrf.mxu0
        %v1964 = vpop.f32.mrf.mxu0
        %v1965 = vadd.f32 0.0, %v1964
        %v1966 = vpop.f32.mrf.mxu0
        %1967 = vmatprep.mubr.bf16.mxu0 0
        %1968 = vmatmul.mubr.bf16.gmra.mxu0 %v1841
        %v1969 = vpop.f32.mrf.mxu0
        %v1970 = vadd.f32 0.0, %v1969
        %v1971 = vpop.f32.mrf.mxu0
        %v1972 = vpop.f32.mrf.mxu0
        %v1973 = vadd.f32 0.0, %v1972
        %v1974 = vpop.f32.mrf.mxu0
        %1975 = vmatprep.mubr.bf16.mxu0 0
        %1976 = vmatmul.mubr.bf16.gmra.mxu0 %v1842
        %v1977 = vpop.f32.mrf.mxu0
        %v1978 = vadd.f32 0.0, %v1977
        %v1979 = vpop.f32.mrf.mxu0
        %v1980 = vpop.f32.mrf.mxu0
        %v1981 = vadd.f32 0.0, %v1980
        %v1982 = vpop.f32.mrf.mxu0
        %1983 = vmatprep.mubr.bf16.mxu0 0
        %1984 = vmatmul.mubr.bf16.gmra.mxu0 %v1843
        %v1985 = vpop.f32.mrf.mxu0
        %v1986 = vadd.f32 0.0, %v1985
        %v1987 = vpop.f32.mrf.mxu0
        %v1988 = vpop.f32.mrf.mxu0
        %v1989 = vadd.f32 0.0, %v1988
        %v1990 = vpop.f32.mrf.mxu0
        %1991 = vmatprep.mubr.bf16.mxu0 0
        %1992 = vmatmul.mubr.bf16.gmra.mxu0 %v1844
        %v1993 = vpop.f32.mrf.mxu0
        %v1994 = vadd.f32 0.0, %v1993
        %v1995 = vpop.f32.mrf.mxu0
        %v1996 = vpop.f32.mrf.mxu0
        %v1997 = vadd.f32 0.0, %v1996
        %v1998 = vpop.f32.mrf.mxu0
        %1999 = vmatprep.mubr.bf16.mxu0 0
        %2000 = vmatmul.mubr.bf16.gmra.mxu0 %v1845
        %v2001 = vpop.f32.mrf.mxu0
        %v2002 = vadd.f32 0.0, %v2001
        %v2003 = vpop.f32.mrf.mxu0
        %v2004 = vpop.f32.mrf.mxu0
        %v2005 = vadd.f32 0.0, %v2004
        %v2006 = vpop.f32.mrf.mxu0
        %2007 = vmatprep.mubr.bf16.mxu0 0
        %2008 = vmatmul.mubr.bf16.gmra.mxu0 %v1846
        %v2009 = vpop.f32.mrf.mxu0
        %v2010 = vadd.f32 0.0, %v2009
        %v2011 = vpop.f32.mrf.mxu0
        %v2012 = vpop.f32.mrf.mxu0
        %v2013 = vadd.f32 0.0, %v2012
        %v2014 = vpop.f32.mrf.mxu0
        %2015 = vmatprep.mubr.bf16.mxu0 0
        %2016 = vmatmul.mubr.bf16.gmra.mxu0 %v1847
        %v2017 = vpop.f32.mrf.mxu0
        %v2018 = vadd.f32 0.0, %v2017
        %v2019 = vpop.f32.mrf.mxu0
        %v2020 = vpop.f32.mrf.mxu0
        %v2021 = vadd.f32 0.0, %v2020
        %v2022 = vpop.f32.mrf.mxu0
        %2023 = vmatprep.mubr.bf16.mxu0 0
        %2024 = vmatmul.mubr.bf16.gmra.mxu0 %v1848
        %v2025 = vpop.f32.mrf.mxu0
        %v2026 = vadd.f32 0.0, %v2025
        %v2027 = vpop.f32.mrf.mxu0
        %v2028 = vpop.f32.mrf.mxu0
        %v2029 = vadd.f32 0.0, %v2028
        %v2030 = vpop.f32.mrf.mxu0
        %2031 = vmatprep.mubr.bf16.mxu0 0
        %2032 = vmatmul.mubr.bf16.gmra.mxu0 %v1849
        %v2033 = vpop.f32.mrf.mxu0
        %v2034 = vadd.f32 0.0, %v2033
        %v2035 = vpop.f32.mrf.mxu0
        %v2036 = vpop.f32.mrf.mxu0
        %v2037 = vadd.f32 0.0, %v2036
        %v2038 = vpop.f32.mrf.mxu0
        %2039 = vmatprep.mubr.bf16.mxu0 0
        %2040 = vmatmul.mubr.bf16.gmra.mxu0 %v1850
        %v2041 = vpop.f32.mrf.mxu0
        %v2042 = vadd.f32 0.0, %v2041
        %v2043 = vpop.f32.mrf.mxu0
        %v2044 = vpop.f32.mrf.mxu0
        %v2045 = vadd.f32 0.0, %v2044
        %v2046 = vpop.f32.mrf.mxu0
        %2047 = vmatprep.mubr.bf16.mxu0 0
        %2048 = vmatmul.mubr.bf16.gmra.mxu0 %v1851
        %v2049 = vpop.f32.mrf.mxu0
        %v2050 = vadd.f32 0.0, %v2049
        %v2051 = vpop.f32.mrf.mxu0
        %v2052 = vpop.f32.mrf.mxu0
        %v2053 = vadd.f32 0.0, %v2052
        %v2054 = vpop.f32.mrf.mxu0
        %2055 = vmatprep.mubr.bf16.mxu0 0
        %2056 = vmatmul.mubr.bf16.gmra.mxu0 %v1852
        %v2057 = vpop.f32.mrf.mxu0
        %v2058 = vadd.f32 0.0, %v2057
        %v2059 = vpop.f32.mrf.mxu0
        %v2060 = vpop.f32.mrf.mxu0
        %v2061 = vadd.f32 0.0, %v2060
        %v2062 = vpop.f32.mrf.mxu0
        %2063 = vmatprep.mubr.bf16.mxu0 0
        %2064 = vmatmul.mubr.bf16.gmra.mxu0 %v1853
        %v2065 = vpop.f32.mrf.mxu0
        %v2066 = vadd.f32 0.0, %v2065
        %v2067 = vpop.f32.mrf.mxu0
        %v2068 = vpop.f32.mrf.mxu0
        %v2069 = vadd.f32 0.0, %v2068
        %v2070 = vpop.f32.mrf.mxu0
        %2071 = vmatprep.mubr.bf16.mxu0 0
        %2072 = vmatmul.mubr.bf16.gmra.mxu0 %v1854
        %v2073 = vpop.f32.mrf.mxu0
        %v2074 = vadd.f32 0.0, %v2073
        %v2075 = vpop.f32.mrf.mxu0
        %v2076 = vpop.f32.mrf.mxu0
        %v2077 = vadd.f32 0.0, %v2076
        %v2078 = vpop.f32.mrf.mxu0
        %2079 = vdwg.mxu0
        %v2080 = vadd.f32 %v1727, %v1954
        %v2081 = vadd.f32 %v1728, %v1957
        %v2082 = vadd.f32 %v1729, %v1962
        %v2083 = vadd.f32 %v1730, %v1965
        %v2084 = vadd.f32 %v1731, %v1970
        %v2085 = vadd.f32 %v1732, %v1973
        %v2086 = vadd.f32 %v1733, %v1978
        %v2087 = vadd.f32 %v1734, %v1981
        %v2088 = vadd.f32 %v1735, %v1986
        %v2089 = vadd.f32 %v1736, %v1989
        %v2090 = vadd.f32 %v1737, %v1994
        %v2091 = vadd.f32 %v1738, %v1997
        %v2092 = vadd.f32 %v1739, %v2002
        %v2093 = vadd.f32 %v1740, %v2005
        %v2094 = vadd.f32 %v1741, %v2010
        %v2095 = vadd.f32 %v1742, %v2013
        %v2096 = vadd.f32 %v1743, %v2018
        %v2097 = vadd.f32 %v1744, %v2021
        %v2098 = vadd.f32 %v1745, %v2026
        %v2099 = vadd.f32 %v1746, %v2029
        %v2100 = vadd.f32 %v1747, %v2034
        %v2101 = vadd.f32 %v1748, %v2037
        %v2102 = vadd.f32 %v1749, %v2042
        %v2103 = vadd.f32 %v1750, %v2045
        %v2104 = vadd.f32 %v1751, %v2050
        %v2105 = vadd.f32 %v1752, %v2053
        %v2106 = vadd.f32 %v1753, %v2058
        %v2107 = vadd.f32 %v1754, %v2061
        %v2108 = vadd.f32 %v1755, %v2066
        %v2109 = vadd.f32 %v1756, %v2069
        %v2110 = vadd.f32 %v1757, %v2074
        %v2111 = vadd.f32 %v1758, %v2077
        %s2112 = sadd.s32 %s770, 4
        %s2113 = smul.u32 %s2112, 16
        %s2114 = smul.addr %s2113, 4
        %s2115 = scalar_lea.vmem [#allocation2], %s2114
        %v2116 = vld [vmem:[%s2115] sm:$0xf]
        %v2117 = vld [vmem:[%s2115 + $0x4] sm:$0xf]
        %v2118 = vld [vmem:[%s2115 + $0x8] sm:$0xf]
        %v2119 = vld [vmem:[%s2115 + $0xc] sm:$0xf]
        %v2120 = vld [vmem:[%s2115 + $0x10] sm:$0xf]
        %v2121 = vld [vmem:[%s2115 + $0x14] sm:$0xf]
        %v2122 = vld [vmem:[%s2115 + $0x18] sm:$0xf]
        %v2123 = vld [vmem:[%s2115 + $0x1c] sm:$0xf]
        %v2124 = vld [vmem:[%s2115 + $0x20] sm:$0xf]
        %v2125 = vld [vmem:[%s2115 + $0x24] sm:$0xf]
        %v2126 = vld [vmem:[%s2115 + $0x28] sm:$0xf]
        %v2127 = vld [vmem:[%s2115 + $0x2c] sm:$0xf]
        %v2128 = vld [vmem:[%s2115 + $0x30] sm:$0xf]
        %v2129 = vld [vmem:[%s2115 + $0x34] sm:$0xf]
        %v2130 = vld [vmem:[%s2115 + $0x38] sm:$0xf]
        %v2131 = vld [vmem:[%s2115 + $0x3c] sm:$0xf]
        %v2136 = vunpack.c.l.b16 %v362
        %v2137 = vunpack.c.l.b16 %v370
        %v2138 = vunpack.c.l.b16 %v378
        %v2139 = vunpack.c.l.b16 %v386
        %v2140 = vpack.c.b16 %v841, %v840
        %v2141 = vpack.c.b16 %v843, %v842
        %v2142 = vpack.c.b16 %v845, %v844
        %v2143 = vpack.c.b16 %v2136, %v846
        %v2144 = vpack.c.b16 %v848, %v847
        %v2145 = vpack.c.b16 %v850, %v849
        %v2146 = vpack.c.b16 %v852, %v851
        %v2147 = vpack.c.b16 %v2137, %v853
        %v2148 = vpack.c.b16 %v855, %v854
        %v2149 = vpack.c.b16 %v857, %v856
        %v2150 = vpack.c.b16 %v859, %v858
        %v2151 = vpack.c.b16 %v2138, %v860
        %v2152 = vpack.c.b16 %v862, %v861
        %v2153 = vpack.c.b16 %v864, %v863
        %v2154 = vpack.c.b16 %v866, %v865
        %v2155 = vpack.c.b16 %v2139, %v867
        %v2188 = vunpack.c.l.b16 %v2116
        %v2189 = vunpack.c.l.b16 %v2117
        %v2190 = vunpack.c.l.b16 %v2118
        %v2191 = vunpack.c.l.b16 %v2119
        %v2192 = vunpack.c.l.b16 %v2120
        %v2193 = vunpack.c.l.b16 %v2121
        %v2194 = vunpack.c.l.b16 %v2122
        %v2195 = vunpack.c.l.b16 %v2123
        %v2196 = vunpack.c.l.b16 %v2124
        %v2197 = vunpack.c.l.b16 %v2125
        %v2198 = vunpack.c.l.b16 %v2126
        %v2199 = vunpack.c.l.b16 %v2127
        %v2200 = vunpack.c.l.b16 %v2128
        %v2201 = vunpack.c.l.b16 %v2129
        %v2202 = vunpack.c.l.b16 %v2130
        %v2203 = vunpack.c.l.b16 %v2131
        %v2204 = vpack.c.b16 %v2189, %v2188
        %v2205 = vpack.c.b16 %v2191, %v2190
        %v2206 = vpack.c.b16 %v2193, %v2192
        %v2207 = vpack.c.b16 %v2195, %v2194
        %v2208 = vpack.c.b16 %v2197, %v2196
        %v2209 = vpack.c.b16 %v2199, %v2198
        %v2210 = vpack.c.b16 %v2201, %v2200
        %v2211 = vpack.c.b16 %v2203, %v2202
        %2220 = vmatprep.subr.bf16.mxu0 0
        %2221 = vmatpush1.bf16.msra.mxu0 %v2211
        %2222 = vmatprep.subr.bf16.mxu0 0
        %2223 = vmatpush1.bf16.msra.mxu0 %v2210
        %2224 = vmatprep.subr.bf16.mxu0 0
        %2225 = vmatpush1.bf16.msra.mxu0 %v2209
        %2226 = vmatprep.subr.bf16.mxu0 0
        %2227 = vmatpush1.bf16.msra.mxu0 %v2208
        %2228 = vmatprep.subr.bf16.mxu0 0
        %2229 = vmatpush1.bf16.msra.mxu0 %v2207
        %2230 = vmatprep.subr.bf16.mxu0 0
        %2231 = vmatpush1.bf16.msra.mxu0 %v2206
        %2232 = vmatprep.subr.bf16.mxu0 0
        %2233 = vmatpush1.bf16.msra.mxu0 %v2205
        %2234 = vmatprep.subr.bf16.mxu0 0
        %2235 = vmatpush1.bf16.msra.mxu0 %v2204
        %2236 = vmatprep.subr.bf16.mxu0 0
        %2237 = vmatpush2.bf16.msra.mxu0 0
        %2238 = vmatprep.subr.bf16.mxu0 0
        %2239 = vmatpush2.bf16.msra.mxu0 0
        %2240 = vmatprep.subr.bf16.mxu0 0
        %2241 = vmatpush2.bf16.msra.mxu0 0
        %2242 = vmatprep.subr.bf16.mxu0 0
        %2243 = vmatpush2.bf16.msra.mxu0 0
        %2244 = vmatprep.subr.bf16.mxu0 0
        %2245 = vmatpush2.bf16.msra.mxu0 0
        %2246 = vmatprep.subr.bf16.mxu0 0
        %2247 = vmatpush2.bf16.msra.mxu0 0
        %2248 = vmatprep.subr.bf16.mxu0 0
        %2249 = vmatpush2.bf16.msra.mxu0 0
        %2250 = vmatprep.subr.bf16.mxu0 0
        %2251 = vmatpush2.bf16.msra.mxu0 0
        %2252 = vmatprep.mubr.bf16.mxu0 0
        %2253 = vmatmul.mubr.bf16.gmra.mxu0 %v2140
        %v2254 = vpop.f32.mrf.mxu0
        %v2255 = vadd.f32 0.0, %v2254
        %v2256 = vpop.f32.mrf.mxu0
        %v2257 = vpop.f32.mrf.mxu0
        %v2258 = vadd.f32 0.0, %v2257
        %v2259 = vpop.f32.mrf.mxu0
        %2260 = vmatprep.mubr.bf16.mxu0 0
        %2261 = vmatmul.mubr.bf16.gmra.mxu0 %v2141
        %v2262 = vpop.f32.mrf.mxu0
        %v2263 = vadd.f32 0.0, %v2262
        %v2264 = vpop.f32.mrf.mxu0
        %v2265 = vpop.f32.mrf.mxu0
        %v2266 = vadd.f32 0.0, %v2265
        %v2267 = vpop.f32.mrf.mxu0
        %2268 = vmatprep.mubr.bf16.mxu0 0
        %2269 = vmatmul.mubr.bf16.gmra.mxu0 %v2142
        %v2270 = vpop.f32.mrf.mxu0
        %v2271 = vadd.f32 0.0, %v2270
        %v2272 = vpop.f32.mrf.mxu0
        %v2273 = vpop.f32.mrf.mxu0
        %v2274 = vadd.f32 0.0, %v2273
        %v2275 = vpop.f32.mrf.mxu0
        %2276 = vmatprep.mubr.bf16.mxu0 0
        %2277 = vmatmul.mubr.bf16.gmra.mxu0 %v2143
        %v2278 = vpop.f32.mrf.mxu0
        %v2279 = vadd.f32 0.0, %v2278
        %v2280 = vpop.f32.mrf.mxu0
        %v2281 = vpop.f32.mrf.mxu0
        %v2282 = vadd.f32 0.0, %v2281
        %v2283 = vpop.f32.mrf.mxu0
        %2284 = vmatprep.mubr.bf16.mxu0 0
        %2285 = vmatmul.mubr.bf16.gmra.mxu0 %v2144
        %v2286 = vpop.f32.mrf.mxu0
        %v2287 = vadd.f32 0.0, %v2286
        %v2288 = vpop.f32.mrf.mxu0
        %v2289 = vpop.f32.mrf.mxu0
        %v2290 = vadd.f32 0.0, %v2289
        %v2291 = vpop.f32.mrf.mxu0
        %2292 = vmatprep.mubr.bf16.mxu0 0
        %2293 = vmatmul.mubr.bf16.gmra.mxu0 %v2145
        %v2294 = vpop.f32.mrf.mxu0
        %v2295 = vadd.f32 0.0, %v2294
        %v2296 = vpop.f32.mrf.mxu0
        %v2297 = vpop.f32.mrf.mxu0
        %v2298 = vadd.f32 0.0, %v2297
        %v2299 = vpop.f32.mrf.mxu0
        %2300 = vmatprep.mubr.bf16.mxu0 0
        %2301 = vmatmul.mubr.bf16.gmra.mxu0 %v2146
        %v2302 = vpop.f32.mrf.mxu0
        %v2303 = vadd.f32 0.0, %v2302
        %v2304 = vpop.f32.mrf.mxu0
        %v2305 = vpop.f32.mrf.mxu0
        %v2306 = vadd.f32 0.0, %v2305
        %v2307 = vpop.f32.mrf.mxu0
        %2308 = vmatprep.mubr.bf16.mxu0 0
        %2309 = vmatmul.mubr.bf16.gmra.mxu0 %v2147
        %v2310 = vpop.f32.mrf.mxu0
        %v2311 = vadd.f32 0.0, %v2310
        %v2312 = vpop.f32.mrf.mxu0
        %v2313 = vpop.f32.mrf.mxu0
        %v2314 = vadd.f32 0.0, %v2313
        %v2315 = vpop.f32.mrf.mxu0
        %2316 = vmatprep.mubr.bf16.mxu0 0
        %2317 = vmatmul.mubr.bf16.gmra.mxu0 %v2148
        %v2318 = vpop.f32.mrf.mxu0
        %v2319 = vadd.f32 0.0, %v2318
        %v2320 = vpop.f32.mrf.mxu0
        %v2321 = vpop.f32.mrf.mxu0
        %v2322 = vadd.f32 0.0, %v2321
        %v2323 = vpop.f32.mrf.mxu0
        %2324 = vmatprep.mubr.bf16.mxu0 0
        %2325 = vmatmul.mubr.bf16.gmra.mxu0 %v2149
        %v2326 = vpop.f32.mrf.mxu0
        %v2327 = vadd.f32 0.0, %v2326
        %v2328 = vpop.f32.mrf.mxu0
        %v2329 = vpop.f32.mrf.mxu0
        %v2330 = vadd.f32 0.0, %v2329
        %v2331 = vpop.f32.mrf.mxu0
        %2332 = vmatprep.mubr.bf16.mxu0 0
        %2333 = vmatmul.mubr.bf16.gmra.mxu0 %v2150
        %v2334 = vpop.f32.mrf.mxu0
        %v2335 = vadd.f32 0.0, %v2334
        %v2336 = vpop.f32.mrf.mxu0
        %v2337 = vpop.f32.mrf.mxu0
        %v2338 = vadd.f32 0.0, %v2337
        %v2339 = vpop.f32.mrf.mxu0
        %2340 = vmatprep.mubr.bf16.mxu0 0
        %2341 = vmatmul.mubr.bf16.gmra.mxu0 %v2151
        %v2342 = vpop.f32.mrf.mxu0
        %v2343 = vadd.f32 0.0, %v2342
        %v2344 = vpop.f32.mrf.mxu0
        %v2345 = vpop.f32.mrf.mxu0
        %v2346 = vadd.f32 0.0, %v2345
        %v2347 = vpop.f32.mrf.mxu0
        %2348 = vmatprep.mubr.bf16.mxu0 0
        %2349 = vmatmul.mubr.bf16.gmra.mxu0 %v2152
        %v2350 = vpop.f32.mrf.mxu0
        %v2351 = vadd.f32 0.0, %v2350
        %v2352 = vpop.f32.mrf.mxu0
        %v2353 = vpop.f32.mrf.mxu0
        %v2354 = vadd.f32 0.0, %v2353
        %v2355 = vpop.f32.mrf.mxu0
        %2356 = vmatprep.mubr.bf16.mxu0 0
        %2357 = vmatmul.mubr.bf16.gmra.mxu0 %v2153
        %v2358 = vpop.f32.mrf.mxu0
        %v2359 = vadd.f32 0.0, %v2358
        %v2360 = vpop.f32.mrf.mxu0
        %v2361 = vpop.f32.mrf.mxu0
        %v2362 = vadd.f32 0.0, %v2361
        %v2363 = vpop.f32.mrf.mxu0
        %2364 = vmatprep.mubr.bf16.mxu0 0
        %2365 = vmatmul.mubr.bf16.gmra.mxu0 %v2154
        %v2366 = vpop.f32.mrf.mxu0
        %v2367 = vadd.f32 0.0, %v2366
        %v2368 = vpop.f32.mrf.mxu0
        %v2369 = vpop.f32.mrf.mxu0
        %v2370 = vadd.f32 0.0, %v2369
        %v2371 = vpop.f32.mrf.mxu0
        %2372 = vmatprep.mubr.bf16.mxu0 0
        %2373 = vmatmul.mubr.bf16.gmra.mxu0 %v2155
        %v2374 = vpop.f32.mrf.mxu0
        %v2375 = vadd.f32 0.0, %v2374
        %v2376 = vpop.f32.mrf.mxu0
        %v2377 = vpop.f32.mrf.mxu0
        %v2378 = vadd.f32 0.0, %v2377
        %v2379 = vpop.f32.mrf.mxu0
        %2380 = vdwg.mxu0
        %v2381 = vadd.f32 %v2080, %v2255
        %v2382 = vadd.f32 %v2081, %v2258
        %v2383 = vadd.f32 %v2082, %v2263
        %v2384 = vadd.f32 %v2083, %v2266
        %v2385 = vadd.f32 %v2084, %v2271
        %v2386 = vadd.f32 %v2085, %v2274
        %v2387 = vadd.f32 %v2086, %v2279
        %v2388 = vadd.f32 %v2087, %v2282
        %v2389 = vadd.f32 %v2088, %v2287
        %v2390 = vadd.f32 %v2089, %v2290
        %v2391 = vadd.f32 %v2090, %v2295
        %v2392 = vadd.f32 %v2091, %v2298
        %v2393 = vadd.f32 %v2092, %v2303
        %v2394 = vadd.f32 %v2093, %v2306
        %v2395 = vadd.f32 %v2094, %v2311
        %v2396 = vadd.f32 %v2095, %v2314
        %v2397 = vadd.f32 %v2096, %v2319
        %v2398 = vadd.f32 %v2097, %v2322
        %v2399 = vadd.f32 %v2098, %v2327
        %v2400 = vadd.f32 %v2099, %v2330
        %v2401 = vadd.f32 %v2100, %v2335
        %v2402 = vadd.f32 %v2101, %v2338
        %v2403 = vadd.f32 %v2102, %v2343
        %v2404 = vadd.f32 %v2103, %v2346
        %v2405 = vadd.f32 %v2104, %v2351
        %v2406 = vadd.f32 %v2105, %v2354
        %v2407 = vadd.f32 %v2106, %v2359
        %v2408 = vadd.f32 %v2107, %v2362
        %v2409 = vadd.f32 %v2108, %v2367
        %v2410 = vadd.f32 %v2109, %v2370
        %v2411 = vadd.f32 %v2110, %v2375
        %v2412 = vadd.f32 %v2111, %v2378
        %s2413 = sadd.s32 %s770, 5
        %s2414 = smul.u32 %s2413, 16
        %s2415 = smul.addr %s2414, 4
        %s2416 = scalar_lea.vmem [#allocation2], %s2415
        %v2417 = vld [vmem:[%s2416] sm:$0xf]
        %v2418 = vld [vmem:[%s2416 + $0x4] sm:$0xf]
        %v2419 = vld [vmem:[%s2416 + $0x8] sm:$0xf]
        %v2420 = vld [vmem:[%s2416 + $0xc] sm:$0xf]
        %v2421 = vld [vmem:[%s2416 + $0x10] sm:$0xf]
        %v2422 = vld [vmem:[%s2416 + $0x14] sm:$0xf]
        %v2423 = vld [vmem:[%s2416 + $0x18] sm:$0xf]
        %v2424 = vld [vmem:[%s2416 + $0x1c] sm:$0xf]
        %v2425 = vld [vmem:[%s2416 + $0x20] sm:$0xf]
        %v2426 = vld [vmem:[%s2416 + $0x24] sm:$0xf]
        %v2427 = vld [vmem:[%s2416 + $0x28] sm:$0xf]
        %v2428 = vld [vmem:[%s2416 + $0x2c] sm:$0xf]
        %v2429 = vld [vmem:[%s2416 + $0x30] sm:$0xf]
        %v2430 = vld [vmem:[%s2416 + $0x34] sm:$0xf]
        %v2431 = vld [vmem:[%s2416 + $0x38] sm:$0xf]
        %v2432 = vld [vmem:[%s2416 + $0x3c] sm:$0xf]
        %v2437 = vunpack.c.l.b16 %v1807
        %v2438 = vunpack.c.l.b16 %v1808
        %v2439 = vunpack.c.l.b16 %v1809
        %v2440 = vunpack.c.l.b16 %v1810
        %v2441 = vpack.c.b16 %v1459, %v1458
        %v2442 = vpack.c.b16 %v1461, %v1460
        %v2443 = vpack.c.b16 %v1463, %v1462
        %v2444 = vpack.c.b16 %v2437, %v1464
        %v2445 = vpack.c.b16 %v1466, %v1465
        %v2446 = vpack.c.b16 %v1468, %v1467
        %v2447 = vpack.c.b16 %v1470, %v1469
        %v2448 = vpack.c.b16 %v2438, %v1471
        %v2449 = vpack.c.b16 %v1473, %v1472
        %v2450 = vpack.c.b16 %v1475, %v1474
        %v2451 = vpack.c.b16 %v1477, %v1476
        %v2452 = vpack.c.b16 %v2439, %v1478
        %v2453 = vpack.c.b16 %v1480, %v1479
        %v2454 = vpack.c.b16 %v1482, %v1481
        %v2455 = vpack.c.b16 %v1484, %v1483
        %v2456 = vpack.c.b16 %v2440, %v1485
        %v2489 = vunpack.c.l.b16 %v2417
        %v2490 = vunpack.c.l.b16 %v2418
        %v2491 = vunpack.c.l.b16 %v2419
        %v2492 = vunpack.c.l.b16 %v2420
        %v2493 = vunpack.c.l.b16 %v2421
        %v2494 = vunpack.c.l.b16 %v2422
        %v2495 = vunpack.c.l.b16 %v2423
        %v2496 = vunpack.c.l.b16 %v2424
        %v2497 = vunpack.c.l.b16 %v2425
        %v2498 = vunpack.c.l.b16 %v2426
        %v2499 = vunpack.c.l.b16 %v2427
        %v2500 = vunpack.c.l.b16 %v2428
        %v2501 = vunpack.c.l.b16 %v2429
        %v2502 = vunpack.c.l.b16 %v2430
        %v2503 = vunpack.c.l.b16 %v2431
        %v2504 = vunpack.c.l.b16 %v2432
        %v2505 = vpack.c.b16 %v2490, %v2489
        %v2506 = vpack.c.b16 %v2492, %v2491
        %v2507 = vpack.c.b16 %v2494, %v2493
        %v2508 = vpack.c.b16 %v2496, %v2495
        %v2509 = vpack.c.b16 %v2498, %v2497
        %v2510 = vpack.c.b16 %v2500, %v2499
        %v2511 = vpack.c.b16 %v2502, %v2501
        %v2512 = vpack.c.b16 %v2504, %v2503
        %2521 = vmatprep.subr.bf16.mxu0 0
        %2522 = vmatpush1.bf16.msra.mxu0 %v2512
        %2523 = vmatprep.subr.bf16.mxu0 0
        %2524 = vmatpush1.bf16.msra.mxu0 %v2511
        %2525 = vmatprep.subr.bf16.mxu0 0
        %2526 = vmatpush1.bf16.msra.mxu0 %v2510
        %2527 = vmatprep.subr.bf16.mxu0 0
        %2528 = vmatpush1.bf16.msra.mxu0 %v2509
        %2529 = vmatprep.subr.bf16.mxu0 0
        %2530 = vmatpush1.bf16.msra.mxu0 %v2508
        %2531 = vmatprep.subr.bf16.mxu0 0
        %2532 = vmatpush1.bf16.msra.mxu0 %v2507
        %2533 = vmatprep.subr.bf16.mxu0 0
        %2534 = vmatpush1.bf16.msra.mxu0 %v2506
        %2535 = vmatprep.subr.bf16.mxu0 0
        %2536 = vmatpush1.bf16.msra.mxu0 %v2505
        %2537 = vmatprep.subr.bf16.mxu0 0
        %2538 = vmatpush2.bf16.msra.mxu0 0
        %2539 = vmatprep.subr.bf16.mxu0 0
        %2540 = vmatpush2.bf16.msra.mxu0 0
        %2541 = vmatprep.subr.bf16.mxu0 0
        %2542 = vmatpush2.bf16.msra.mxu0 0
        %2543 = vmatprep.subr.bf16.mxu0 0
        %2544 = vmatpush2.bf16.msra.mxu0 0
        %2545 = vmatprep.subr.bf16.mxu0 0
        %2546 = vmatpush2.bf16.msra.mxu0 0
        %2547 = vmatprep.subr.bf16.mxu0 0
        %2548 = vmatpush2.bf16.msra.mxu0 0
        %2549 = vmatprep.subr.bf16.mxu0 0
        %2550 = vmatpush2.bf16.msra.mxu0 0
        %2551 = vmatprep.subr.bf16.mxu0 0
        %2552 = vmatpush2.bf16.msra.mxu0 0
        %2553 = vmatprep.mubr.bf16.mxu0 0
        %2554 = vmatmul.mubr.bf16.gmra.mxu0 %v2441
        %v2555 = vpop.f32.mrf.mxu0
        %v2556 = vadd.f32 0.0, %v2555
        %v2557 = vpop.f32.mrf.mxu0
        %v2558 = vpop.f32.mrf.mxu0
        %v2559 = vadd.f32 0.0, %v2558
        %v2560 = vpop.f32.mrf.mxu0
        %2561 = vmatprep.mubr.bf16.mxu0 0
        %2562 = vmatmul.mubr.bf16.gmra.mxu0 %v2442
        %v2563 = vpop.f32.mrf.mxu0
        %v2564 = vadd.f32 0.0, %v2563
        %v2565 = vpop.f32.mrf.mxu0
        %v2566 = vpop.f32.mrf.mxu0
        %v2567 = vadd.f32 0.0, %v2566
        %v2568 = vpop.f32.mrf.mxu0
        %2569 = vmatprep.mubr.bf16.mxu0 0
        %2570 = vmatmul.mubr.bf16.gmra.mxu0 %v2443
        %v2571 = vpop.f32.mrf.mxu0
        %v2572 = vadd.f32 0.0, %v2571
        %v2573 = vpop.f32.mrf.mxu0
        %v2574 = vpop.f32.mrf.mxu0
        %v2575 = vadd.f32 0.0, %v2574
        %v2576 = vpop.f32.mrf.mxu0
        %2577 = vmatprep.mubr.bf16.mxu0 0
        %2578 = vmatmul.mubr.bf16.gmra.mxu0 %v2444
        %v2579 = vpop.f32.mrf.mxu0
        %v2580 = vadd.f32 0.0, %v2579
        %v2581 = vpop.f32.mrf.mxu0
        %v2582 = vpop.f32.mrf.mxu0
        %v2583 = vadd.f32 0.0, %v2582
        %v2584 = vpop.f32.mrf.mxu0
        %2585 = vmatprep.mubr.bf16.mxu0 0
        %2586 = vmatmul.mubr.bf16.gmra.mxu0 %v2445
        %v2587 = vpop.f32.mrf.mxu0
        %v2588 = vadd.f32 0.0, %v2587
        %v2589 = vpop.f32.mrf.mxu0
        %v2590 = vpop.f32.mrf.mxu0
        %v2591 = vadd.f32 0.0, %v2590
        %v2592 = vpop.f32.mrf.mxu0
        %2593 = vmatprep.mubr.bf16.mxu0 0
        %2594 = vmatmul.mubr.bf16.gmra.mxu0 %v2446
        %v2595 = vpop.f32.mrf.mxu0
        %v2596 = vadd.f32 0.0, %v2595
        %v2597 = vpop.f32.mrf.mxu0
        %v2598 = vpop.f32.mrf.mxu0
        %v2599 = vadd.f32 0.0, %v2598
        %v2600 = vpop.f32.mrf.mxu0
        %2601 = vmatprep.mubr.bf16.mxu0 0
        %2602 = vmatmul.mubr.bf16.gmra.mxu0 %v2447
        %v2603 = vpop.f32.mrf.mxu0
        %v2604 = vadd.f32 0.0, %v2603
        %v2605 = vpop.f32.mrf.mxu0
        %v2606 = vpop.f32.mrf.mxu0
        %v2607 = vadd.f32 0.0, %v2606
        %v2608 = vpop.f32.mrf.mxu0
        %2609 = vmatprep.mubr.bf16.mxu0 0
        %2610 = vmatmul.mubr.bf16.gmra.mxu0 %v2448
        %v2611 = vpop.f32.mrf.mxu0
        %v2612 = vadd.f32 0.0, %v2611
        %v2613 = vpop.f32.mrf.mxu0
        %v2614 = vpop.f32.mrf.mxu0
        %v2615 = vadd.f32 0.0, %v2614
        %v2616 = vpop.f32.mrf.mxu0
        %2617 = vmatprep.mubr.bf16.mxu0 0
        %2618 = vmatmul.mubr.bf16.gmra.mxu0 %v2449
        %v2619 = vpop.f32.mrf.mxu0
        %v2620 = vadd.f32 0.0, %v2619
        %v2621 = vpop.f32.mrf.mxu0
        %v2622 = vpop.f32.mrf.mxu0
        %v2623 = vadd.f32 0.0, %v2622
        %v2624 = vpop.f32.mrf.mxu0
        %2625 = vmatprep.mubr.bf16.mxu0 0
        %2626 = vmatmul.mubr.bf16.gmra.mxu0 %v2450
        %v2627 = vpop.f32.mrf.mxu0
        %v2628 = vadd.f32 0.0, %v2627
        %v2629 = vpop.f32.mrf.mxu0
        %v2630 = vpop.f32.mrf.mxu0
        %v2631 = vadd.f32 0.0, %v2630
        %v2632 = vpop.f32.mrf.mxu0
        %2633 = vmatprep.mubr.bf16.mxu0 0
        %2634 = vmatmul.mubr.bf16.gmra.mxu0 %v2451
        %v2635 = vpop.f32.mrf.mxu0
        %v2636 = vadd.f32 0.0, %v2635
        %v2637 = vpop.f32.mrf.mxu0
        %v2638 = vpop.f32.mrf.mxu0
        %v2639 = vadd.f32 0.0, %v2638
        %v2640 = vpop.f32.mrf.mxu0
        %2641 = vmatprep.mubr.bf16.mxu0 0
        %2642 = vmatmul.mubr.bf16.gmra.mxu0 %v2452
        %v2643 = vpop.f32.mrf.mxu0
        %v2644 = vadd.f32 0.0, %v2643
        %v2645 = vpop.f32.mrf.mxu0
        %v2646 = vpop.f32.mrf.mxu0
        %v2647 = vadd.f32 0.0, %v2646
        %v2648 = vpop.f32.mrf.mxu0
        %2649 = vmatprep.mubr.bf16.mxu0 0
        %2650 = vmatmul.mubr.bf16.gmra.mxu0 %v2453
        %v2651 = vpop.f32.mrf.mxu0
        %v2652 = vadd.f32 0.0, %v2651
        %v2653 = vpop.f32.mrf.mxu0
        %v2654 = vpop.f32.mrf.mxu0
        %v2655 = vadd.f32 0.0, %v2654
        %v2656 = vpop.f32.mrf.mxu0
        %2657 = vmatprep.mubr.bf16.mxu0 0
        %2658 = vmatmul.mubr.bf16.gmra.mxu0 %v2454
        %v2659 = vpop.f32.mrf.mxu0
        %v2660 = vadd.f32 0.0, %v2659
        %v2661 = vpop.f32.mrf.mxu0
        %v2662 = vpop.f32.mrf.mxu0
        %v2663 = vadd.f32 0.0, %v2662
        %v2664 = vpop.f32.mrf.mxu0
        %2665 = vmatprep.mubr.bf16.mxu0 0
        %2666 = vmatmul.mubr.bf16.gmra.mxu0 %v2455
        %v2667 = vpop.f32.mrf.mxu0
        %v2668 = vadd.f32 0.0, %v2667
        %v2669 = vpop.f32.mrf.mxu0
        %v2670 = vpop.f32.mrf.mxu0
        %v2671 = vadd.f32 0.0, %v2670
        %v2672 = vpop.f32.mrf.mxu0
        %2673 = vmatprep.mubr.bf16.mxu0 0
        %2674 = vmatmul.mubr.bf16.gmra.mxu0 %v2456
        %v2675 = vpop.f32.mrf.mxu0
        %v2676 = vadd.f32 0.0, %v2675
        %v2677 = vpop.f32.mrf.mxu0
        %v2678 = vpop.f32.mrf.mxu0
        %v2679 = vadd.f32 0.0, %v2678
        %v2680 = vpop.f32.mrf.mxu0
        %2681 = vdwg.mxu0
        %v2682 = vadd.f32 %v2381, %v2556
        %v2683 = vadd.f32 %v2382, %v2559
        %v2684 = vadd.f32 %v2383, %v2564
        %v2685 = vadd.f32 %v2384, %v2567
        %v2686 = vadd.f32 %v2385, %v2572
        %v2687 = vadd.f32 %v2386, %v2575
        %v2688 = vadd.f32 %v2387, %v2580
        %v2689 = vadd.f32 %v2388, %v2583
        %v2690 = vadd.f32 %v2389, %v2588
        %v2691 = vadd.f32 %v2390, %v2591
        %v2692 = vadd.f32 %v2391, %v2596
        %v2693 = vadd.f32 %v2392, %v2599
        %v2694 = vadd.f32 %v2393, %v2604
        %v2695 = vadd.f32 %v2394, %v2607
        %v2696 = vadd.f32 %v2395, %v2612
        %v2697 = vadd.f32 %v2396, %v2615
        %v2698 = vadd.f32 %v2397, %v2620
        %v2699 = vadd.f32 %v2398, %v2623
        %v2700 = vadd.f32 %v2399, %v2628
        %v2701 = vadd.f32 %v2400, %v2631
        %v2702 = vadd.f32 %v2401, %v2636
        %v2703 = vadd.f32 %v2402, %v2639
        %v2704 = vadd.f32 %v2403, %v2644
        %v2705 = vadd.f32 %v2404, %v2647
        %v2706 = vadd.f32 %v2405, %v2652
        %v2707 = vadd.f32 %v2406, %v2655
        %v2708 = vadd.f32 %v2407, %v2660
        %v2709 = vadd.f32 %v2408, %v2663
        %v2710 = vadd.f32 %v2409, %v2668
        %v2711 = vadd.f32 %v2410, %v2671
        %v2712 = vadd.f32 %v2411, %v2676
        %v2713 = vadd.f32 %v2412, %v2679
        %s2714 = sadd.s32 %s770, 6
        %s2715 = smul.u32 %s2714, 16
        %s2716 = smul.addr %s2715, 4
        %s2717 = scalar_lea.vmem [#allocation2], %s2716
        %v2718 = vld [vmem:[%s2717] sm:$0xf]
        %v2719 = vld [vmem:[%s2717 + $0x4] sm:$0xf]
        %v2720 = vld [vmem:[%s2717 + $0x8] sm:$0xf]
        %v2721 = vld [vmem:[%s2717 + $0xc] sm:$0xf]
        %v2722 = vld [vmem:[%s2717 + $0x10] sm:$0xf]
        %v2723 = vld [vmem:[%s2717 + $0x14] sm:$0xf]
        %v2724 = vld [vmem:[%s2717 + $0x18] sm:$0xf]
        %v2725 = vld [vmem:[%s2717 + $0x1c] sm:$0xf]
        %v2726 = vld [vmem:[%s2717 + $0x20] sm:$0xf]
        %v2727 = vld [vmem:[%s2717 + $0x24] sm:$0xf]
        %v2728 = vld [vmem:[%s2717 + $0x28] sm:$0xf]
        %v2729 = vld [vmem:[%s2717 + $0x2c] sm:$0xf]
        %v2730 = vld [vmem:[%s2717 + $0x30] sm:$0xf]
        %v2731 = vld [vmem:[%s2717 + $0x34] sm:$0xf]
        %v2732 = vld [vmem:[%s2717 + $0x38] sm:$0xf]
        %v2733 = vld [vmem:[%s2717 + $0x3c] sm:$0xf]
        %v2734 = vpack.c.b16 %v1138, %v1835
        %v2735 = vpack.c.b16 %v1138, %v1836
        %v2736 = vpack.c.b16 %v1138, %v1837
        %v2737 = vpack.c.b16 %v1138, %v1838
        %v2758 = vunpack.c.l.b16 %v2718
        %v2759 = vunpack.c.l.b16 %v2719
        %v2760 = vunpack.c.l.b16 %v2720
        %v2761 = vunpack.c.l.b16 %v2721
        %v2762 = vunpack.c.l.b16 %v2722
        %v2763 = vunpack.c.l.b16 %v2723
        %v2764 = vunpack.c.l.b16 %v2724
        %v2765 = vunpack.c.l.b16 %v2725
        %v2766 = vunpack.c.l.b16 %v2726
        %v2767 = vunpack.c.l.b16 %v2727
        %v2768 = vunpack.c.l.b16 %v2728
        %v2769 = vunpack.c.l.b16 %v2729
        %v2770 = vunpack.c.l.b16 %v2730
        %v2771 = vunpack.c.l.b16 %v2731
        %v2772 = vunpack.c.l.b16 %v2732
        %v2773 = vunpack.c.l.b16 %v2733
        %v2774 = vpack.c.b16 %v2759, %v2758
        %v2775 = vpack.c.b16 %v2761, %v2760
        %v2776 = vpack.c.b16 %v2763, %v2762
        %v2777 = vpack.c.b16 %v2765, %v2764
        %v2778 = vpack.c.b16 %v2767, %v2766
        %v2779 = vpack.c.b16 %v2769, %v2768
        %v2780 = vpack.c.b16 %v2771, %v2770
        %v2781 = vpack.c.b16 %v2773, %v2772
        %2790 = vmatprep.subr.bf16.mxu0 0
        %2791 = vmatpush1.bf16.msra.mxu0 %v2781
        %2792 = vmatprep.subr.bf16.mxu0 0
        %2793 = vmatpush1.bf16.msra.mxu0 %v2780
        %2794 = vmatprep.subr.bf16.mxu0 0
        %2795 = vmatpush1.bf16.msra.mxu0 %v2779
        %2796 = vmatprep.subr.bf16.mxu0 0
        %2797 = vmatpush1.bf16.msra.mxu0 %v2778
        %2798 = vmatprep.subr.bf16.mxu0 0
        %2799 = vmatpush1.bf16.msra.mxu0 %v2777
        %2800 = vmatprep.subr.bf16.mxu0 0
        %2801 = vmatpush1.bf16.msra.mxu0 %v2776
        %2802 = vmatprep.subr.bf16.mxu0 0
        %2803 = vmatpush1.bf16.msra.mxu0 %v2775
        %2804 = vmatprep.subr.bf16.mxu0 0
        %2805 = vmatpush1.bf16.msra.mxu0 %v2774
        %2806 = vmatprep.subr.bf16.mxu0 0
        %2807 = vmatpush2.bf16.msra.mxu0 0
        %2808 = vmatprep.subr.bf16.mxu0 0
        %2809 = vmatpush2.bf16.msra.mxu0 0
        %2810 = vmatprep.subr.bf16.mxu0 0
        %2811 = vmatpush2.bf16.msra.mxu0 0
        %2812 = vmatprep.subr.bf16.mxu0 0
        %2813 = vmatpush2.bf16.msra.mxu0 0
        %2814 = vmatprep.subr.bf16.mxu0 0
        %2815 = vmatpush2.bf16.msra.mxu0 0
        %2816 = vmatprep.subr.bf16.mxu0 0
        %2817 = vmatpush2.bf16.msra.mxu0 0
        %2818 = vmatprep.subr.bf16.mxu0 0
        %2819 = vmatpush2.bf16.msra.mxu0 0
        %2820 = vmatprep.subr.bf16.mxu0 0
        %2821 = vmatpush2.bf16.msra.mxu0 0
        %2822 = vmatprep.mubr.bf16.mxu0 0
        %2823 = vmatmul.mubr.bf16.gmra.mxu0 %v1168
        %v2824 = vpop.f32.mrf.mxu0
        %v2825 = vadd.f32 0.0, %v2824
        %v2826 = vpop.f32.mrf.mxu0
        %v2827 = vpop.f32.mrf.mxu0
        %v2828 = vadd.f32 0.0, %v2827
        %v2829 = vpop.f32.mrf.mxu0
        %2830 = vmatprep.mubr.bf16.mxu0 0
        %2831 = vmatmul.mubr.bf16.gmra.mxu0 %v1169
        %v2832 = vpop.f32.mrf.mxu0
        %v2833 = vadd.f32 0.0, %v2832
        %v2834 = vpop.f32.mrf.mxu0
        %v2835 = vpop.f32.mrf.mxu0
        %v2836 = vadd.f32 0.0, %v2835
        %v2837 = vpop.f32.mrf.mxu0
        %2838 = vmatprep.mubr.bf16.mxu0 0
        %2839 = vmatmul.mubr.bf16.gmra.mxu0 %v1170
        %v2840 = vpop.f32.mrf.mxu0
        %v2841 = vadd.f32 0.0, %v2840
        %v2842 = vpop.f32.mrf.mxu0
        %v2843 = vpop.f32.mrf.mxu0
        %v2844 = vadd.f32 0.0, %v2843
        %v2845 = vpop.f32.mrf.mxu0
        %2846 = vmatprep.mubr.bf16.mxu0 0
        %2847 = vmatmul.mubr.bf16.gmra.mxu0 %v2734
        %v2848 = vpop.f32.mrf.mxu0
        %v2849 = vadd.f32 0.0, %v2848
        %v2850 = vpop.f32.mrf.mxu0
        %v2851 = vpop.f32.mrf.mxu0
        %v2852 = vadd.f32 0.0, %v2851
        %v2853 = vpop.f32.mrf.mxu0
        %2854 = vmatprep.mubr.bf16.mxu0 0
        %2855 = vmatmul.mubr.bf16.gmra.mxu0 %v1172
        %v2856 = vpop.f32.mrf.mxu0
        %v2857 = vadd.f32 0.0, %v2856
        %v2858 = vpop.f32.mrf.mxu0
        %v2859 = vpop.f32.mrf.mxu0
        %v2860 = vadd.f32 0.0, %v2859
        %v2861 = vpop.f32.mrf.mxu0
        %2862 = vmatprep.mubr.bf16.mxu0 0
        %2863 = vmatmul.mubr.bf16.gmra.mxu0 %v1173
        %v2864 = vpop.f32.mrf.mxu0
        %v2865 = vadd.f32 0.0, %v2864
        %v2866 = vpop.f32.mrf.mxu0
        %v2867 = vpop.f32.mrf.mxu0
        %v2868 = vadd.f32 0.0, %v2867
        %v2869 = vpop.f32.mrf.mxu0
        %2870 = vmatprep.mubr.bf16.mxu0 0
        %2871 = vmatmul.mubr.bf16.gmra.mxu0 %v1174
        %v2872 = vpop.f32.mrf.mxu0
        %v2873 = vadd.f32 0.0, %v2872
        %v2874 = vpop.f32.mrf.mxu0
        %v2875 = vpop.f32.mrf.mxu0
        %v2876 = vadd.f32 0.0, %v2875
        %v2877 = vpop.f32.mrf.mxu0
        %2878 = vmatprep.mubr.bf16.mxu0 0
        %2879 = vmatmul.mubr.bf16.gmra.mxu0 %v2735
        %v2880 = vpop.f32.mrf.mxu0
        %v2881 = vadd.f32 0.0, %v2880
        %v2882 = vpop.f32.mrf.mxu0
        %v2883 = vpop.f32.mrf.mxu0
        %v2884 = vadd.f32 0.0, %v2883
        %v2885 = vpop.f32.mrf.mxu0
        %2886 = vmatprep.mubr.bf16.mxu0 0
        %2887 = vmatmul.mubr.bf16.gmra.mxu0 %v1176
        %v2888 = vpop.f32.mrf.mxu0
        %v2889 = vadd.f32 0.0, %v2888
        %v2890 = vpop.f32.mrf.mxu0
        %v2891 = vpop.f32.mrf.mxu0
        %v2892 = vadd.f32 0.0, %v2891
        %v2893 = vpop.f32.mrf.mxu0
        %2894 = vmatprep.mubr.bf16.mxu0 0
        %2895 = vmatmul.mubr.bf16.gmra.mxu0 %v1177
        %v2896 = vpop.f32.mrf.mxu0
        %v2897 = vadd.f32 0.0, %v2896
        %v2898 = vpop.f32.mrf.mxu0
        %v2899 = vpop.f32.mrf.mxu0
        %v2900 = vadd.f32 0.0, %v2899
        %v2901 = vpop.f32.mrf.mxu0
        %2902 = vmatprep.mubr.bf16.mxu0 0
        %2903 = vmatmul.mubr.bf16.gmra.mxu0 %v1178
        %v2904 = vpop.f32.mrf.mxu0
        %v2905 = vadd.f32 0.0, %v2904
        %v2906 = vpop.f32.mrf.mxu0
        %v2907 = vpop.f32.mrf.mxu0
        %v2908 = vadd.f32 0.0, %v2907
        %v2909 = vpop.f32.mrf.mxu0
        %2910 = vmatprep.mubr.bf16.mxu0 0
        %2911 = vmatmul.mubr.bf16.gmra.mxu0 %v2736
        %v2912 = vpop.f32.mrf.mxu0
        %v2913 = vadd.f32 0.0, %v2912
        %v2914 = vpop.f32.mrf.mxu0
        %v2915 = vpop.f32.mrf.mxu0
        %v2916 = vadd.f32 0.0, %v2915
        %v2917 = vpop.f32.mrf.mxu0
        %2918 = vmatprep.mubr.bf16.mxu0 0
        %2919 = vmatmul.mubr.bf16.gmra.mxu0 %v1180
        %v2920 = vpop.f32.mrf.mxu0
        %v2921 = vadd.f32 0.0, %v2920
        %v2922 = vpop.f32.mrf.mxu0
        %v2923 = vpop.f32.mrf.mxu0
        %v2924 = vadd.f32 0.0, %v2923
        %v2925 = vpop.f32.mrf.mxu0
        %2926 = vmatprep.mubr.bf16.mxu0 0
        %2927 = vmatmul.mubr.bf16.gmra.mxu0 %v1181
        %v2928 = vpop.f32.mrf.mxu0
        %v2929 = vadd.f32 0.0, %v2928
        %v2930 = vpop.f32.mrf.mxu0
        %v2931 = vpop.f32.mrf.mxu0
        %v2932 = vadd.f32 0.0, %v2931
        %v2933 = vpop.f32.mrf.mxu0
        %2934 = vmatprep.mubr.bf16.mxu0 0
        %2935 = vmatmul.mubr.bf16.gmra.mxu0 %v1182
        %v2936 = vpop.f32.mrf.mxu0
        %v2937 = vadd.f32 0.0, %v2936
        %v2938 = vpop.f32.mrf.mxu0
        %v2939 = vpop.f32.mrf.mxu0
        %v2940 = vadd.f32 0.0, %v2939
        %v2941 = vpop.f32.mrf.mxu0
        %2942 = vmatprep.mubr.bf16.mxu0 0
        %2943 = vmatmul.mubr.bf16.gmra.mxu0 %v2737
        %v2944 = vpop.f32.mrf.mxu0
        %v2945 = vadd.f32 0.0, %v2944
        %v2946 = vpop.f32.mrf.mxu0
        %v2947 = vpop.f32.mrf.mxu0
        %v2948 = vadd.f32 0.0, %v2947
        %v2949 = vpop.f32.mrf.mxu0
        %2950 = vdwg.mxu0
        %v2951 = vadd.f32 %v2682, %v2825
        %v2952 = vadd.f32 %v2683, %v2828
        %v2953 = vadd.f32 %v2684, %v2833
        %v2954 = vadd.f32 %v2685, %v2836
        %v2955 = vadd.f32 %v2686, %v2841
        %v2956 = vadd.f32 %v2687, %v2844
        %v2957 = vadd.f32 %v2688, %v2849
        %v2958 = vadd.f32 %v2689, %v2852
        %v2959 = vadd.f32 %v2690, %v2857
        %v2960 = vadd.f32 %v2691, %v2860
        %v2961 = vadd.f32 %v2692, %v2865
        %v2962 = vadd.f32 %v2693, %v2868
        %v2963 = vadd.f32 %v2694, %v2873
        %v2964 = vadd.f32 %v2695, %v2876
        %v2965 = vadd.f32 %v2696, %v2881
        %v2966 = vadd.f32 %v2697, %v2884
        %v2967 = vadd.f32 %v2698, %v2889
        %v2968 = vadd.f32 %v2699, %v2892
        %v2969 = vadd.f32 %v2700, %v2897
        %v2970 = vadd.f32 %v2701, %v2900
        %v2971 = vadd.f32 %v2702, %v2905
        %v2972 = vadd.f32 %v2703, %v2908
        %v2973 = vadd.f32 %v2704, %v2913
        %v2974 = vadd.f32 %v2705, %v2916
        %v2975 = vadd.f32 %v2706, %v2921
        %v2976 = vadd.f32 %v2707, %v2924
        %v2977 = vadd.f32 %v2708, %v2929
        %v2978 = vadd.f32 %v2709, %v2932
        %v2979 = vadd.f32 %v2710, %v2937
        %v2980 = vadd.f32 %v2711, %v2940
        %v2981 = vadd.f32 %v2712, %v2945
        %v2982 = vadd.f32 %v2713, %v2948
        %s2983 = sadd.s32 %s770, 7
        %s2984 = smul.u32 %s2983, 16
        %s2985 = smul.addr %s2984, 4
        %s2986 = scalar_lea.vmem [#allocation2], %s2985
        %v2987 = vld [vmem:[%s2986] sm:$0xf]
        %v2988 = vld [vmem:[%s2986 + $0x4] sm:$0xf]
        %v2989 = vld [vmem:[%s2986 + $0x8] sm:$0xf]
        %v2990 = vld [vmem:[%s2986 + $0xc] sm:$0xf]
        %v2991 = vld [vmem:[%s2986 + $0x10] sm:$0xf]
        %v2992 = vld [vmem:[%s2986 + $0x14] sm:$0xf]
        %v2993 = vld [vmem:[%s2986 + $0x18] sm:$0xf]
        %v2994 = vld [vmem:[%s2986 + $0x1c] sm:$0xf]
        %v2995 = vld [vmem:[%s2986 + $0x20] sm:$0xf]
        %v2996 = vld [vmem:[%s2986 + $0x24] sm:$0xf]
        %v2997 = vld [vmem:[%s2986 + $0x28] sm:$0xf]
        %v2998 = vld [vmem:[%s2986 + $0x2c] sm:$0xf]
        %v2999 = vld [vmem:[%s2986 + $0x30] sm:$0xf]
        %v3000 = vld [vmem:[%s2986 + $0x34] sm:$0xf]
        %v3001 = vld [vmem:[%s2986 + $0x38] sm:$0xf]
        %v3002 = vld [vmem:[%s2986 + $0x3c] sm:$0xf]
        %v3003 = vpack.c.b16 %v839, %v2136
        %v3004 = vpack.c.b16 %v839, %v2137
        %v3005 = vpack.c.b16 %v839, %v2138
        %v3006 = vpack.c.b16 %v839, %v2139
        %v3027 = vunpack.c.l.b16 %v2987
        %v3028 = vunpack.c.l.b16 %v2988
        %v3029 = vunpack.c.l.b16 %v2989
        %v3030 = vunpack.c.l.b16 %v2990
        %v3031 = vunpack.c.l.b16 %v2991
        %v3032 = vunpack.c.l.b16 %v2992
        %v3033 = vunpack.c.l.b16 %v2993
        %v3034 = vunpack.c.l.b16 %v2994
        %v3035 = vunpack.c.l.b16 %v2995
        %v3036 = vunpack.c.l.b16 %v2996
        %v3037 = vunpack.c.l.b16 %v2997
        %v3038 = vunpack.c.l.b16 %v2998
        %v3039 = vunpack.c.l.b16 %v2999
        %v3040 = vunpack.c.l.b16 %v3000
        %v3041 = vunpack.c.l.b16 %v3001
        %v3042 = vunpack.c.l.b16 %v3002
        %v3043 = vpack.c.b16 %v3028, %v3027
        %v3044 = vpack.c.b16 %v3030, %v3029
        %v3045 = vpack.c.b16 %v3032, %v3031
        %v3046 = vpack.c.b16 %v3034, %v3033
        %v3047 = vpack.c.b16 %v3036, %v3035
        %v3048 = vpack.c.b16 %v3038, %v3037
        %v3049 = vpack.c.b16 %v3040, %v3039
        %v3050 = vpack.c.b16 %v3042, %v3041
        %3059 = vmatprep.subr.bf16.mxu0 0
        %3060 = vmatpush1.bf16.msra.mxu0 %v3050
        %3061 = vmatprep.subr.bf16.mxu0 0
        %3062 = vmatpush1.bf16.msra.mxu0 %v3049
        %3063 = vmatprep.subr.bf16.mxu0 0
        %3064 = vmatpush1.bf16.msra.mxu0 %v3048
        %3065 = vmatprep.subr.bf16.mxu0 0
        %3066 = vmatpush1.bf16.msra.mxu0 %v3047
        %3067 = vmatprep.subr.bf16.mxu0 0
        %3068 = vmatpush1.bf16.msra.mxu0 %v3046
        %3069 = vmatprep.subr.bf16.mxu0 0
        %3070 = vmatpush1.bf16.msra.mxu0 %v3045
        %3071 = vmatprep.subr.bf16.mxu0 0
        %3072 = vmatpush1.bf16.msra.mxu0 %v3044
        %3073 = vmatprep.subr.bf16.mxu0 0
        %3074 = vmatpush1.bf16.msra.mxu0 %v3043
        %3075 = vmatprep.subr.bf16.mxu0 0
        %3076 = vmatpush2.bf16.msra.mxu0 0
        %3077 = vmatprep.subr.bf16.mxu0 0
        %3078 = vmatpush2.bf16.msra.mxu0 0
        %3079 = vmatprep.subr.bf16.mxu0 0
        %3080 = vmatpush2.bf16.msra.mxu0 0
        %3081 = vmatprep.subr.bf16.mxu0 0
        %3082 = vmatpush2.bf16.msra.mxu0 0
        %3083 = vmatprep.subr.bf16.mxu0 0
        %3084 = vmatpush2.bf16.msra.mxu0 0
        %3085 = vmatprep.subr.bf16.mxu0 0
        %3086 = vmatpush2.bf16.msra.mxu0 0
        %3087 = vmatprep.subr.bf16.mxu0 0
        %3088 = vmatpush2.bf16.msra.mxu0 0
        %3089 = vmatprep.subr.bf16.mxu0 0
        %3090 = vmatpush2.bf16.msra.mxu0 0
        %3091 = vmatprep.mubr.bf16.mxu0 0
        %3092 = vmatmul.mubr.bf16.gmra.mxu0 %v869
        %v3093 = vpop.f32.mrf.mxu0
        %v3094 = vadd.f32 0.0, %v3093
        %v3095 = vpop.f32.mrf.mxu0
        %v3096 = vpop.f32.mrf.mxu0
        %v3097 = vadd.f32 0.0, %v3096
        %v3098 = vpop.f32.mrf.mxu0
        %3099 = vmatprep.mubr.bf16.mxu0 0
        %3100 = vmatmul.mubr.bf16.gmra.mxu0 %v870
        %v3101 = vpop.f32.mrf.mxu0
        %v3102 = vadd.f32 0.0, %v3101
        %v3103 = vpop.f32.mrf.mxu0
        %v3104 = vpop.f32.mrf.mxu0
        %v3105 = vadd.f32 0.0, %v3104
        %v3106 = vpop.f32.mrf.mxu0
        %3107 = vmatprep.mubr.bf16.mxu0 0
        %3108 = vmatmul.mubr.bf16.gmra.mxu0 %v871
        %v3109 = vpop.f32.mrf.mxu0
        %v3110 = vadd.f32 0.0, %v3109
        %v3111 = vpop.f32.mrf.mxu0
        %v3112 = vpop.f32.mrf.mxu0
        %v3113 = vadd.f32 0.0, %v3112
        %v3114 = vpop.f32.mrf.mxu0
        %3115 = vmatprep.mubr.bf16.mxu0 0
        %3116 = vmatmul.mubr.bf16.gmra.mxu0 %v3003
        %v3117 = vpop.f32.mrf.mxu0
        %v3118 = vadd.f32 0.0, %v3117
        %v3119 = vpop.f32.mrf.mxu0
        %v3120 = vpop.f32.mrf.mxu0
        %v3121 = vadd.f32 0.0, %v3120
        %v3122 = vpop.f32.mrf.mxu0
        %3123 = vmatprep.mubr.bf16.mxu0 0
        %3124 = vmatmul.mubr.bf16.gmra.mxu0 %v873
        %v3125 = vpop.f32.mrf.mxu0
        %v3126 = vadd.f32 0.0, %v3125
        %v3127 = vpop.f32.mrf.mxu0
        %v3128 = vpop.f32.mrf.mxu0
        %v3129 = vadd.f32 0.0, %v3128
        %v3130 = vpop.f32.mrf.mxu0
        %3131 = vmatprep.mubr.bf16.mxu0 0
        %3132 = vmatmul.mubr.bf16.gmra.mxu0 %v874
        %v3133 = vpop.f32.mrf.mxu0
        %v3134 = vadd.f32 0.0, %v3133
        %v3135 = vpop.f32.mrf.mxu0
        %v3136 = vpop.f32.mrf.mxu0
        %v3137 = vadd.f32 0.0, %v3136
        %v3138 = vpop.f32.mrf.mxu0
        %3139 = vmatprep.mubr.bf16.mxu0 0
        %3140 = vmatmul.mubr.bf16.gmra.mxu0 %v875
        %v3141 = vpop.f32.mrf.mxu0
        %v3142 = vadd.f32 0.0, %v3141
        %v3143 = vpop.f32.mrf.mxu0
        %v3144 = vpop.f32.mrf.mxu0
        %v3145 = vadd.f32 0.0, %v3144
        %v3146 = vpop.f32.mrf.mxu0
        %3147 = vmatprep.mubr.bf16.mxu0 0
        %3148 = vmatmul.mubr.bf16.gmra.mxu0 %v3004
        %v3149 = vpop.f32.mrf.mxu0
        %v3150 = vadd.f32 0.0, %v3149
        %v3151 = vpop.f32.mrf.mxu0
        %v3152 = vpop.f32.mrf.mxu0
        %v3153 = vadd.f32 0.0, %v3152
        %v3154 = vpop.f32.mrf.mxu0
        %3155 = vmatprep.mubr.bf16.mxu0 0
        %3156 = vmatmul.mubr.bf16.gmra.mxu0 %v877
        %v3157 = vpop.f32.mrf.mxu0
        %v3158 = vadd.f32 0.0, %v3157
        %v3159 = vpop.f32.mrf.mxu0
        %v3160 = vpop.f32.mrf.mxu0
        %v3161 = vadd.f32 0.0, %v3160
        %v3162 = vpop.f32.mrf.mxu0
        %3163 = vmatprep.mubr.bf16.mxu0 0
        %3164 = vmatmul.mubr.bf16.gmra.mxu0 %v878
        %v3165 = vpop.f32.mrf.mxu0
        %v3166 = vadd.f32 0.0, %v3165
        %v3167 = vpop.f32.mrf.mxu0
        %v3168 = vpop.f32.mrf.mxu0
        %v3169 = vadd.f32 0.0, %v3168
        %v3170 = vpop.f32.mrf.mxu0
        %3171 = vmatprep.mubr.bf16.mxu0 0
        %3172 = vmatmul.mubr.bf16.gmra.mxu0 %v879
        %v3173 = vpop.f32.mrf.mxu0
        %v3174 = vadd.f32 0.0, %v3173
        %v3175 = vpop.f32.mrf.mxu0
        %v3176 = vpop.f32.mrf.mxu0
        %v3177 = vadd.f32 0.0, %v3176
        %v3178 = vpop.f32.mrf.mxu0
        %3179 = vmatprep.mubr.bf16.mxu0 0
        %3180 = vmatmul.mubr.bf16.gmra.mxu0 %v3005
        %v3181 = vpop.f32.mrf.mxu0
        %v3182 = vadd.f32 0.0, %v3181
        %v3183 = vpop.f32.mrf.mxu0
        %v3184 = vpop.f32.mrf.mxu0
        %v3185 = vadd.f32 0.0, %v3184
        %v3186 = vpop.f32.mrf.mxu0
        %3187 = vmatprep.mubr.bf16.mxu0 0
        %3188 = vmatmul.mubr.bf16.gmra.mxu0 %v881
        %v3189 = vpop.f32.mrf.mxu0
        %v3190 = vadd.f32 0.0, %v3189
        %v3191 = vpop.f32.mrf.mxu0
        %v3192 = vpop.f32.mrf.mxu0
        %v3193 = vadd.f32 0.0, %v3192
        %v3194 = vpop.f32.mrf.mxu0
        %3195 = vmatprep.mubr.bf16.mxu0 0
        %3196 = vmatmul.mubr.bf16.gmra.mxu0 %v882
        %v3197 = vpop.f32.mrf.mxu0
        %v3198 = vadd.f32 0.0, %v3197
        %v3199 = vpop.f32.mrf.mxu0
        %v3200 = vpop.f32.mrf.mxu0
        %v3201 = vadd.f32 0.0, %v3200
        %v3202 = vpop.f32.mrf.mxu0
        %3203 = vmatprep.mubr.bf16.mxu0 0
        %3204 = vmatmul.mubr.bf16.gmra.mxu0 %v883
        %v3205 = vpop.f32.mrf.mxu0
        %v3206 = vadd.f32 0.0, %v3205
        %v3207 = vpop.f32.mrf.mxu0
        %v3208 = vpop.f32.mrf.mxu0
        %v3209 = vadd.f32 0.0, %v3208
        %v3210 = vpop.f32.mrf.mxu0
        %3211 = vmatprep.mubr.bf16.mxu0 0
        %3212 = vmatmul.mubr.bf16.gmra.mxu0 %v3006
        %v3213 = vpop.f32.mrf.mxu0
        %v3214 = vadd.f32 0.0, %v3213
        %v3215 = vpop.f32.mrf.mxu0
        %v3216 = vpop.f32.mrf.mxu0
        %v3217 = vadd.f32 0.0, %v3216
        %v3218 = vpop.f32.mrf.mxu0
        %3219 = vdwg.mxu0
        %v3220 = vadd.f32 %v2951, %v3094
        %v3221 = vadd.f32 %v2952, %v3097
        %v3222 = vadd.f32 %v2953, %v3102
        %v3223 = vadd.f32 %v2954, %v3105
        %v3224 = vadd.f32 %v2955, %v3110
        %v3225 = vadd.f32 %v2956, %v3113
        %v3226 = vadd.f32 %v2957, %v3118
        %v3227 = vadd.f32 %v2958, %v3121
        %v3228 = vadd.f32 %v2959, %v3126
        %v3229 = vadd.f32 %v2960, %v3129
        %v3230 = vadd.f32 %v2961, %v3134
        %v3231 = vadd.f32 %v2962, %v3137
        %v3232 = vadd.f32 %v2963, %v3142
        %v3233 = vadd.f32 %v2964, %v3145
        %v3234 = vadd.f32 %v2965, %v3150
        %v3235 = vadd.f32 %v2966, %v3153
        %v3236 = vadd.f32 %v2967, %v3158
        %v3237 = vadd.f32 %v2968, %v3161
        %v3238 = vadd.f32 %v2969, %v3166
        %v3239 = vadd.f32 %v2970, %v3169
        %v3240 = vadd.f32 %v2971, %v3174
        %v3241 = vadd.f32 %v2972, %v3177
        %v3242 = vadd.f32 %v2973, %v3182
        %v3243 = vadd.f32 %v2974, %v3185
        %v3244 = vadd.f32 %v2975, %v3190
        %v3245 = vadd.f32 %v2976, %v3193
        %v3246 = vadd.f32 %v2977, %v3198
        %v3247 = vadd.f32 %v2978, %v3201
        %v3248 = vadd.f32 %v2979, %v3206
        %v3249 = vadd.f32 %v2980, %v3209
        %v3250 = vadd.f32 %v2981, %v3214
        %v3251 = vadd.f32 %v2982, %v3217
        %s3252 = sadd.s32 %s770, 8
        %s3253 = smul.u32 %s3252, 16
        %s3254 = smul.addr %s3253, 4
        %s3255 = scalar_lea.vmem [#allocation2], %s3254
        %v3256 = vld [vmem:[%s3255] sm:$0xf]
        %v3257 = vld [vmem:[%s3255 + $0x4] sm:$0xf]
        %v3258 = vld [vmem:[%s3255 + $0x8] sm:$0xf]
        %v3259 = vld [vmem:[%s3255 + $0xc] sm:$0xf]
        %v3260 = vld [vmem:[%s3255 + $0x10] sm:$0xf]
        %v3261 = vld [vmem:[%s3255 + $0x14] sm:$0xf]
        %v3262 = vld [vmem:[%s3255 + $0x18] sm:$0xf]
        %v3263 = vld [vmem:[%s3255 + $0x1c] sm:$0xf]
        %v3264 = vld [vmem:[%s3255 + $0x20] sm:$0xf]
        %v3265 = vld [vmem:[%s3255 + $0x24] sm:$0xf]
        %v3266 = vld [vmem:[%s3255 + $0x28] sm:$0xf]
        %v3267 = vld [vmem:[%s3255 + $0x2c] sm:$0xf]
        %v3268 = vld [vmem:[%s3255 + $0x30] sm:$0xf]
        %v3269 = vld [vmem:[%s3255 + $0x34] sm:$0xf]
        %v3270 = vld [vmem:[%s3255 + $0x38] sm:$0xf]
        %v3271 = vld [vmem:[%s3255 + $0x3c] sm:$0xf]
        %v3272 = vpack.c.b16 %v1457, %v2437
        %v3273 = vpack.c.b16 %v1457, %v2438
        %v3274 = vpack.c.b16 %v1457, %v2439
        %v3275 = vpack.c.b16 %v1457, %v2440
        %v3296 = vunpack.c.l.b16 %v3256
        %v3297 = vunpack.c.l.b16 %v3257
        %v3298 = vunpack.c.l.b16 %v3258
        %v3299 = vunpack.c.l.b16 %v3259
        %v3300 = vunpack.c.l.b16 %v3260
        %v3301 = vunpack.c.l.b16 %v3261
        %v3302 = vunpack.c.l.b16 %v3262
        %v3303 = vunpack.c.l.b16 %v3263
        %v3304 = vunpack.c.l.b16 %v3264
        %v3305 = vunpack.c.l.b16 %v3265
        %v3306 = vunpack.c.l.b16 %v3266
        %v3307 = vunpack.c.l.b16 %v3267
        %v3308 = vunpack.c.l.b16 %v3268
        %v3309 = vunpack.c.l.b16 %v3269
        %v3310 = vunpack.c.l.b16 %v3270
        %v3311 = vunpack.c.l.b16 %v3271
        %v3312 = vpack.c.b16 %v3297, %v3296
        %v3313 = vpack.c.b16 %v3299, %v3298
        %v3314 = vpack.c.b16 %v3301, %v3300
        %v3315 = vpack.c.b16 %v3303, %v3302
        %v3316 = vpack.c.b16 %v3305, %v3304
        %v3317 = vpack.c.b16 %v3307, %v3306
        %v3318 = vpack.c.b16 %v3309, %v3308
        %v3319 = vpack.c.b16 %v3311, %v3310
        %3328 = vmatprep.subr.bf16.mxu0 0
        %3329 = vmatpush1.bf16.msra.mxu0 %v3319
        %3330 = vmatprep.subr.bf16.mxu0 0
        %3331 = vmatpush1.bf16.msra.mxu0 %v3318
        %3332 = vmatprep.subr.bf16.mxu0 0
        %3333 = vmatpush1.bf16.msra.mxu0 %v3317
        %3334 = vmatprep.subr.bf16.mxu0 0
        %3335 = vmatpush1.bf16.msra.mxu0 %v3316
        %3336 = vmatprep.subr.bf16.mxu0 0
        %3337 = vmatpush1.bf16.msra.mxu0 %v3315
        %3338 = vmatprep.subr.bf16.mxu0 0
        %3339 = vmatpush1.bf16.msra.mxu0 %v3314
        %3340 = vmatprep.subr.bf16.mxu0 0
        %3341 = vmatpush1.bf16.msra.mxu0 %v3313
        %3342 = vmatprep.subr.bf16.mxu0 0
        %3343 = vmatpush1.bf16.msra.mxu0 %v3312
        %3344 = vmatprep.subr.bf16.mxu0 0
        %3345 = vmatpush2.bf16.msra.mxu0 0
        %3346 = vmatprep.subr.bf16.mxu0 0
        %3347 = vmatpush2.bf16.msra.mxu0 0
        %3348 = vmatprep.subr.bf16.mxu0 0
        %3349 = vmatpush2.bf16.msra.mxu0 0
        %3350 = vmatprep.subr.bf16.mxu0 0
        %3351 = vmatpush2.bf16.msra.mxu0 0
        %3352 = vmatprep.subr.bf16.mxu0 0
        %3353 = vmatpush2.bf16.msra.mxu0 0
        %3354 = vmatprep.subr.bf16.mxu0 0
        %3355 = vmatpush2.bf16.msra.mxu0 0
        %3356 = vmatprep.subr.bf16.mxu0 0
        %3357 = vmatpush2.bf16.msra.mxu0 0
        %3358 = vmatprep.subr.bf16.mxu0 0
        %3359 = vmatpush2.bf16.msra.mxu0 0
        %3360 = vmatprep.mubr.bf16.mxu0 0
        %3361 = vmatmul.mubr.bf16.gmra.mxu0 %v1487
        %v3362 = vpop.f32.mrf.mxu0
        %v3363 = vadd.f32 0.0, %v3362
        %v3364 = vpop.f32.mrf.mxu0
        %v3365 = vpop.f32.mrf.mxu0
        %v3366 = vadd.f32 0.0, %v3365
        %v3367 = vpop.f32.mrf.mxu0
        %3368 = vmatprep.mubr.bf16.mxu0 0
        %3369 = vmatmul.mubr.bf16.gmra.mxu0 %v1488
        %v3370 = vpop.f32.mrf.mxu0
        %v3371 = vadd.f32 0.0, %v3370
        %v3372 = vpop.f32.mrf.mxu0
        %v3373 = vpop.f32.mrf.mxu0
        %v3374 = vadd.f32 0.0, %v3373
        %v3375 = vpop.f32.mrf.mxu0
        %3376 = vmatprep.mubr.bf16.mxu0 0
        %3377 = vmatmul.mubr.bf16.gmra.mxu0 %v1489
        %v3378 = vpop.f32.mrf.mxu0
        %v3379 = vadd.f32 0.0, %v3378
        %v3380 = vpop.f32.mrf.mxu0
        %v3381 = vpop.f32.mrf.mxu0
        %v3382 = vadd.f32 0.0, %v3381
        %v3383 = vpop.f32.mrf.mxu0
        %3384 = vmatprep.mubr.bf16.mxu0 0
        %3385 = vmatmul.mubr.bf16.gmra.mxu0 %v3272
        %v3386 = vpop.f32.mrf.mxu0
        %v3387 = vadd.f32 0.0, %v3386
        %v3388 = vpop.f32.mrf.mxu0
        %v3389 = vpop.f32.mrf.mxu0
        %v3390 = vadd.f32 0.0, %v3389
        %v3391 = vpop.f32.mrf.mxu0
        %3392 = vmatprep.mubr.bf16.mxu0 0
        %3393 = vmatmul.mubr.bf16.gmra.mxu0 %v1491
        %v3394 = vpop.f32.mrf.mxu0
        %v3395 = vadd.f32 0.0, %v3394
        %v3396 = vpop.f32.mrf.mxu0
        %v3397 = vpop.f32.mrf.mxu0
        %v3398 = vadd.f32 0.0, %v3397
        %v3399 = vpop.f32.mrf.mxu0
        %3400 = vmatprep.mubr.bf16.mxu0 0
        %3401 = vmatmul.mubr.bf16.gmra.mxu0 %v1492
        %v3402 = vpop.f32.mrf.mxu0
        %v3403 = vadd.f32 0.0, %v3402
        %v3404 = vpop.f32.mrf.mxu0
        %v3405 = vpop.f32.mrf.mxu0
        %v3406 = vadd.f32 0.0, %v3405
        %v3407 = vpop.f32.mrf.mxu0
        %3408 = vmatprep.mubr.bf16.mxu0 0
        %3409 = vmatmul.mubr.bf16.gmra.mxu0 %v1493
        %v3410 = vpop.f32.mrf.mxu0
        %v3411 = vadd.f32 0.0, %v3410
        %v3412 = vpop.f32.mrf.mxu0
        %v3413 = vpop.f32.mrf.mxu0
        %v3414 = vadd.f32 0.0, %v3413
        %v3415 = vpop.f32.mrf.mxu0
        %3416 = vmatprep.mubr.bf16.mxu0 0
        %3417 = vmatmul.mubr.bf16.gmra.mxu0 %v3273
        %v3418 = vpop.f32.mrf.mxu0
        %v3419 = vadd.f32 0.0, %v3418
        %v3420 = vpop.f32.mrf.mxu0
        %v3421 = vpop.f32.mrf.mxu0
        %v3422 = vadd.f32 0.0, %v3421
        %v3423 = vpop.f32.mrf.mxu0
        %3424 = vmatprep.mubr.bf16.mxu0 0
        %3425 = vmatmul.mubr.bf16.gmra.mxu0 %v1495
        %v3426 = vpop.f32.mrf.mxu0
        %v3427 = vadd.f32 0.0, %v3426
        %v3428 = vpop.f32.mrf.mxu0
        %v3429 = vpop.f32.mrf.mxu0
        %v3430 = vadd.f32 0.0, %v3429
        %v3431 = vpop.f32.mrf.mxu0
        %3432 = vmatprep.mubr.bf16.mxu0 0
        %3433 = vmatmul.mubr.bf16.gmra.mxu0 %v1496
        %v3434 = vpop.f32.mrf.mxu0
        %v3435 = vadd.f32 0.0, %v3434
        %v3436 = vpop.f32.mrf.mxu0
        %v3437 = vpop.f32.mrf.mxu0
        %v3438 = vadd.f32 0.0, %v3437
        %v3439 = vpop.f32.mrf.mxu0
        %3440 = vmatprep.mubr.bf16.mxu0 0
        %3441 = vmatmul.mubr.bf16.gmra.mxu0 %v1497
        %v3442 = vpop.f32.mrf.mxu0
        %v3443 = vadd.f32 0.0, %v3442
        %v3444 = vpop.f32.mrf.mxu0
        %v3445 = vpop.f32.mrf.mxu0
        %v3446 = vadd.f32 0.0, %v3445
        %v3447 = vpop.f32.mrf.mxu0
        %3448 = vmatprep.mubr.bf16.mxu0 0
        %3449 = vmatmul.mubr.bf16.gmra.mxu0 %v3274
        %v3450 = vpop.f32.mrf.mxu0
        %v3451 = vadd.f32 0.0, %v3450
        %v3452 = vpop.f32.mrf.mxu0
        %v3453 = vpop.f32.mrf.mxu0
        %v3454 = vadd.f32 0.0, %v3453
        %v3455 = vpop.f32.mrf.mxu0
        %3456 = vmatprep.mubr.bf16.mxu0 0
        %3457 = vmatmul.mubr.bf16.gmra.mxu0 %v1499
        %v3458 = vpop.f32.mrf.mxu0
        %v3459 = vadd.f32 0.0, %v3458
        %v3460 = vpop.f32.mrf.mxu0
        %v3461 = vpop.f32.mrf.mxu0
        %v3462 = vadd.f32 0.0, %v3461
        %v3463 = vpop.f32.mrf.mxu0
        %3464 = vmatprep.mubr.bf16.mxu0 0
        %3465 = vmatmul.mubr.bf16.gmra.mxu0 %v1500
        %v3466 = vpop.f32.mrf.mxu0
        %v3467 = vadd.f32 0.0, %v3466
        %v3468 = vpop.f32.mrf.mxu0
        %v3469 = vpop.f32.mrf.mxu0
        %v3470 = vadd.f32 0.0, %v3469
        %v3471 = vpop.f32.mrf.mxu0
        %3472 = vmatprep.mubr.bf16.mxu0 0
        %3473 = vmatmul.mubr.bf16.gmra.mxu0 %v1501
        %v3474 = vpop.f32.mrf.mxu0
        %v3475 = vadd.f32 0.0, %v3474
        %v3476 = vpop.f32.mrf.mxu0
        %v3477 = vpop.f32.mrf.mxu0
        %v3478 = vadd.f32 0.0, %v3477
        %v3479 = vpop.f32.mrf.mxu0
        %3480 = vmatprep.mubr.bf16.mxu0 0
        %3481 = vmatmul.mubr.bf16.gmra.mxu0 %v3275
        %v3482 = vpop.f32.mrf.mxu0
        %v3483 = vadd.f32 0.0, %v3482
        %v3484 = vpop.f32.mrf.mxu0
        %v3485 = vpop.f32.mrf.mxu0
        %v3486 = vadd.f32 0.0, %v3485
        %v3487 = vpop.f32.mrf.mxu0
        %3488 = vdwg.mxu0
        %v3489 = vadd.f32 %v3220, %v3363
        %v3490 = vadd.f32 %v3221, %v3366
        %v3491 = vadd.f32 %v3222, %v3371
        %v3492 = vadd.f32 %v3223, %v3374
        %v3493 = vadd.f32 %v3224, %v3379
        %v3494 = vadd.f32 %v3225, %v3382
        %v3495 = vadd.f32 %v3226, %v3387
        %v3496 = vadd.f32 %v3227, %v3390
        %v3497 = vadd.f32 %v3228, %v3395
        %v3498 = vadd.f32 %v3229, %v3398
        %v3499 = vadd.f32 %v3230, %v3403
        %v3500 = vadd.f32 %v3231, %v3406
        %v3501 = vadd.f32 %v3232, %v3411
        %v3502 = vadd.f32 %v3233, %v3414
        %v3503 = vadd.f32 %v3234, %v3419
        %v3504 = vadd.f32 %v3235, %v3422
        %v3505 = vadd.f32 %v3236, %v3427
        %v3506 = vadd.f32 %v3237, %v3430
        %v3507 = vadd.f32 %v3238, %v3435
        %v3508 = vadd.f32 %v3239, %v3438
        %v3509 = vadd.f32 %v3240, %v3443
        %v3510 = vadd.f32 %v3241, %v3446
        %v3511 = vadd.f32 %v3242, %v3451
        %v3512 = vadd.f32 %v3243, %v3454
        %v3513 = vadd.f32 %v3244, %v3459
        %v3514 = vadd.f32 %v3245, %v3462
        %v3515 = vadd.f32 %v3246, %v3467
        %v3516 = vadd.f32 %v3247, %v3470
        %v3517 = vadd.f32 %v3248, %v3475
        %v3518 = vadd.f32 %v3249, %v3478
        %v3519 = vadd.f32 %v3250, %v3483
        %v3520 = vadd.f32 %v3251, %v3486
        %v3522 = vlaneseq
        %v3523 = vshrl.u32 %v3522, 7
        %v3524 = vsub.s32 0, %v3523
        %v3525 = vrot.slane %v351, %v3524
        %v3527 = vadd.f32 %v3489, %v3525
        %v3528 = vadd.f32 %v3490, %v3525
        %v3529 = vadd.f32 %v3491, %v3525
        %v3530 = vadd.f32 %v3492, %v3525
        %v3531 = vadd.f32 %v3493, %v3525
        %v3532 = vadd.f32 %v3494, %v3525
        %v3533 = vadd.f32 %v3495, %v3525
        %v3534 = vadd.f32 %v3496, %v3525
        %v3535 = vadd.f32 %v3497, %v3525
        %v3536 = vadd.f32 %v3498, %v3525
        %v3537 = vadd.f32 %v3499, %v3525
        %v3538 = vadd.f32 %v3500, %v3525
        %v3539 = vadd.f32 %v3501, %v3525
        %v3540 = vadd.f32 %v3502, %v3525
        %v3541 = vadd.f32 %v3503, %v3525
        %v3542 = vadd.f32 %v3504, %v3525
        %v3543 = vadd.f32 %v3505, %v3525
        %v3544 = vadd.f32 %v3506, %v3525
        %v3545 = vadd.f32 %v3507, %v3525
        %v3546 = vadd.f32 %v3508, %v3525
        %v3547 = vadd.f32 %v3509, %v3525
        %v3548 = vadd.f32 %v3510, %v3525
        %v3549 = vadd.f32 %v3511, %v3525
        %v3550 = vadd.f32 %v3512, %v3525
        %v3551 = vadd.f32 %v3513, %v3525
        %v3552 = vadd.f32 %v3514, %v3525
        %v3553 = vadd.f32 %v3515, %v3525
        %v3554 = vadd.f32 %v3516, %v3525
        %v3555 = vadd.f32 %v3517, %v3525
        %v3556 = vadd.f32 %v3518, %v3525
        %v3557 = vadd.f32 %v3519, %v3525
        %v3558 = vadd.f32 %v3520, %v3525
        %v3559 = vmax.f32 %v3527, 0.0
        %v3560 = vmax.f32 %v3528, 0.0
        %v3561 = vmax.f32 %v3529, 0.0
        %v3562 = vmax.f32 %v3530, 0.0
        %v3563 = vmax.f32 %v3531, 0.0
        %v3564 = vmax.f32 %v3532, 0.0
        %v3565 = vmax.f32 %v3533, 0.0
        %v3566 = vmax.f32 %v3534, 0.0
        %v3567 = vmax.f32 %v3535, 0.0
        %v3568 = vmax.f32 %v3536, 0.0
        %v3569 = vmax.f32 %v3537, 0.0
        %v3570 = vmax.f32 %v3538, 0.0
        %v3571 = vmax.f32 %v3539, 0.0
        %v3572 = vmax.f32 %v3540, 0.0
        %v3573 = vmax.f32 %v3541, 0.0
        %v3574 = vmax.f32 %v3542, 0.0
        %v3575 = vmax.f32 %v3543, 0.0
        %v3576 = vmax.f32 %v3544, 0.0
        %v3577 = vmax.f32 %v3545, 0.0
        %v3578 = vmax.f32 %v3546, 0.0
        %v3579 = vmax.f32 %v3547, 0.0
        %v3580 = vmax.f32 %v3548, 0.0
        %v3581 = vmax.f32 %v3549, 0.0
        %v3582 = vmax.f32 %v3550, 0.0
        %v3583 = vmax.f32 %v3551, 0.0
        %v3584 = vmax.f32 %v3552, 0.0
        %v3585 = vmax.f32 %v3553, 0.0
        %v3586 = vmax.f32 %v3554, 0.0
        %v3587 = vmax.f32 %v3555, 0.0
        %v3588 = vmax.f32 %v3556, 0.0
        %v3589 = vmax.f32 %v3557, 0.0
        %v3590 = vmax.f32 %v3558, 0.0
        %v3591 = vpack.c.bf16 %v3559, %v3559
        %v3592 = vpack.c.bf16 %v3560, %v3560
        %v3593 = vpack.c.bf16 %v3561, %v3561
        %v3594 = vpack.c.bf16 %v3562, %v3562
        %v3595 = vpack.c.bf16 %v3563, %v3563
        %v3596 = vpack.c.bf16 %v3564, %v3564
        %v3597 = vpack.c.bf16 %v3565, %v3565
        %v3598 = vpack.c.bf16 %v3566, %v3566
        %v3599 = vpack.c.bf16 %v3567, %v3567
        %v3600 = vpack.c.bf16 %v3568, %v3568
        %v3601 = vpack.c.bf16 %v3569, %v3569
        %v3602 = vpack.c.bf16 %v3570, %v3570
        %v3603 = vpack.c.bf16 %v3571, %v3571
        %v3604 = vpack.c.bf16 %v3572, %v3572
        %v3605 = vpack.c.bf16 %v3573, %v3573
        %v3606 = vpack.c.bf16 %v3574, %v3574
        %v3607 = vpack.c.bf16 %v3575, %v3575
        %v3608 = vpack.c.bf16 %v3576, %v3576
        %v3609 = vpack.c.bf16 %v3577, %v3577
        %v3610 = vpack.c.bf16 %v3578, %v3578
        %v3611 = vpack.c.bf16 %v3579, %v3579
        %v3612 = vpack.c.bf16 %v3580, %v3580
        %v3613 = vpack.c.bf16 %v3581, %v3581
        %v3614 = vpack.c.bf16 %v3582, %v3582
        %v3615 = vpack.c.bf16 %v3583, %v3583
        %v3616 = vpack.c.bf16 %v3584, %v3584
        %v3617 = vpack.c.bf16 %v3585, %v3585
        %v3618 = vpack.c.bf16 %v3586, %v3586
        %v3619 = vpack.c.bf16 %v3587, %v3587
        %v3620 = vpack.c.bf16 %v3588, %v3588
        %v3621 = vpack.c.bf16 %v3589, %v3589
        %v3622 = vpack.c.bf16 %v3590, %v3590
        %v3624 = vshrl.u32 %v3591, 16
        %v3626 = vrot.slane %v3624, 7
        %v3627 = vshll.u32 %v3591, 16
        %v3629 = vor.u32 %v3626, %v3627
        %v3631 = vshrl.u32 %v3592, 16
        %v3633 = vrot.slane %v3631, 7
        %v3634 = vshll.u32 %v3592, 16
        %v3636 = vor.u32 %v3633, %v3634
        %v3638 = vshrl.u32 %v3593, 16
        %v3640 = vrot.slane %v3638, 7
        %v3641 = vshll.u32 %v3593, 16
        %v3643 = vor.u32 %v3640, %v3641
        %v3645 = vshrl.u32 %v3594, 16
        %v3647 = vrot.slane %v3645, 7
        %v3648 = vshll.u32 %v3594, 16
        %v3650 = vor.u32 %v3647, %v3648
        %v3652 = vshrl.u32 %v3595, 16
        %v3654 = vrot.slane %v3652, 7
        %v3655 = vshll.u32 %v3595, 16
        %v3657 = vor.u32 %v3654, %v3655
        %v3659 = vshrl.u32 %v3596, 16
        %v3661 = vrot.slane %v3659, 7
        %v3662 = vshll.u32 %v3596, 16
        %v3664 = vor.u32 %v3661, %v3662
        %v3666 = vshrl.u32 %v3597, 16
        %v3668 = vrot.slane %v3666, 7
        %v3669 = vshll.u32 %v3597, 16
        %v3671 = vor.u32 %v3668, %v3669
        %v3673 = vshrl.u32 %v3599, 16
        %v3675 = vrot.slane %v3673, 7
        %v3676 = vshll.u32 %v3599, 16
        %v3678 = vor.u32 %v3675, %v3676
        %v3680 = vshrl.u32 %v3600, 16
        %v3682 = vrot.slane %v3680, 7
        %v3683 = vshll.u32 %v3600, 16
        %v3685 = vor.u32 %v3682, %v3683
        %v3687 = vshrl.u32 %v3601, 16
        %v3689 = vrot.slane %v3687, 7
        %v3690 = vshll.u32 %v3601, 16
        %v3692 = vor.u32 %v3689, %v3690
        %v3694 = vshrl.u32 %v3602, 16
        %v3696 = vrot.slane %v3694, 7
        %v3697 = vshll.u32 %v3602, 16
        %v3699 = vor.u32 %v3696, %v3697
        %v3701 = vshrl.u32 %v3603, 16
        %v3703 = vrot.slane %v3701, 7
        %v3704 = vshll.u32 %v3603, 16
        %v3706 = vor.u32 %v3703, %v3704
        %v3708 = vshrl.u32 %v3604, 16
        %v3710 = vrot.slane %v3708, 7
        %v3711 = vshll.u32 %v3604, 16
        %v3713 = vor.u32 %v3710, %v3711
        %v3715 = vshrl.u32 %v3605, 16
        %v3717 = vrot.slane %v3715, 7
        %v3718 = vshll.u32 %v3605, 16
        %v3720 = vor.u32 %v3717, %v3718
        %v3722 = vshrl.u32 %v3607, 16
        %v3724 = vrot.slane %v3722, 7
        %v3725 = vshll.u32 %v3607, 16
        %v3727 = vor.u32 %v3724, %v3725
        %v3729 = vshrl.u32 %v3608, 16
        %v3731 = vrot.slane %v3729, 7
        %v3732 = vshll.u32 %v3608, 16
        %v3734 = vor.u32 %v3731, %v3732
        %v3736 = vshrl.u32 %v3609, 16
        %v3738 = vrot.slane %v3736, 7
        %v3739 = vshll.u32 %v3609, 16
        %v3741 = vor.u32 %v3738, %v3739
        %v3743 = vshrl.u32 %v3610, 16
        %v3745 = vrot.slane %v3743, 7
        %v3746 = vshll.u32 %v3610, 16
        %v3748 = vor.u32 %v3745, %v3746
        %v3750 = vshrl.u32 %v3611, 16
        %v3752 = vrot.slane %v3750, 7
        %v3753 = vshll.u32 %v3611, 16
        %v3755 = vor.u32 %v3752, %v3753
        %v3757 = vshrl.u32 %v3612, 16
        %v3759 = vrot.slane %v3757, 7
        %v3760 = vshll.u32 %v3612, 16
        %v3762 = vor.u32 %v3759, %v3760
        %v3764 = vshrl.u32 %v3613, 16
        %v3766 = vrot.slane %v3764, 7
        %v3767 = vshll.u32 %v3613, 16
        %v3769 = vor.u32 %v3766, %v3767
        %v3771 = vshrl.u32 %v3615, 16
        %v3773 = vrot.slane %v3771, 7
        %v3774 = vshll.u32 %v3615, 16
        %v3776 = vor.u32 %v3773, %v3774
        %v3778 = vshrl.u32 %v3616, 16
        %v3780 = vrot.slane %v3778, 7
        %v3781 = vshll.u32 %v3616, 16
        %v3783 = vor.u32 %v3780, %v3781
        %v3785 = vshrl.u32 %v3617, 16
        %v3787 = vrot.slane %v3785, 7
        %v3788 = vshll.u32 %v3617, 16
        %v3790 = vor.u32 %v3787, %v3788
        %v3792 = vshrl.u32 %v3618, 16
        %v3794 = vrot.slane %v3792, 7
        %v3795 = vshll.u32 %v3618, 16
        %v3797 = vor.u32 %v3794, %v3795
        %v3799 = vshrl.u32 %v3619, 16
        %v3801 = vrot.slane %v3799, 7
        %v3802 = vshll.u32 %v3619, 16
        %v3804 = vor.u32 %v3801, %v3802
        %v3806 = vshrl.u32 %v3620, 16
        %v3808 = vrot.slane %v3806, 7
        %v3809 = vshll.u32 %v3620, 16
        %v3811 = vor.u32 %v3808, %v3809
        %v3813 = vshrl.u32 %v3621, 16
        %v3815 = vrot.slane %v3813, 7
        %v3816 = vshll.u32 %v3621, 16
        %v3818 = vor.u32 %v3815, %v3816
        %v3847 = vsel %vm621, 0, %v3629
        %v3848 = vsel %vm621, 0, %v3636
        %v3849 = vsel %vm621, 0, %v3643
        %v3850 = vsel %vm621, 0, %v3650
        %v3851 = vsel %vm621, 0, %v3657
        %v3852 = vsel %vm621, 0, %v3664
        %v3853 = vsel %vm621, 0, %v3671
        %v3854 = vsel %vm621, 0, %v3678
        %v3855 = vsel %vm621, 0, %v3685
        %v3856 = vsel %vm621, 0, %v3692
        %v3857 = vsel %vm621, 0, %v3699
        %v3858 = vsel %vm621, 0, %v3706
        %v3859 = vsel %vm621, 0, %v3713
        %v3860 = vsel %vm621, 0, %v3720
        %v3861 = vsel %vm621, 0, %v3727
        %v3862 = vsel %vm621, 0, %v3734
        %v3863 = vsel %vm621, 0, %v3741
        %v3864 = vsel %vm621, 0, %v3748
        %v3865 = vsel %vm621, 0, %v3755
        %v3866 = vsel %vm621, 0, %v3762
        %v3867 = vsel %vm621, 0, %v3769
        %v3868 = vsel %vm621, 0, %v3776
        %v3869 = vsel %vm621, 0, %v3783
        %v3870 = vsel %vm621, 0, %v3790
        %v3871 = vsel %vm621, 0, %v3797
        %v3872 = vsel %vm621, 0, %v3804
        %v3873 = vsel %vm621, 0, %v3811
        %v3874 = vsel %vm621, 0, %v3818
        %v3875 = vrot.slane %v3627, 1
        %v3876 = vor.u32 %v3624, %v3875
        %v3877 = vrot.slane %v3634, 1
        %v3878 = vor.u32 %v3631, %v3877
        %v3879 = vrot.slane %v3641, 1
        %v3880 = vor.u32 %v3638, %v3879
        %v3881 = vrot.slane %v3648, 1
        %v3882 = vor.u32 %v3645, %v3881
        %v3883 = vrot.slane %v3655, 1
        %v3884 = vor.u32 %v3652, %v3883
        %v3885 = vrot.slane %v3662, 1
        %v3886 = vor.u32 %v3659, %v3885
        %v3887 = vrot.slane %v3669, 1
        %v3888 = vor.u32 %v3666, %v3887
        %v3889 = vrot.slane %v3676, 1
        %v3890 = vor.u32 %v3673, %v3889
        %v3891 = vrot.slane %v3683, 1
        %v3892 = vor.u32 %v3680, %v3891
        %v3893 = vrot.slane %v3690, 1
        %v3894 = vor.u32 %v3687, %v3893
        %v3895 = vrot.slane %v3697, 1
        %v3896 = vor.u32 %v3694, %v3895
        %v3897 = vrot.slane %v3704, 1
        %v3898 = vor.u32 %v3701, %v3897
        %v3899 = vrot.slane %v3711, 1
        %v3900 = vor.u32 %v3708, %v3899
        %v3901 = vrot.slane %v3718, 1
        %v3902 = vor.u32 %v3715, %v3901
        %v3903 = vrot.slane %v3725, 1
        %v3904 = vor.u32 %v3722, %v3903
        %v3905 = vrot.slane %v3732, 1
        %v3906 = vor.u32 %v3729, %v3905
        %v3907 = vrot.slane %v3739, 1
        %v3908 = vor.u32 %v3736, %v3907
        %v3909 = vrot.slane %v3746, 1
        %v3910 = vor.u32 %v3743, %v3909
        %v3911 = vrot.slane %v3753, 1
        %v3912 = vor.u32 %v3750, %v3911
        %v3913 = vrot.slane %v3760, 1
        %v3914 = vor.u32 %v3757, %v3913
        %v3915 = vrot.slane %v3767, 1
        %v3916 = vor.u32 %v3764, %v3915
        %v3917 = vrot.slane %v3774, 1
        %v3918 = vor.u32 %v3771, %v3917
        %v3919 = vrot.slane %v3781, 1
        %v3920 = vor.u32 %v3778, %v3919
        %v3921 = vrot.slane %v3788, 1
        %v3922 = vor.u32 %v3785, %v3921
        %v3923 = vrot.slane %v3795, 1
        %v3924 = vor.u32 %v3792, %v3923
        %v3925 = vrot.slane %v3802, 1
        %v3926 = vor.u32 %v3799, %v3925
        %v3927 = vrot.slane %v3809, 1
        %v3928 = vor.u32 %v3806, %v3927
        %v3929 = vrot.slane %v3816, 1
        %v3930 = vor.u32 %v3813, %v3929
        %v3959 = vsel %vm740, %v3876, 0
        %v3960 = vsel %vm740, %v3878, 0
        %v3961 = vsel %vm740, %v3880, 0
        %v3962 = vsel %vm740, %v3882, 0
        %v3963 = vsel %vm740, %v3884, 0
        %v3964 = vsel %vm740, %v3886, 0
        %v3965 = vsel %vm740, %v3888, 0
        %v3966 = vsel %vm740, %v3890, 0
        %v3967 = vsel %vm740, %v3892, 0
        %v3968 = vsel %vm740, %v3894, 0
        %v3969 = vsel %vm740, %v3896, 0
        %v3970 = vsel %vm740, %v3898, 0
        %v3971 = vsel %vm740, %v3900, 0
        %v3972 = vsel %vm740, %v3902, 0
        %v3973 = vsel %vm740, %v3904, 0
        %v3974 = vsel %vm740, %v3906, 0
        %v3975 = vsel %vm740, %v3908, 0
        %v3976 = vsel %vm740, %v3910, 0
        %v3977 = vsel %vm740, %v3912, 0
        %v3978 = vsel %vm740, %v3914, 0
        %v3979 = vsel %vm740, %v3916, 0
        %v3980 = vsel %vm740, %v3918, 0
        %v3981 = vsel %vm740, %v3920, 0
        %v3982 = vsel %vm740, %v3922, 0
        %v3983 = vsel %vm740, %v3924, 0
        %v3984 = vsel %vm740, %v3926, 0
        %v3985 = vsel %vm740, %v3928, 0
        %v3986 = vsel %vm740, %v3930, 0
        %s3987 = smul.addr %s771, 4
        %s3988 = scalar_lea.vmem [#allocation4], %s3987
        %v3989 = vld [vmem:[%s3988] sm:$0xf]
        %v3990 = vld [vmem:[%s3988 + $0x4] sm:$0xf]
        %v3991 = vld [vmem:[%s3988 + $0x8] sm:$0xf]
        %v3992 = vld [vmem:[%s3988 + $0xc] sm:$0xf]
        %v3993 = vld [vmem:[%s3988 + $0x10] sm:$0xf]
        %v3994 = vld [vmem:[%s3988 + $0x14] sm:$0xf]
        %v3995 = vld [vmem:[%s3988 + $0x18] sm:$0xf]
        %v3996 = vld [vmem:[%s3988 + $0x1c] sm:$0xf]
        %v3997 = vld [vmem:[%s3988 + $0x20] sm:$0xf]
        %v3998 = vld [vmem:[%s3988 + $0x24] sm:$0xf]
        %v3999 = vld [vmem:[%s3988 + $0x28] sm:$0xf]
        %v4000 = vld [vmem:[%s3988 + $0x2c] sm:$0xf]
        %v4001 = vld [vmem:[%s3988 + $0x30] sm:$0xf]
        %v4002 = vld [vmem:[%s3988 + $0x34] sm:$0xf]
        %v4003 = vld [vmem:[%s3988 + $0x38] sm:$0xf]
        %v4004 = vld [vmem:[%s3988 + $0x3c] sm:$0xf]
        %s4005 = smul.addr %s791, 4
        %s4006 = scalar_lea.vmem [#allocation4], %s4005
        %v4007 = vld [vmem:[%s4006] sm:$0xf]
        %v4008 = vld [vmem:[%s4006 + $0x4] sm:$0xf]
        %v4009 = vld [vmem:[%s4006 + $0x8] sm:$0xf]
        %v4010 = vld [vmem:[%s4006 + $0xc] sm:$0xf]
        %v4011 = vld [vmem:[%s4006 + $0x10] sm:$0xf]
        %v4012 = vld [vmem:[%s4006 + $0x14] sm:$0xf]
        %v4013 = vld [vmem:[%s4006 + $0x18] sm:$0xf]
        %v4014 = vld [vmem:[%s4006 + $0x1c] sm:$0xf]
        %v4015 = vld [vmem:[%s4006 + $0x20] sm:$0xf]
        %v4016 = vld [vmem:[%s4006 + $0x24] sm:$0xf]
        %v4017 = vld [vmem:[%s4006 + $0x28] sm:$0xf]
        %v4018 = vld [vmem:[%s4006 + $0x2c] sm:$0xf]
        %v4019 = vld [vmem:[%s4006 + $0x30] sm:$0xf]
        %v4020 = vld [vmem:[%s4006 + $0x34] sm:$0xf]
        %v4021 = vld [vmem:[%s4006 + $0x38] sm:$0xf]
        %v4022 = vld [vmem:[%s4006 + $0x3c] sm:$0xf]
        %v4051 = vunpack.c.l.b16 %v3591
        %v4052 = vunpack.c.l.b16 %v3592
        %v4053 = vunpack.c.l.b16 %v3593
        %v4054 = vunpack.c.l.b16 %v3594
        %v4055 = vunpack.c.l.b16 %v3595
        %v4056 = vunpack.c.l.b16 %v3596
        %v4057 = vunpack.c.l.b16 %v3597
        %v4058 = vunpack.c.l.b16 %v3599
        %v4059 = vunpack.c.l.b16 %v3600
        %v4060 = vunpack.c.l.b16 %v3601
        %v4061 = vunpack.c.l.b16 %v3602
        %v4062 = vunpack.c.l.b16 %v3603
        %v4063 = vunpack.c.l.b16 %v3604
        %v4064 = vunpack.c.l.b16 %v3605
        %v4065 = vunpack.c.l.b16 %v3607
        %v4066 = vunpack.c.l.b16 %v3608
        %v4067 = vunpack.c.l.b16 %v3609
        %v4068 = vunpack.c.l.b16 %v3610
        %v4069 = vunpack.c.l.b16 %v3611
        %v4070 = vunpack.c.l.b16 %v3612
        %v4071 = vunpack.c.l.b16 %v3613
        %v4072 = vunpack.c.l.b16 %v3615
        %v4073 = vunpack.c.l.b16 %v3616
        %v4074 = vunpack.c.l.b16 %v3617
        %v4075 = vunpack.c.l.b16 %v3618
        %v4076 = vunpack.c.l.b16 %v3619
        %v4077 = vunpack.c.l.b16 %v3620
        %v4078 = vunpack.c.l.b16 %v3621
        %v4079 = vpack.c.b16 %v4051, %v839
        %v4080 = vpack.c.b16 %v4053, %v4052
        %v4081 = vpack.c.b16 %v4055, %v4054
        %v4082 = vpack.c.b16 %v4057, %v4056
        %v4083 = vpack.c.b16 %v4058, %v839
        %v4084 = vpack.c.b16 %v4060, %v4059
        %v4085 = vpack.c.b16 %v4062, %v4061
        %v4086 = vpack.c.b16 %v4064, %v4063
        %v4087 = vpack.c.b16 %v4065, %v839
        %v4088 = vpack.c.b16 %v4067, %v4066
        %v4089 = vpack.c.b16 %v4069, %v4068
        %v4090 = vpack.c.b16 %v4071, %v4070
        %v4091 = vpack.c.b16 %v4072, %v839
        %v4092 = vpack.c.b16 %v4074, %v4073
        %v4093 = vpack.c.b16 %v4076, %v4075
        %v4094 = vpack.c.b16 %v4078, %v4077
        %v4127 = vunpack.c.l.b16 %v4007
        %v4128 = vunpack.c.l.b16 %v4008
        %v4129 = vunpack.c.l.b16 %v4009
        %v4130 = vunpack.c.l.b16 %v4010
        %v4131 = vunpack.c.l.b16 %v4011
        %v4132 = vunpack.c.l.b16 %v4012
        %v4133 = vunpack.c.l.b16 %v4013
        %v4134 = vunpack.c.l.b16 %v4014
        %v4135 = vunpack.c.l.b16 %v4015
        %v4136 = vunpack.c.l.b16 %v4016
        %v4137 = vunpack.c.l.b16 %v4017
        %v4138 = vunpack.c.l.b16 %v4018
        %v4139 = vunpack.c.l.b16 %v4019
        %v4140 = vunpack.c.l.b16 %v4020
        %v4141 = vunpack.c.l.b16 %v4021
        %v4142 = vunpack.c.l.b16 %v4022
        %v4143 = vpack.c.b16 %v4128, %v4127
        %v4144 = vpack.c.b16 %v4130, %v4129
        %v4145 = vpack.c.b16 %v4132, %v4131
        %v4146 = vpack.c.b16 %v4134, %v4133
        %v4147 = vpack.c.b16 %v4136, %v4135
        %v4148 = vpack.c.b16 %v4138, %v4137
        %v4149 = vpack.c.b16 %v4140, %v4139
        %v4150 = vpack.c.b16 %v4142, %v4141
        %4159 = vmatprep.subr.bf16.mxu0 0
        %4160 = vmatpush1.bf16.msra.mxu0 %v4150
        %4161 = vmatprep.subr.bf16.mxu0 0
        %4162 = vmatpush1.bf16.msra.mxu0 %v4149
        %4163 = vmatprep.subr.bf16.mxu0 0
        %4164 = vmatpush1.bf16.msra.mxu0 %v4148
        %4165 = vmatprep.subr.bf16.mxu0 0
        %4166 = vmatpush1.bf16.msra.mxu0 %v4147
        %4167 = vmatprep.subr.bf16.mxu0 0
        %4168 = vmatpush1.bf16.msra.mxu0 %v4146
        %4169 = vmatprep.subr.bf16.mxu0 0
        %4170 = vmatpush1.bf16.msra.mxu0 %v4145
        %4171 = vmatprep.subr.bf16.mxu0 0
        %4172 = vmatpush1.bf16.msra.mxu0 %v4144
        %4173 = vmatprep.subr.bf16.mxu0 0
        %4174 = vmatpush1.bf16.msra.mxu0 %v4143
        %4175 = vmatprep.subr.bf16.mxu0 0
        %4176 = vmatpush2.bf16.msra.mxu0 0
        %4177 = vmatprep.subr.bf16.mxu0 0
        %4178 = vmatpush2.bf16.msra.mxu0 0
        %4179 = vmatprep.subr.bf16.mxu0 0
        %4180 = vmatpush2.bf16.msra.mxu0 0
        %4181 = vmatprep.subr.bf16.mxu0 0
        %4182 = vmatpush2.bf16.msra.mxu0 0
        %4183 = vmatprep.subr.bf16.mxu0 0
        %4184 = vmatpush2.bf16.msra.mxu0 0
        %4185 = vmatprep.subr.bf16.mxu0 0
        %4186 = vmatpush2.bf16.msra.mxu0 0
        %4187 = vmatprep.subr.bf16.mxu0 0
        %4188 = vmatpush2.bf16.msra.mxu0 0
        %4189 = vmatprep.subr.bf16.mxu0 0
        %4190 = vmatpush2.bf16.msra.mxu0 0
        %4191 = vmatprep.mubr.bf16.mxu0 0
        %4192 = vmatmul.mubr.bf16.gmra.mxu0 %v4079
        %v4193 = vpop.f32.mrf.mxu0
        %v4194 = vadd.f32 0.0, %v4193
        %v4195 = vpop.f32.mrf.mxu0
        %v4196 = vpop.f32.mrf.mxu0
        %v4197 = vadd.f32 0.0, %v4196
        %v4198 = vpop.f32.mrf.mxu0
        %4199 = vmatprep.mubr.bf16.mxu0 0
        %4200 = vmatmul.mubr.bf16.gmra.mxu0 %v4080
        %v4201 = vpop.f32.mrf.mxu0
        %v4202 = vadd.f32 0.0, %v4201
        %v4203 = vpop.f32.mrf.mxu0
        %v4204 = vpop.f32.mrf.mxu0
        %v4205 = vadd.f32 0.0, %v4204
        %v4206 = vpop.f32.mrf.mxu0
        %4207 = vmatprep.mubr.bf16.mxu0 0
        %4208 = vmatmul.mubr.bf16.gmra.mxu0 %v4081
        %v4209 = vpop.f32.mrf.mxu0
        %v4210 = vadd.f32 0.0, %v4209
        %v4211 = vpop.f32.mrf.mxu0
        %v4212 = vpop.f32.mrf.mxu0
        %v4213 = vadd.f32 0.0, %v4212
        %v4214 = vpop.f32.mrf.mxu0
        %4215 = vmatprep.mubr.bf16.mxu0 0
        %4216 = vmatmul.mubr.bf16.gmra.mxu0 %v4082
        %v4217 = vpop.f32.mrf.mxu0
        %v4218 = vadd.f32 0.0, %v4217
        %v4219 = vpop.f32.mrf.mxu0
        %v4220 = vpop.f32.mrf.mxu0
        %v4221 = vadd.f32 0.0, %v4220
        %v4222 = vpop.f32.mrf.mxu0
        %4223 = vmatprep.mubr.bf16.mxu0 0
        %4224 = vmatmul.mubr.bf16.gmra.mxu0 %v4083
        %v4225 = vpop.f32.mrf.mxu0
        %v4226 = vadd.f32 0.0, %v4225
        %v4227 = vpop.f32.mrf.mxu0
        %v4228 = vpop.f32.mrf.mxu0
        %v4229 = vadd.f32 0.0, %v4228
        %v4230 = vpop.f32.mrf.mxu0
        %4231 = vmatprep.mubr.bf16.mxu0 0
        %4232 = vmatmul.mubr.bf16.gmra.mxu0 %v4084
        %v4233 = vpop.f32.mrf.mxu0
        %v4234 = vadd.f32 0.0, %v4233
        %v4235 = vpop.f32.mrf.mxu0
        %v4236 = vpop.f32.mrf.mxu0
        %v4237 = vadd.f32 0.0, %v4236
        %v4238 = vpop.f32.mrf.mxu0
        %4239 = vmatprep.mubr.bf16.mxu0 0
        %4240 = vmatmul.mubr.bf16.gmra.mxu0 %v4085
        %v4241 = vpop.f32.mrf.mxu0
        %v4242 = vadd.f32 0.0, %v4241
        %v4243 = vpop.f32.mrf.mxu0
        %v4244 = vpop.f32.mrf.mxu0
        %v4245 = vadd.f32 0.0, %v4244
        %v4246 = vpop.f32.mrf.mxu0
        %4247 = vmatprep.mubr.bf16.mxu0 0
        %4248 = vmatmul.mubr.bf16.gmra.mxu0 %v4086
        %v4249 = vpop.f32.mrf.mxu0
        %v4250 = vadd.f32 0.0, %v4249
        %v4251 = vpop.f32.mrf.mxu0
        %v4252 = vpop.f32.mrf.mxu0
        %v4253 = vadd.f32 0.0, %v4252
        %v4254 = vpop.f32.mrf.mxu0
        %4255 = vmatprep.mubr.bf16.mxu0 0
        %4256 = vmatmul.mubr.bf16.gmra.mxu0 %v4087
        %v4257 = vpop.f32.mrf.mxu0
        %v4258 = vadd.f32 0.0, %v4257
        %v4259 = vpop.f32.mrf.mxu0
        %v4260 = vpop.f32.mrf.mxu0
        %v4261 = vadd.f32 0.0, %v4260
        %v4262 = vpop.f32.mrf.mxu0
        %4263 = vmatprep.mubr.bf16.mxu0 0
        %4264 = vmatmul.mubr.bf16.gmra.mxu0 %v4088
        %v4265 = vpop.f32.mrf.mxu0
        %v4266 = vadd.f32 0.0, %v4265
        %v4267 = vpop.f32.mrf.mxu0
        %v4268 = vpop.f32.mrf.mxu0
        %v4269 = vadd.f32 0.0, %v4268
        %v4270 = vpop.f32.mrf.mxu0
        %4271 = vmatprep.mubr.bf16.mxu0 0
        %4272 = vmatmul.mubr.bf16.gmra.mxu0 %v4089
        %v4273 = vpop.f32.mrf.mxu0
        %v4274 = vadd.f32 0.0, %v4273
        %v4275 = vpop.f32.mrf.mxu0
        %v4276 = vpop.f32.mrf.mxu0
        %v4277 = vadd.f32 0.0, %v4276
        %v4278 = vpop.f32.mrf.mxu0
        %4279 = vmatprep.mubr.bf16.mxu0 0
        %4280 = vmatmul.mubr.bf16.gmra.mxu0 %v4090
        %v4281 = vpop.f32.mrf.mxu0
        %v4282 = vadd.f32 0.0, %v4281
        %v4283 = vpop.f32.mrf.mxu0
        %v4284 = vpop.f32.mrf.mxu0
        %v4285 = vadd.f32 0.0, %v4284
        %v4286 = vpop.f32.mrf.mxu0
        %4287 = vmatprep.mubr.bf16.mxu0 0
        %4288 = vmatmul.mubr.bf16.gmra.mxu0 %v4091
        %v4289 = vpop.f32.mrf.mxu0
        %v4290 = vadd.f32 0.0, %v4289
        %v4291 = vpop.f32.mrf.mxu0
        %v4292 = vpop.f32.mrf.mxu0
        %v4293 = vadd.f32 0.0, %v4292
        %v4294 = vpop.f32.mrf.mxu0
        %4295 = vmatprep.mubr.bf16.mxu0 0
        %4296 = vmatmul.mubr.bf16.gmra.mxu0 %v4092
        %v4297 = vpop.f32.mrf.mxu0
        %v4298 = vadd.f32 0.0, %v4297
        %v4299 = vpop.f32.mrf.mxu0
        %v4300 = vpop.f32.mrf.mxu0
        %v4301 = vadd.f32 0.0, %v4300
        %v4302 = vpop.f32.mrf.mxu0
        %4303 = vmatprep.mubr.bf16.mxu0 0
        %4304 = vmatmul.mubr.bf16.gmra.mxu0 %v4093
        %v4305 = vpop.f32.mrf.mxu0
        %v4306 = vadd.f32 0.0, %v4305
        %v4307 = vpop.f32.mrf.mxu0
        %v4308 = vpop.f32.mrf.mxu0
        %v4309 = vadd.f32 0.0, %v4308
        %v4310 = vpop.f32.mrf.mxu0
        %4311 = vmatprep.mubr.bf16.mxu0 0
        %4312 = vmatmul.mubr.bf16.gmra.mxu0 %v4094
        %v4313 = vpop.f32.mrf.mxu0
        %v4314 = vadd.f32 0.0, %v4313
        %v4315 = vpop.f32.mrf.mxu0
        %v4316 = vpop.f32.mrf.mxu0
        %v4317 = vadd.f32 0.0, %v4316
        %v4318 = vpop.f32.mrf.mxu0
        %4319 = vdwg.mxu0
        %v4348 = vunpack.c.l.b16 %v3847
        %v4349 = vunpack.c.l.b16 %v3848
        %v4350 = vunpack.c.l.b16 %v3849
        %v4351 = vunpack.c.l.b16 %v3850
        %v4352 = vunpack.c.l.b16 %v3851
        %v4353 = vunpack.c.l.b16 %v3852
        %v4354 = vunpack.c.l.b16 %v3853
        %v4355 = vunpack.c.l.b16 %v3854
        %v4356 = vunpack.c.l.b16 %v3855
        %v4357 = vunpack.c.l.b16 %v3856
        %v4358 = vunpack.c.l.b16 %v3857
        %v4359 = vunpack.c.l.b16 %v3858
        %v4360 = vunpack.c.l.b16 %v3859
        %v4361 = vunpack.c.l.b16 %v3860
        %v4362 = vunpack.c.l.b16 %v3861
        %v4363 = vunpack.c.l.b16 %v3862
        %v4364 = vunpack.c.l.b16 %v3863
        %v4365 = vunpack.c.l.b16 %v3864
        %v4366 = vunpack.c.l.b16 %v3865
        %v4367 = vunpack.c.l.b16 %v3866
        %v4368 = vunpack.c.l.b16 %v3867
        %v4369 = vunpack.c.l.b16 %v3868
        %v4370 = vunpack.c.l.b16 %v3869
        %v4371 = vunpack.c.l.b16 %v3870
        %v4372 = vunpack.c.l.b16 %v3871
        %v4373 = vunpack.c.l.b16 %v3872
        %v4374 = vunpack.c.l.b16 %v3873
        %v4375 = vunpack.c.l.b16 %v3874
        %v4376 = vpack.c.b16 %v4348, %v1138
        %v4377 = vpack.c.b16 %v4350, %v4349
        %v4378 = vpack.c.b16 %v4352, %v4351
        %v4379 = vpack.c.b16 %v4354, %v4353
        %v4380 = vpack.c.b16 %v4355, %v1138
        %v4381 = vpack.c.b16 %v4357, %v4356
        %v4382 = vpack.c.b16 %v4359, %v4358
        %v4383 = vpack.c.b16 %v4361, %v4360
        %v4384 = vpack.c.b16 %v4362, %v1138
        %v4385 = vpack.c.b16 %v4364, %v4363
        %v4386 = vpack.c.b16 %v4366, %v4365
        %v4387 = vpack.c.b16 %v4368, %v4367
        %v4388 = vpack.c.b16 %v4369, %v1138
        %v4389 = vpack.c.b16 %v4371, %v4370
        %v4390 = vpack.c.b16 %v4373, %v4372
        %v4391 = vpack.c.b16 %v4375, %v4374
        %v4424 = vunpack.c.l.b16 %v3989
        %v4425 = vunpack.c.l.b16 %v3990
        %v4426 = vunpack.c.l.b16 %v3991
        %v4427 = vunpack.c.l.b16 %v3992
        %v4428 = vunpack.c.l.b16 %v3993
        %v4429 = vunpack.c.l.b16 %v3994
        %v4430 = vunpack.c.l.b16 %v3995
        %v4431 = vunpack.c.l.b16 %v3996
        %v4432 = vunpack.c.l.b16 %v3997
        %v4433 = vunpack.c.l.b16 %v3998
        %v4434 = vunpack.c.l.b16 %v3999
        %v4435 = vunpack.c.l.b16 %v4000
        %v4436 = vunpack.c.l.b16 %v4001
        %v4437 = vunpack.c.l.b16 %v4002
        %v4438 = vunpack.c.l.b16 %v4003
        %v4439 = vunpack.c.l.b16 %v4004
        %v4440 = vpack.c.b16 %v4425, %v4424
        %v4441 = vpack.c.b16 %v4427, %v4426
        %v4442 = vpack.c.b16 %v4429, %v4428
        %v4443 = vpack.c.b16 %v4431, %v4430
        %v4444 = vpack.c.b16 %v4433, %v4432
        %v4445 = vpack.c.b16 %v4435, %v4434
        %v4446 = vpack.c.b16 %v4437, %v4436
        %v4447 = vpack.c.b16 %v4439, %v4438
        %4456 = vmatprep.subr.bf16.mxu0 0
        %4457 = vmatpush1.bf16.msra.mxu0 %v4447
        %4458 = vmatprep.subr.bf16.mxu0 0
        %4459 = vmatpush1.bf16.msra.mxu0 %v4446
        %4460 = vmatprep.subr.bf16.mxu0 0
        %4461 = vmatpush1.bf16.msra.mxu0 %v4445
        %4462 = vmatprep.subr.bf16.mxu0 0
        %4463 = vmatpush1.bf16.msra.mxu0 %v4444
        %4464 = vmatprep.subr.bf16.mxu0 0
        %4465 = vmatpush1.bf16.msra.mxu0 %v4443
        %4466 = vmatprep.subr.bf16.mxu0 0
        %4467 = vmatpush1.bf16.msra.mxu0 %v4442
        %4468 = vmatprep.subr.bf16.mxu0 0
        %4469 = vmatpush1.bf16.msra.mxu0 %v4441
        %4470 = vmatprep.subr.bf16.mxu0 0
        %4471 = vmatpush1.bf16.msra.mxu0 %v4440
        %4472 = vmatprep.subr.bf16.mxu0 0
        %4473 = vmatpush2.bf16.msra.mxu0 0
        %4474 = vmatprep.subr.bf16.mxu0 0
        %4475 = vmatpush2.bf16.msra.mxu0 0
        %4476 = vmatprep.subr.bf16.mxu0 0
        %4477 = vmatpush2.bf16.msra.mxu0 0
        %4478 = vmatprep.subr.bf16.mxu0 0
        %4479 = vmatpush2.bf16.msra.mxu0 0
        %4480 = vmatprep.subr.bf16.mxu0 0
        %4481 = vmatpush2.bf16.msra.mxu0 0
        %4482 = vmatprep.subr.bf16.mxu0 0
        %4483 = vmatpush2.bf16.msra.mxu0 0
        %4484 = vmatprep.subr.bf16.mxu0 0
        %4485 = vmatpush2.bf16.msra.mxu0 0
        %4486 = vmatprep.subr.bf16.mxu0 0
        %4487 = vmatpush2.bf16.msra.mxu0 0
        %4488 = vmatprep.mubr.bf16.mxu0 0
        %4489 = vmatmul.mubr.bf16.gmra.mxu0 %v4376
        %v4490 = vpop.f32.mrf.mxu0
        %v4491 = vadd.f32 %v4194, %v4490
        %v4492 = vpop.f32.mrf.mxu0
        %v4493 = vpop.f32.mrf.mxu0
        %v4494 = vadd.f32 %v4197, %v4493
        %v4495 = vpop.f32.mrf.mxu0
        %4496 = vmatprep.mubr.bf16.mxu0 0
        %4497 = vmatmul.mubr.bf16.gmra.mxu0 %v4377
        %v4498 = vpop.f32.mrf.mxu0
        %v4499 = vadd.f32 %v4202, %v4498
        %v4500 = vpop.f32.mrf.mxu0
        %v4501 = vpop.f32.mrf.mxu0
        %v4502 = vadd.f32 %v4205, %v4501
        %v4503 = vpop.f32.mrf.mxu0
        %4504 = vmatprep.mubr.bf16.mxu0 0
        %4505 = vmatmul.mubr.bf16.gmra.mxu0 %v4378
        %v4506 = vpop.f32.mrf.mxu0
        %v4507 = vadd.f32 %v4210, %v4506
        %v4508 = vpop.f32.mrf.mxu0
        %v4509 = vpop.f32.mrf.mxu0
        %v4510 = vadd.f32 %v4213, %v4509
        %v4511 = vpop.f32.mrf.mxu0
        %4512 = vmatprep.mubr.bf16.mxu0 0
        %4513 = vmatmul.mubr.bf16.gmra.mxu0 %v4379
        %v4514 = vpop.f32.mrf.mxu0
        %v4515 = vadd.f32 %v4218, %v4514
        %v4516 = vpop.f32.mrf.mxu0
        %v4517 = vpop.f32.mrf.mxu0
        %v4518 = vadd.f32 %v4221, %v4517
        %v4519 = vpop.f32.mrf.mxu0
        %4520 = vmatprep.mubr.bf16.mxu0 0
        %4521 = vmatmul.mubr.bf16.gmra.mxu0 %v4380
        %v4522 = vpop.f32.mrf.mxu0
        %v4523 = vadd.f32 %v4226, %v4522
        %v4524 = vpop.f32.mrf.mxu0
        %v4525 = vpop.f32.mrf.mxu0
        %v4526 = vadd.f32 %v4229, %v4525
        %v4527 = vpop.f32.mrf.mxu0
        %4528 = vmatprep.mubr.bf16.mxu0 0
        %4529 = vmatmul.mubr.bf16.gmra.mxu0 %v4381
        %v4530 = vpop.f32.mrf.mxu0
        %v4531 = vadd.f32 %v4234, %v4530
        %v4532 = vpop.f32.mrf.mxu0
        %v4533 = vpop.f32.mrf.mxu0
        %v4534 = vadd.f32 %v4237, %v4533
        %v4535 = vpop.f32.mrf.mxu0
        %4536 = vmatprep.mubr.bf16.mxu0 0
        %4537 = vmatmul.mubr.bf16.gmra.mxu0 %v4382
        %v4538 = vpop.f32.mrf.mxu0
        %v4539 = vadd.f32 %v4242, %v4538
        %v4540 = vpop.f32.mrf.mxu0
        %v4541 = vpop.f32.mrf.mxu0
        %v4542 = vadd.f32 %v4245, %v4541
        %v4543 = vpop.f32.mrf.mxu0
        %4544 = vmatprep.mubr.bf16.mxu0 0
        %4545 = vmatmul.mubr.bf16.gmra.mxu0 %v4383
        %v4546 = vpop.f32.mrf.mxu0
        %v4547 = vadd.f32 %v4250, %v4546
        %v4548 = vpop.f32.mrf.mxu0
        %v4549 = vpop.f32.mrf.mxu0
        %v4550 = vadd.f32 %v4253, %v4549
        %v4551 = vpop.f32.mrf.mxu0
        %4552 = vmatprep.mubr.bf16.mxu0 0
        %4553 = vmatmul.mubr.bf16.gmra.mxu0 %v4384
        %v4554 = vpop.f32.mrf.mxu0
        %v4555 = vadd.f32 %v4258, %v4554
        %v4556 = vpop.f32.mrf.mxu0
        %v4557 = vpop.f32.mrf.mxu0
        %v4558 = vadd.f32 %v4261, %v4557
        %v4559 = vpop.f32.mrf.mxu0
        %4560 = vmatprep.mubr.bf16.mxu0 0
        %4561 = vmatmul.mubr.bf16.gmra.mxu0 %v4385
        %v4562 = vpop.f32.mrf.mxu0
        %v4563 = vadd.f32 %v4266, %v4562
        %v4564 = vpop.f32.mrf.mxu0
        %v4565 = vpop.f32.mrf.mxu0
        %v4566 = vadd.f32 %v4269, %v4565
        %v4567 = vpop.f32.mrf.mxu0
        %4568 = vmatprep.mubr.bf16.mxu0 0
        %4569 = vmatmul.mubr.bf16.gmra.mxu0 %v4386
        %v4570 = vpop.f32.mrf.mxu0
        %v4571 = vadd.f32 %v4274, %v4570
        %v4572 = vpop.f32.mrf.mxu0
        %v4573 = vpop.f32.mrf.mxu0
        %v4574 = vadd.f32 %v4277, %v4573
        %v4575 = vpop.f32.mrf.mxu0
        %4576 = vmatprep.mubr.bf16.mxu0 0
        %4577 = vmatmul.mubr.bf16.gmra.mxu0 %v4387
        %v4578 = vpop.f32.mrf.mxu0
        %v4579 = vadd.f32 %v4282, %v4578
        %v4580 = vpop.f32.mrf.mxu0
        %v4581 = vpop.f32.mrf.mxu0
        %v4582 = vadd.f32 %v4285, %v4581
        %v4583 = vpop.f32.mrf.mxu0
        %4584 = vmatprep.mubr.bf16.mxu0 0
        %4585 = vmatmul.mubr.bf16.gmra.mxu0 %v4388
        %v4586 = vpop.f32.mrf.mxu0
        %v4587 = vadd.f32 %v4290, %v4586
        %v4588 = vpop.f32.mrf.mxu0
        %v4589 = vpop.f32.mrf.mxu0
        %v4590 = vadd.f32 %v4293, %v4589
        %v4591 = vpop.f32.mrf.mxu0
        %4592 = vmatprep.mubr.bf16.mxu0 0
        %4593 = vmatmul.mubr.bf16.gmra.mxu0 %v4389
        %v4594 = vpop.f32.mrf.mxu0
        %v4595 = vadd.f32 %v4298, %v4594
        %v4596 = vpop.f32.mrf.mxu0
        %v4597 = vpop.f32.mrf.mxu0
        %v4598 = vadd.f32 %v4301, %v4597
        %v4599 = vpop.f32.mrf.mxu0
        %4600 = vmatprep.mubr.bf16.mxu0 0
        %4601 = vmatmul.mubr.bf16.gmra.mxu0 %v4390
        %v4602 = vpop.f32.mrf.mxu0
        %v4603 = vadd.f32 %v4306, %v4602
        %v4604 = vpop.f32.mrf.mxu0
        %v4605 = vpop.f32.mrf.mxu0
        %v4606 = vadd.f32 %v4309, %v4605
        %v4607 = vpop.f32.mrf.mxu0
        %4608 = vmatprep.mubr.bf16.mxu0 0
        %4609 = vmatmul.mubr.bf16.gmra.mxu0 %v4391
        %v4610 = vpop.f32.mrf.mxu0
        %v4611 = vadd.f32 %v4314, %v4610
        %v4612 = vpop.f32.mrf.mxu0
        %v4613 = vpop.f32.mrf.mxu0
        %v4614 = vadd.f32 %v4317, %v4613
        %v4615 = vpop.f32.mrf.mxu0
        %4616 = vdwg.mxu0
        %s4617 = smul.addr %s1409, 4
        %s4618 = scalar_lea.vmem [#allocation4], %s4617
        %v4619 = vld [vmem:[%s4618] sm:$0xf]
        %v4620 = vld [vmem:[%s4618 + $0x4] sm:$0xf]
        %v4621 = vld [vmem:[%s4618 + $0x8] sm:$0xf]
        %v4622 = vld [vmem:[%s4618 + $0xc] sm:$0xf]
        %v4623 = vld [vmem:[%s4618 + $0x10] sm:$0xf]
        %v4624 = vld [vmem:[%s4618 + $0x14] sm:$0xf]
        %v4625 = vld [vmem:[%s4618 + $0x18] sm:$0xf]
        %v4626 = vld [vmem:[%s4618 + $0x1c] sm:$0xf]
        %v4627 = vld [vmem:[%s4618 + $0x20] sm:$0xf]
        %v4628 = vld [vmem:[%s4618 + $0x24] sm:$0xf]
        %v4629 = vld [vmem:[%s4618 + $0x28] sm:$0xf]
        %v4630 = vld [vmem:[%s4618 + $0x2c] sm:$0xf]
        %v4631 = vld [vmem:[%s4618 + $0x30] sm:$0xf]
        %v4632 = vld [vmem:[%s4618 + $0x34] sm:$0xf]
        %v4633 = vld [vmem:[%s4618 + $0x38] sm:$0xf]
        %v4634 = vld [vmem:[%s4618 + $0x3c] sm:$0xf]
        %v4663 = vunpack.c.l.b16 %v3959
        %v4664 = vunpack.c.l.b16 %v3960
        %v4665 = vunpack.c.l.b16 %v3961
        %v4666 = vunpack.c.l.b16 %v3962
        %v4667 = vunpack.c.l.b16 %v3963
        %v4668 = vunpack.c.l.b16 %v3964
        %v4669 = vunpack.c.l.b16 %v3965
        %v4670 = vunpack.c.l.b16 %v3966
        %v4671 = vunpack.c.l.b16 %v3967
        %v4672 = vunpack.c.l.b16 %v3968
        %v4673 = vunpack.c.l.b16 %v3969
        %v4674 = vunpack.c.l.b16 %v3970
        %v4675 = vunpack.c.l.b16 %v3971
        %v4676 = vunpack.c.l.b16 %v3972
        %v4677 = vunpack.c.l.b16 %v3973
        %v4678 = vunpack.c.l.b16 %v3974
        %v4679 = vunpack.c.l.b16 %v3975
        %v4680 = vunpack.c.l.b16 %v3976
        %v4681 = vunpack.c.l.b16 %v3977
        %v4682 = vunpack.c.l.b16 %v3978
        %v4683 = vunpack.c.l.b16 %v3979
        %v4684 = vunpack.c.l.b16 %v3980
        %v4685 = vunpack.c.l.b16 %v3981
        %v4686 = vunpack.c.l.b16 %v3982
        %v4687 = vunpack.c.l.b16 %v3983
        %v4688 = vunpack.c.l.b16 %v3984
        %v4689 = vunpack.c.l.b16 %v3985
        %v4690 = vunpack.c.l.b16 %v3986
        %v4691 = vpack.c.b16 %v4663, %v1457
        %v4692 = vpack.c.b16 %v4665, %v4664
        %v4693 = vpack.c.b16 %v4667, %v4666
        %v4694 = vpack.c.b16 %v4669, %v4668
        %v4695 = vpack.c.b16 %v4670, %v1457
        %v4696 = vpack.c.b16 %v4672, %v4671
        %v4697 = vpack.c.b16 %v4674, %v4673
        %v4698 = vpack.c.b16 %v4676, %v4675
        %v4699 = vpack.c.b16 %v4677, %v1457
        %v4700 = vpack.c.b16 %v4679, %v4678
        %v4701 = vpack.c.b16 %v4681, %v4680
        %v4702 = vpack.c.b16 %v4683, %v4682
        %v4703 = vpack.c.b16 %v4684, %v1457
        %v4704 = vpack.c.b16 %v4686, %v4685
        %v4705 = vpack.c.b16 %v4688, %v4687
        %v4706 = vpack.c.b16 %v4690, %v4689
        %v4739 = vunpack.c.l.b16 %v4619
        %v4740 = vunpack.c.l.b16 %v4620
        %v4741 = vunpack.c.l.b16 %v4621
        %v4742 = vunpack.c.l.b16 %v4622
        %v4743 = vunpack.c.l.b16 %v4623
        %v4744 = vunpack.c.l.b16 %v4624
        %v4745 = vunpack.c.l.b16 %v4625
        %v4746 = vunpack.c.l.b16 %v4626
        %v4747 = vunpack.c.l.b16 %v4627
        %v4748 = vunpack.c.l.b16 %v4628
        %v4749 = vunpack.c.l.b16 %v4629
        %v4750 = vunpack.c.l.b16 %v4630
        %v4751 = vunpack.c.l.b16 %v4631
        %v4752 = vunpack.c.l.b16 %v4632
        %v4753 = vunpack.c.l.b16 %v4633
        %v4754 = vunpack.c.l.b16 %v4634
        %v4755 = vpack.c.b16 %v4740, %v4739
        %v4756 = vpack.c.b16 %v4742, %v4741
        %v4757 = vpack.c.b16 %v4744, %v4743
        %v4758 = vpack.c.b16 %v4746, %v4745
        %v4759 = vpack.c.b16 %v4748, %v4747
        %v4760 = vpack.c.b16 %v4750, %v4749
        %v4761 = vpack.c.b16 %v4752, %v4751
        %v4762 = vpack.c.b16 %v4754, %v4753
        %4771 = vmatprep.subr.bf16.mxu0 0
        %4772 = vmatpush1.bf16.msra.mxu0 %v4762
        %4773 = vmatprep.subr.bf16.mxu0 0
        %4774 = vmatpush1.bf16.msra.mxu0 %v4761
        %4775 = vmatprep.subr.bf16.mxu0 0
        %4776 = vmatpush1.bf16.msra.mxu0 %v4760
        %4777 = vmatprep.subr.bf16.mxu0 0
        %4778 = vmatpush1.bf16.msra.mxu0 %v4759
        %4779 = vmatprep.subr.bf16.mxu0 0
        %4780 = vmatpush1.bf16.msra.mxu0 %v4758
        %4781 = vmatprep.subr.bf16.mxu0 0
        %4782 = vmatpush1.bf16.msra.mxu0 %v4757
        %4783 = vmatprep.subr.bf16.mxu0 0
        %4784 = vmatpush1.bf16.msra.mxu0 %v4756
        %4785 = vmatprep.subr.bf16.mxu0 0
        %4786 = vmatpush1.bf16.msra.mxu0 %v4755
        %4787 = vmatprep.subr.bf16.mxu0 0
        %4788 = vmatpush2.bf16.msra.mxu0 0
        %4789 = vmatprep.subr.bf16.mxu0 0
        %4790 = vmatpush2.bf16.msra.mxu0 0
        %4791 = vmatprep.subr.bf16.mxu0 0
        %4792 = vmatpush2.bf16.msra.mxu0 0
        %4793 = vmatprep.subr.bf16.mxu0 0
        %4794 = vmatpush2.bf16.msra.mxu0 0
        %4795 = vmatprep.subr.bf16.mxu0 0
        %4796 = vmatpush2.bf16.msra.mxu0 0
        %4797 = vmatprep.subr.bf16.mxu0 0
        %4798 = vmatpush2.bf16.msra.mxu0 0
        %4799 = vmatprep.subr.bf16.mxu0 0
        %4800 = vmatpush2.bf16.msra.mxu0 0
        %4801 = vmatprep.subr.bf16.mxu0 0
        %4802 = vmatpush2.bf16.msra.mxu0 0
        %4803 = vmatprep.mubr.bf16.mxu0 0
        %4804 = vmatmul.mubr.bf16.gmra.mxu0 %v4691
        %v4805 = vpop.f32.mrf.mxu0
        %v4806 = vadd.f32 0.0, %v4805
        %v4807 = vpop.f32.mrf.mxu0
        %v4808 = vpop.f32.mrf.mxu0
        %v4809 = vadd.f32 0.0, %v4808
        %v4810 = vpop.f32.mrf.mxu0
        %4811 = vmatprep.mubr.bf16.mxu0 0
        %4812 = vmatmul.mubr.bf16.gmra.mxu0 %v4692
        %v4813 = vpop.f32.mrf.mxu0
        %v4814 = vadd.f32 0.0, %v4813
        %v4815 = vpop.f32.mrf.mxu0
        %v4816 = vpop.f32.mrf.mxu0
        %v4817 = vadd.f32 0.0, %v4816
        %v4818 = vpop.f32.mrf.mxu0
        %4819 = vmatprep.mubr.bf16.mxu0 0
        %4820 = vmatmul.mubr.bf16.gmra.mxu0 %v4693
        %v4821 = vpop.f32.mrf.mxu0
        %v4822 = vadd.f32 0.0, %v4821
        %v4823 = vpop.f32.mrf.mxu0
        %v4824 = vpop.f32.mrf.mxu0
        %v4825 = vadd.f32 0.0, %v4824
        %v4826 = vpop.f32.mrf.mxu0
        %4827 = vmatprep.mubr.bf16.mxu0 0
        %4828 = vmatmul.mubr.bf16.gmra.mxu0 %v4694
        %v4829 = vpop.f32.mrf.mxu0
        %v4830 = vadd.f32 0.0, %v4829
        %v4831 = vpop.f32.mrf.mxu0
        %v4832 = vpop.f32.mrf.mxu0
        %v4833 = vadd.f32 0.0, %v4832
        %v4834 = vpop.f32.mrf.mxu0
        %4835 = vmatprep.mubr.bf16.mxu0 0
        %4836 = vmatmul.mubr.bf16.gmra.mxu0 %v4695
        %v4837 = vpop.f32.mrf.mxu0
        %v4838 = vadd.f32 0.0, %v4837
        %v4839 = vpop.f32.mrf.mxu0
        %v4840 = vpop.f32.mrf.mxu0
        %v4841 = vadd.f32 0.0, %v4840
        %v4842 = vpop.f32.mrf.mxu0
        %4843 = vmatprep.mubr.bf16.mxu0 0
        %4844 = vmatmul.mubr.bf16.gmra.mxu0 %v4696
        %v4845 = vpop.f32.mrf.mxu0
        %v4846 = vadd.f32 0.0, %v4845
        %v4847 = vpop.f32.mrf.mxu0
        %v4848 = vpop.f32.mrf.mxu0
        %v4849 = vadd.f32 0.0, %v4848
        %v4850 = vpop.f32.mrf.mxu0
        %4851 = vmatprep.mubr.bf16.mxu0 0
        %4852 = vmatmul.mubr.bf16.gmra.mxu0 %v4697
        %v4853 = vpop.f32.mrf.mxu0
        %v4854 = vadd.f32 0.0, %v4853
        %v4855 = vpop.f32.mrf.mxu0
        %v4856 = vpop.f32.mrf.mxu0
        %v4857 = vadd.f32 0.0, %v4856
        %v4858 = vpop.f32.mrf.mxu0
        %4859 = vmatprep.mubr.bf16.mxu0 0
        %4860 = vmatmul.mubr.bf16.gmra.mxu0 %v4698
        %v4861 = vpop.f32.mrf.mxu0
        %v4862 = vadd.f32 0.0, %v4861
        %v4863 = vpop.f32.mrf.mxu0
        %v4864 = vpop.f32.mrf.mxu0
        %v4865 = vadd.f32 0.0, %v4864
        %v4866 = vpop.f32.mrf.mxu0
        %4867 = vmatprep.mubr.bf16.mxu0 0
        %4868 = vmatmul.mubr.bf16.gmra.mxu0 %v4699
        %v4869 = vpop.f32.mrf.mxu0
        %v4870 = vadd.f32 0.0, %v4869
        %v4871 = vpop.f32.mrf.mxu0
        %v4872 = vpop.f32.mrf.mxu0
        %v4873 = vadd.f32 0.0, %v4872
        %v4874 = vpop.f32.mrf.mxu0
        %4875 = vmatprep.mubr.bf16.mxu0 0
        %4876 = vmatmul.mubr.bf16.gmra.mxu0 %v4700
        %v4877 = vpop.f32.mrf.mxu0
        %v4878 = vadd.f32 0.0, %v4877
        %v4879 = vpop.f32.mrf.mxu0
        %v4880 = vpop.f32.mrf.mxu0
        %v4881 = vadd.f32 0.0, %v4880
        %v4882 = vpop.f32.mrf.mxu0
        %4883 = vmatprep.mubr.bf16.mxu0 0
        %4884 = vmatmul.mubr.bf16.gmra.mxu0 %v4701
        %v4885 = vpop.f32.mrf.mxu0
        %v4886 = vadd.f32 0.0, %v4885
        %v4887 = vpop.f32.mrf.mxu0
        %v4888 = vpop.f32.mrf.mxu0
        %v4889 = vadd.f32 0.0, %v4888
        %v4890 = vpop.f32.mrf.mxu0
        %4891 = vmatprep.mubr.bf16.mxu0 0
        %4892 = vmatmul.mubr.bf16.gmra.mxu0 %v4702
        %v4893 = vpop.f32.mrf.mxu0
        %v4894 = vadd.f32 0.0, %v4893
        %v4895 = vpop.f32.mrf.mxu0
        %v4896 = vpop.f32.mrf.mxu0
        %v4897 = vadd.f32 0.0, %v4896
        %v4898 = vpop.f32.mrf.mxu0
        %4899 = vmatprep.mubr.bf16.mxu0 0
        %4900 = vmatmul.mubr.bf16.gmra.mxu0 %v4703
        %v4901 = vpop.f32.mrf.mxu0
        %v4902 = vadd.f32 0.0, %v4901
        %v4903 = vpop.f32.mrf.mxu0
        %v4904 = vpop.f32.mrf.mxu0
        %v4905 = vadd.f32 0.0, %v4904
        %v4906 = vpop.f32.mrf.mxu0
        %4907 = vmatprep.mubr.bf16.mxu0 0
        %4908 = vmatmul.mubr.bf16.gmra.mxu0 %v4704
        %v4909 = vpop.f32.mrf.mxu0
        %v4910 = vadd.f32 0.0, %v4909
        %v4911 = vpop.f32.mrf.mxu0
        %v4912 = vpop.f32.mrf.mxu0
        %v4913 = vadd.f32 0.0, %v4912
        %v4914 = vpop.f32.mrf.mxu0
        %4915 = vmatprep.mubr.bf16.mxu0 0
        %4916 = vmatmul.mubr.bf16.gmra.mxu0 %v4705
        %v4917 = vpop.f32.mrf.mxu0
        %v4918 = vadd.f32 0.0, %v4917
        %v4919 = vpop.f32.mrf.mxu0
        %v4920 = vpop.f32.mrf.mxu0
        %v4921 = vadd.f32 0.0, %v4920
        %v4922 = vpop.f32.mrf.mxu0
        %4923 = vmatprep.mubr.bf16.mxu0 0
        %4924 = vmatmul.mubr.bf16.gmra.mxu0 %v4706
        %v4925 = vpop.f32.mrf.mxu0
        %v4926 = vadd.f32 0.0, %v4925
        %v4927 = vpop.f32.mrf.mxu0
        %v4928 = vpop.f32.mrf.mxu0
        %v4929 = vadd.f32 0.0, %v4928
        %v4930 = vpop.f32.mrf.mxu0
        %4931 = vdwg.mxu0
        %v4932 = vadd.f32 %v4491, %v4806
        %v4933 = vadd.f32 %v4494, %v4809
        %v4934 = vadd.f32 %v4499, %v4814
        %v4935 = vadd.f32 %v4502, %v4817
        %v4936 = vadd.f32 %v4507, %v4822
        %v4937 = vadd.f32 %v4510, %v4825
        %v4938 = vadd.f32 %v4515, %v4830
        %v4939 = vadd.f32 %v4518, %v4833
        %v4940 = vadd.f32 %v4523, %v4838
        %v4941 = vadd.f32 %v4526, %v4841
        %v4942 = vadd.f32 %v4531, %v4846
        %v4943 = vadd.f32 %v4534, %v4849
        %v4944 = vadd.f32 %v4539, %v4854
        %v4945 = vadd.f32 %v4542, %v4857
        %v4946 = vadd.f32 %v4547, %v4862
        %v4947 = vadd.f32 %v4550, %v4865
        %v4948 = vadd.f32 %v4555, %v4870
        %v4949 = vadd.f32 %v4558, %v4873
        %v4950 = vadd.f32 %v4563, %v4878
        %v4951 = vadd.f32 %v4566, %v4881
        %v4952 = vadd.f32 %v4571, %v4886
        %v4953 = vadd.f32 %v4574, %v4889
        %v4954 = vadd.f32 %v4579, %v4894
        %v4955 = vadd.f32 %v4582, %v4897
        %v4956 = vadd.f32 %v4587, %v4902
        %v4957 = vadd.f32 %v4590, %v4905
        %v4958 = vadd.f32 %v4595, %v4910
        %v4959 = vadd.f32 %v4598, %v4913
        %v4960 = vadd.f32 %v4603, %v4918
        %v4961 = vadd.f32 %v4606, %v4921
        %v4962 = vadd.f32 %v4611, %v4926
        %v4963 = vadd.f32 %v4614, %v4929
        %v4965 = vshrl.u32 %v3598, 16
        %v4967 = vrot.slane %v4965, 7
        %v4968 = vshll.u32 %v3598, 16
        %v4970 = vor.u32 %v4967, %v4968
        %v4972 = vshrl.u32 %v3606, 16
        %v4974 = vrot.slane %v4972, 7
        %v4975 = vshll.u32 %v3606, 16
        %v4977 = vor.u32 %v4974, %v4975
        %v4979 = vshrl.u32 %v3614, 16
        %v4981 = vrot.slane %v4979, 7
        %v4982 = vshll.u32 %v3614, 16
        %v4984 = vor.u32 %v4981, %v4982
        %v4986 = vshrl.u32 %v3622, 16
        %v4988 = vrot.slane %v4986, 7
        %v4989 = vshll.u32 %v3622, 16
        %v4991 = vor.u32 %v4988, %v4989
        %v4996 = vsel %vm621, 0, %v4970
        %v4997 = vsel %vm621, 0, %v4977
        %v4998 = vsel %vm621, 0, %v4984
        %v4999 = vsel %vm621, 0, %v4991
        %v5000 = vrot.slane %v4968, 1
        %v5001 = vor.u32 %v4965, %v5000
        %v5002 = vrot.slane %v4975, 1
        %v5003 = vor.u32 %v4972, %v5002
        %v5004 = vrot.slane %v4982, 1
        %v5005 = vor.u32 %v4979, %v5004
        %v5006 = vrot.slane %v4989, 1
        %v5007 = vor.u32 %v4986, %v5006
        %v5012 = vsel %vm740, %v5001, 0
        %v5013 = vsel %vm740, %v5003, 0
        %v5014 = vsel %vm740, %v5005, 0
        %v5015 = vsel %vm740, %v5007, 0
        %s5016 = smul.addr %s1812, 4
        %s5017 = scalar_lea.vmem [#allocation4], %s5016
        %v5018 = vld [vmem:[%s5017] sm:$0xf]
        %v5019 = vld [vmem:[%s5017 + $0x4] sm:$0xf]
        %v5020 = vld [vmem:[%s5017 + $0x8] sm:$0xf]
        %v5021 = vld [vmem:[%s5017 + $0xc] sm:$0xf]
        %v5022 = vld [vmem:[%s5017 + $0x10] sm:$0xf]
        %v5023 = vld [vmem:[%s5017 + $0x14] sm:$0xf]
        %v5024 = vld [vmem:[%s5017 + $0x18] sm:$0xf]
        %v5025 = vld [vmem:[%s5017 + $0x1c] sm:$0xf]
        %v5026 = vld [vmem:[%s5017 + $0x20] sm:$0xf]
        %v5027 = vld [vmem:[%s5017 + $0x24] sm:$0xf]
        %v5028 = vld [vmem:[%s5017 + $0x28] sm:$0xf]
        %v5029 = vld [vmem:[%s5017 + $0x2c] sm:$0xf]
        %v5030 = vld [vmem:[%s5017 + $0x30] sm:$0xf]
        %v5031 = vld [vmem:[%s5017 + $0x34] sm:$0xf]
        %v5032 = vld [vmem:[%s5017 + $0x38] sm:$0xf]
        %v5033 = vld [vmem:[%s5017 + $0x3c] sm:$0xf]
        %v5038 = vunpack.c.l.b16 %v4996
        %v5039 = vunpack.c.l.b16 %v4997
        %v5040 = vunpack.c.l.b16 %v4998
        %v5041 = vunpack.c.l.b16 %v4999
        %v5042 = vpack.c.b16 %v4349, %v4348
        %v5043 = vpack.c.b16 %v4351, %v4350
        %v5044 = vpack.c.b16 %v4353, %v4352
        %v5045 = vpack.c.b16 %v5038, %v4354
        %v5046 = vpack.c.b16 %v4356, %v4355
        %v5047 = vpack.c.b16 %v4358, %v4357
        %v5048 = vpack.c.b16 %v4360, %v4359
        %v5049 = vpack.c.b16 %v5039, %v4361
        %v5050 = vpack.c.b16 %v4363, %v4362
        %v5051 = vpack.c.b16 %v4365, %v4364
        %v5052 = vpack.c.b16 %v4367, %v4366
        %v5053 = vpack.c.b16 %v5040, %v4368
        %v5054 = vpack.c.b16 %v4370, %v4369
        %v5055 = vpack.c.b16 %v4372, %v4371
        %v5056 = vpack.c.b16 %v4374, %v4373
        %v5057 = vpack.c.b16 %v5041, %v4375
        %v5090 = vunpack.c.l.b16 %v5018
        %v5091 = vunpack.c.l.b16 %v5019
        %v5092 = vunpack.c.l.b16 %v5020
        %v5093 = vunpack.c.l.b16 %v5021
        %v5094 = vunpack.c.l.b16 %v5022
        %v5095 = vunpack.c.l.b16 %v5023
        %v5096 = vunpack.c.l.b16 %v5024
        %v5097 = vunpack.c.l.b16 %v5025
        %v5098 = vunpack.c.l.b16 %v5026
        %v5099 = vunpack.c.l.b16 %v5027
        %v5100 = vunpack.c.l.b16 %v5028
        %v5101 = vunpack.c.l.b16 %v5029
        %v5102 = vunpack.c.l.b16 %v5030
        %v5103 = vunpack.c.l.b16 %v5031
        %v5104 = vunpack.c.l.b16 %v5032
        %v5105 = vunpack.c.l.b16 %v5033
        %v5106 = vpack.c.b16 %v5091, %v5090
        %v5107 = vpack.c.b16 %v5093, %v5092
        %v5108 = vpack.c.b16 %v5095, %v5094
        %v5109 = vpack.c.b16 %v5097, %v5096
        %v5110 = vpack.c.b16 %v5099, %v5098
        %v5111 = vpack.c.b16 %v5101, %v5100
        %v5112 = vpack.c.b16 %v5103, %v5102
        %v5113 = vpack.c.b16 %v5105, %v5104
        %5122 = vmatprep.subr.bf16.mxu0 0
        %5123 = vmatpush1.bf16.msra.mxu0 %v5113
        %5124 = vmatprep.subr.bf16.mxu0 0
        %5125 = vmatpush1.bf16.msra.mxu0 %v5112
        %5126 = vmatprep.subr.bf16.mxu0 0
        %5127 = vmatpush1.bf16.msra.mxu0 %v5111
        %5128 = vmatprep.subr.bf16.mxu0 0
        %5129 = vmatpush1.bf16.msra.mxu0 %v5110
        %5130 = vmatprep.subr.bf16.mxu0 0
        %5131 = vmatpush1.bf16.msra.mxu0 %v5109
        %5132 = vmatprep.subr.bf16.mxu0 0
        %5133 = vmatpush1.bf16.msra.mxu0 %v5108
        %5134 = vmatprep.subr.bf16.mxu0 0
        %5135 = vmatpush1.bf16.msra.mxu0 %v5107
        %5136 = vmatprep.subr.bf16.mxu0 0
        %5137 = vmatpush1.bf16.msra.mxu0 %v5106
        %5138 = vmatprep.subr.bf16.mxu0 0
        %5139 = vmatpush2.bf16.msra.mxu0 0
        %5140 = vmatprep.subr.bf16.mxu0 0
        %5141 = vmatpush2.bf16.msra.mxu0 0
        %5142 = vmatprep.subr.bf16.mxu0 0
        %5143 = vmatpush2.bf16.msra.mxu0 0
        %5144 = vmatprep.subr.bf16.mxu0 0
        %5145 = vmatpush2.bf16.msra.mxu0 0
        %5146 = vmatprep.subr.bf16.mxu0 0
        %5147 = vmatpush2.bf16.msra.mxu0 0
        %5148 = vmatprep.subr.bf16.mxu0 0
        %5149 = vmatpush2.bf16.msra.mxu0 0
        %5150 = vmatprep.subr.bf16.mxu0 0
        %5151 = vmatpush2.bf16.msra.mxu0 0
        %5152 = vmatprep.subr.bf16.mxu0 0
        %5153 = vmatpush2.bf16.msra.mxu0 0
        %5154 = vmatprep.mubr.bf16.mxu0 0
        %5155 = vmatmul.mubr.bf16.gmra.mxu0 %v5042
        %v5156 = vpop.f32.mrf.mxu0
        %v5157 = vadd.f32 0.0, %v5156
        %v5158 = vpop.f32.mrf.mxu0
        %v5159 = vpop.f32.mrf.mxu0
        %v5160 = vadd.f32 0.0, %v5159
        %v5161 = vpop.f32.mrf.mxu0
        %5162 = vmatprep.mubr.bf16.mxu0 0
        %5163 = vmatmul.mubr.bf16.gmra.mxu0 %v5043
        %v5164 = vpop.f32.mrf.mxu0
        %v5165 = vadd.f32 0.0, %v5164
        %v5166 = vpop.f32.mrf.mxu0
        %v5167 = vpop.f32.mrf.mxu0
        %v5168 = vadd.f32 0.0, %v5167
        %v5169 = vpop.f32.mrf.mxu0
        %5170 = vmatprep.mubr.bf16.mxu0 0
        %5171 = vmatmul.mubr.bf16.gmra.mxu0 %v5044
        %v5172 = vpop.f32.mrf.mxu0
        %v5173 = vadd.f32 0.0, %v5172
        %v5174 = vpop.f32.mrf.mxu0
        %v5175 = vpop.f32.mrf.mxu0
        %v5176 = vadd.f32 0.0, %v5175
        %v5177 = vpop.f32.mrf.mxu0
        %5178 = vmatprep.mubr.bf16.mxu0 0
        %5179 = vmatmul.mubr.bf16.gmra.mxu0 %v5045
        %v5180 = vpop.f32.mrf.mxu0
        %v5181 = vadd.f32 0.0, %v5180
        %v5182 = vpop.f32.mrf.mxu0
        %v5183 = vpop.f32.mrf.mxu0
        %v5184 = vadd.f32 0.0, %v5183
        %v5185 = vpop.f32.mrf.mxu0
        %5186 = vmatprep.mubr.bf16.mxu0 0
        %5187 = vmatmul.mubr.bf16.gmra.mxu0 %v5046
        %v5188 = vpop.f32.mrf.mxu0
        %v5189 = vadd.f32 0.0, %v5188
        %v5190 = vpop.f32.mrf.mxu0
        %v5191 = vpop.f32.mrf.mxu0
        %v5192 = vadd.f32 0.0, %v5191
        %v5193 = vpop.f32.mrf.mxu0
        %5194 = vmatprep.mubr.bf16.mxu0 0
        %5195 = vmatmul.mubr.bf16.gmra.mxu0 %v5047
        %v5196 = vpop.f32.mrf.mxu0
        %v5197 = vadd.f32 0.0, %v5196
        %v5198 = vpop.f32.mrf.mxu0
        %v5199 = vpop.f32.mrf.mxu0
        %v5200 = vadd.f32 0.0, %v5199
        %v5201 = vpop.f32.mrf.mxu0
        %5202 = vmatprep.mubr.bf16.mxu0 0
        %5203 = vmatmul.mubr.bf16.gmra.mxu0 %v5048
        %v5204 = vpop.f32.mrf.mxu0
        %v5205 = vadd.f32 0.0, %v5204
        %v5206 = vpop.f32.mrf.mxu0
        %v5207 = vpop.f32.mrf.mxu0
        %v5208 = vadd.f32 0.0, %v5207
        %v5209 = vpop.f32.mrf.mxu0
        %5210 = vmatprep.mubr.bf16.mxu0 0
        %5211 = vmatmul.mubr.bf16.gmra.mxu0 %v5049
        %v5212 = vpop.f32.mrf.mxu0
        %v5213 = vadd.f32 0.0, %v5212
        %v5214 = vpop.f32.mrf.mxu0
        %v5215 = vpop.f32.mrf.mxu0
        %v5216 = vadd.f32 0.0, %v5215
        %v5217 = vpop.f32.mrf.mxu0
        %5218 = vmatprep.mubr.bf16.mxu0 0
        %5219 = vmatmul.mubr.bf16.gmra.mxu0 %v5050
        %v5220 = vpop.f32.mrf.mxu0
        %v5221 = vadd.f32 0.0, %v5220
        %v5222 = vpop.f32.mrf.mxu0
        %v5223 = vpop.f32.mrf.mxu0
        %v5224 = vadd.f32 0.0, %v5223
        %v5225 = vpop.f32.mrf.mxu0
        %5226 = vmatprep.mubr.bf16.mxu0 0
        %5227 = vmatmul.mubr.bf16.gmra.mxu0 %v5051
        %v5228 = vpop.f32.mrf.mxu0
        %v5229 = vadd.f32 0.0, %v5228
        %v5230 = vpop.f32.mrf.mxu0
        %v5231 = vpop.f32.mrf.mxu0
        %v5232 = vadd.f32 0.0, %v5231
        %v5233 = vpop.f32.mrf.mxu0
        %5234 = vmatprep.mubr.bf16.mxu0 0
        %5235 = vmatmul.mubr.bf16.gmra.mxu0 %v5052
        %v5236 = vpop.f32.mrf.mxu0
        %v5237 = vadd.f32 0.0, %v5236
        %v5238 = vpop.f32.mrf.mxu0
        %v5239 = vpop.f32.mrf.mxu0
        %v5240 = vadd.f32 0.0, %v5239
        %v5241 = vpop.f32.mrf.mxu0
        %5242 = vmatprep.mubr.bf16.mxu0 0
        %5243 = vmatmul.mubr.bf16.gmra.mxu0 %v5053
        %v5244 = vpop.f32.mrf.mxu0
        %v5245 = vadd.f32 0.0, %v5244
        %v5246 = vpop.f32.mrf.mxu0
        %v5247 = vpop.f32.mrf.mxu0
        %v5248 = vadd.f32 0.0, %v5247
        %v5249 = vpop.f32.mrf.mxu0
        %5250 = vmatprep.mubr.bf16.mxu0 0
        %5251 = vmatmul.mubr.bf16.gmra.mxu0 %v5054
        %v5252 = vpop.f32.mrf.mxu0
        %v5253 = vadd.f32 0.0, %v5252
        %v5254 = vpop.f32.mrf.mxu0
        %v5255 = vpop.f32.mrf.mxu0
        %v5256 = vadd.f32 0.0, %v5255
        %v5257 = vpop.f32.mrf.mxu0
        %5258 = vmatprep.mubr.bf16.mxu0 0
        %5259 = vmatmul.mubr.bf16.gmra.mxu0 %v5055
        %v5260 = vpop.f32.mrf.mxu0
        %v5261 = vadd.f32 0.0, %v5260
        %v5262 = vpop.f32.mrf.mxu0
        %v5263 = vpop.f32.mrf.mxu0
        %v5264 = vadd.f32 0.0, %v5263
        %v5265 = vpop.f32.mrf.mxu0
        %5266 = vmatprep.mubr.bf16.mxu0 0
        %5267 = vmatmul.mubr.bf16.gmra.mxu0 %v5056
        %v5268 = vpop.f32.mrf.mxu0
        %v5269 = vadd.f32 0.0, %v5268
        %v5270 = vpop.f32.mrf.mxu0
        %v5271 = vpop.f32.mrf.mxu0
        %v5272 = vadd.f32 0.0, %v5271
        %v5273 = vpop.f32.mrf.mxu0
        %5274 = vmatprep.mubr.bf16.mxu0 0
        %5275 = vmatmul.mubr.bf16.gmra.mxu0 %v5057
        %v5276 = vpop.f32.mrf.mxu0
        %v5277 = vadd.f32 0.0, %v5276
        %v5278 = vpop.f32.mrf.mxu0
        %v5279 = vpop.f32.mrf.mxu0
        %v5280 = vadd.f32 0.0, %v5279
        %v5281 = vpop.f32.mrf.mxu0
        %5282 = vdwg.mxu0
        %v5283 = vadd.f32 %v4932, %v5157
        %v5284 = vadd.f32 %v4933, %v5160
        %v5285 = vadd.f32 %v4934, %v5165
        %v5286 = vadd.f32 %v4935, %v5168
        %v5287 = vadd.f32 %v4936, %v5173
        %v5288 = vadd.f32 %v4937, %v5176
        %v5289 = vadd.f32 %v4938, %v5181
        %v5290 = vadd.f32 %v4939, %v5184
        %v5291 = vadd.f32 %v4940, %v5189
        %v5292 = vadd.f32 %v4941, %v5192
        %v5293 = vadd.f32 %v4942, %v5197
        %v5294 = vadd.f32 %v4943, %v5200
        %v5295 = vadd.f32 %v4944, %v5205
        %v5296 = vadd.f32 %v4945, %v5208
        %v5297 = vadd.f32 %v4946, %v5213
        %v5298 = vadd.f32 %v4947, %v5216
        %v5299 = vadd.f32 %v4948, %v5221
        %v5300 = vadd.f32 %v4949, %v5224
        %v5301 = vadd.f32 %v4950, %v5229
        %v5302 = vadd.f32 %v4951, %v5232
        %v5303 = vadd.f32 %v4952, %v5237
        %v5304 = vadd.f32 %v4953, %v5240
        %v5305 = vadd.f32 %v4954, %v5245
        %v5306 = vadd.f32 %v4955, %v5248
        %v5307 = vadd.f32 %v4956, %v5253
        %v5308 = vadd.f32 %v4957, %v5256
        %v5309 = vadd.f32 %v4958, %v5261
        %v5310 = vadd.f32 %v4959, %v5264
        %v5311 = vadd.f32 %v4960, %v5269
        %v5312 = vadd.f32 %v4961, %v5272
        %v5313 = vadd.f32 %v4962, %v5277
        %v5314 = vadd.f32 %v4963, %v5280
        %s5315 = smul.addr %s2113, 4
        %s5316 = scalar_lea.vmem [#allocation4], %s5315
        %v5317 = vld [vmem:[%s5316] sm:$0xf]
        %v5318 = vld [vmem:[%s5316 + $0x4] sm:$0xf]
        %v5319 = vld [vmem:[%s5316 + $0x8] sm:$0xf]
        %v5320 = vld [vmem:[%s5316 + $0xc] sm:$0xf]
        %v5321 = vld [vmem:[%s5316 + $0x10] sm:$0xf]
        %v5322 = vld [vmem:[%s5316 + $0x14] sm:$0xf]
        %v5323 = vld [vmem:[%s5316 + $0x18] sm:$0xf]
        %v5324 = vld [vmem:[%s5316 + $0x1c] sm:$0xf]
        %v5325 = vld [vmem:[%s5316 + $0x20] sm:$0xf]
        %v5326 = vld [vmem:[%s5316 + $0x24] sm:$0xf]
        %v5327 = vld [vmem:[%s5316 + $0x28] sm:$0xf]
        %v5328 = vld [vmem:[%s5316 + $0x2c] sm:$0xf]
        %v5329 = vld [vmem:[%s5316 + $0x30] sm:$0xf]
        %v5330 = vld [vmem:[%s5316 + $0x34] sm:$0xf]
        %v5331 = vld [vmem:[%s5316 + $0x38] sm:$0xf]
        %v5332 = vld [vmem:[%s5316 + $0x3c] sm:$0xf]
        %v5337 = vunpack.c.l.b16 %v3598
        %v5338 = vunpack.c.l.b16 %v3606
        %v5339 = vunpack.c.l.b16 %v3614
        %v5340 = vunpack.c.l.b16 %v3622
        %v5341 = vpack.c.b16 %v4052, %v4051
        %v5342 = vpack.c.b16 %v4054, %v4053
        %v5343 = vpack.c.b16 %v4056, %v4055
        %v5344 = vpack.c.b16 %v5337, %v4057
        %v5345 = vpack.c.b16 %v4059, %v4058
        %v5346 = vpack.c.b16 %v4061, %v4060
        %v5347 = vpack.c.b16 %v4063, %v4062
        %v5348 = vpack.c.b16 %v5338, %v4064
        %v5349 = vpack.c.b16 %v4066, %v4065
        %v5350 = vpack.c.b16 %v4068, %v4067
        %v5351 = vpack.c.b16 %v4070, %v4069
        %v5352 = vpack.c.b16 %v5339, %v4071
        %v5353 = vpack.c.b16 %v4073, %v4072
        %v5354 = vpack.c.b16 %v4075, %v4074
        %v5355 = vpack.c.b16 %v4077, %v4076
        %v5356 = vpack.c.b16 %v5340, %v4078
        %v5389 = vunpack.c.l.b16 %v5317
        %v5390 = vunpack.c.l.b16 %v5318
        %v5391 = vunpack.c.l.b16 %v5319
        %v5392 = vunpack.c.l.b16 %v5320
        %v5393 = vunpack.c.l.b16 %v5321
        %v5394 = vunpack.c.l.b16 %v5322
        %v5395 = vunpack.c.l.b16 %v5323
        %v5396 = vunpack.c.l.b16 %v5324
        %v5397 = vunpack.c.l.b16 %v5325
        %v5398 = vunpack.c.l.b16 %v5326
        %v5399 = vunpack.c.l.b16 %v5327
        %v5400 = vunpack.c.l.b16 %v5328
        %v5401 = vunpack.c.l.b16 %v5329
        %v5402 = vunpack.c.l.b16 %v5330
        %v5403 = vunpack.c.l.b16 %v5331
        %v5404 = vunpack.c.l.b16 %v5332
        %v5405 = vpack.c.b16 %v5390, %v5389
        %v5406 = vpack.c.b16 %v5392, %v5391
        %v5407 = vpack.c.b16 %v5394, %v5393
        %v5408 = vpack.c.b16 %v5396, %v5395
        %v5409 = vpack.c.b16 %v5398, %v5397
        %v5410 = vpack.c.b16 %v5400, %v5399
        %v5411 = vpack.c.b16 %v5402, %v5401
        %v5412 = vpack.c.b16 %v5404, %v5403
        %5421 = vmatprep.subr.bf16.mxu0 0
        %5422 = vmatpush1.bf16.msra.mxu0 %v5412
        %5423 = vmatprep.subr.bf16.mxu0 0
        %5424 = vmatpush1.bf16.msra.mxu0 %v5411
        %5425 = vmatprep.subr.bf16.mxu0 0
        %5426 = vmatpush1.bf16.msra.mxu0 %v5410
        %5427 = vmatprep.subr.bf16.mxu0 0
        %5428 = vmatpush1.bf16.msra.mxu0 %v5409
        %5429 = vmatprep.subr.bf16.mxu0 0
        %5430 = vmatpush1.bf16.msra.mxu0 %v5408
        %5431 = vmatprep.subr.bf16.mxu0 0
        %5432 = vmatpush1.bf16.msra.mxu0 %v5407
        %5433 = vmatprep.subr.bf16.mxu0 0
        %5434 = vmatpush1.bf16.msra.mxu0 %v5406
        %5435 = vmatprep.subr.bf16.mxu0 0
        %5436 = vmatpush1.bf16.msra.mxu0 %v5405
        %5437 = vmatprep.subr.bf16.mxu0 0
        %5438 = vmatpush2.bf16.msra.mxu0 0
        %5439 = vmatprep.subr.bf16.mxu0 0
        %5440 = vmatpush2.bf16.msra.mxu0 0
        %5441 = vmatprep.subr.bf16.mxu0 0
        %5442 = vmatpush2.bf16.msra.mxu0 0
        %5443 = vmatprep.subr.bf16.mxu0 0
        %5444 = vmatpush2.bf16.msra.mxu0 0
        %5445 = vmatprep.subr.bf16.mxu0 0
        %5446 = vmatpush2.bf16.msra.mxu0 0
        %5447 = vmatprep.subr.bf16.mxu0 0
        %5448 = vmatpush2.bf16.msra.mxu0 0
        %5449 = vmatprep.subr.bf16.mxu0 0
        %5450 = vmatpush2.bf16.msra.mxu0 0
        %5451 = vmatprep.subr.bf16.mxu0 0
        %5452 = vmatpush2.bf16.msra.mxu0 0
        %5453 = vmatprep.mubr.bf16.mxu0 0
        %5454 = vmatmul.mubr.bf16.gmra.mxu0 %v5341
        %v5455 = vpop.f32.mrf.mxu0
        %v5456 = vadd.f32 0.0, %v5455
        %v5457 = vpop.f32.mrf.mxu0
        %v5458 = vpop.f32.mrf.mxu0
        %v5459 = vadd.f32 0.0, %v5458
        %v5460 = vpop.f32.mrf.mxu0
        %5461 = vmatprep.mubr.bf16.mxu0 0
        %5462 = vmatmul.mubr.bf16.gmra.mxu0 %v5342
        %v5463 = vpop.f32.mrf.mxu0
        %v5464 = vadd.f32 0.0, %v5463
        %v5465 = vpop.f32.mrf.mxu0
        %v5466 = vpop.f32.mrf.mxu0
        %v5467 = vadd.f32 0.0, %v5466
        %v5468 = vpop.f32.mrf.mxu0
        %5469 = vmatprep.mubr.bf16.mxu0 0
        %5470 = vmatmul.mubr.bf16.gmra.mxu0 %v5343
        %v5471 = vpop.f32.mrf.mxu0
        %v5472 = vadd.f32 0.0, %v5471
        %v5473 = vpop.f32.mrf.mxu0
        %v5474 = vpop.f32.mrf.mxu0
        %v5475 = vadd.f32 0.0, %v5474
        %v5476 = vpop.f32.mrf.mxu0
        %5477 = vmatprep.mubr.bf16.mxu0 0
        %5478 = vmatmul.mubr.bf16.gmra.mxu0 %v5344
        %v5479 = vpop.f32.mrf.mxu0
        %v5480 = vadd.f32 0.0, %v5479
        %v5481 = vpop.f32.mrf.mxu0
        %v5482 = vpop.f32.mrf.mxu0
        %v5483 = vadd.f32 0.0, %v5482
        %v5484 = vpop.f32.mrf.mxu0
        %5485 = vmatprep.mubr.bf16.mxu0 0
        %5486 = vmatmul.mubr.bf16.gmra.mxu0 %v5345
        %v5487 = vpop.f32.mrf.mxu0
        %v5488 = vadd.f32 0.0, %v5487
        %v5489 = vpop.f32.mrf.mxu0
        %v5490 = vpop.f32.mrf.mxu0
        %v5491 = vadd.f32 0.0, %v5490
        %v5492 = vpop.f32.mrf.mxu0
        %5493 = vmatprep.mubr.bf16.mxu0 0
        %5494 = vmatmul.mubr.bf16.gmra.mxu0 %v5346
        %v5495 = vpop.f32.mrf.mxu0
        %v5496 = vadd.f32 0.0, %v5495
        %v5497 = vpop.f32.mrf.mxu0
        %v5498 = vpop.f32.mrf.mxu0
        %v5499 = vadd.f32 0.0, %v5498
        %v5500 = vpop.f32.mrf.mxu0
        %5501 = vmatprep.mubr.bf16.mxu0 0
        %5502 = vmatmul.mubr.bf16.gmra.mxu0 %v5347
        %v5503 = vpop.f32.mrf.mxu0
        %v5504 = vadd.f32 0.0, %v5503
        %v5505 = vpop.f32.mrf.mxu0
        %v5506 = vpop.f32.mrf.mxu0
        %v5507 = vadd.f32 0.0, %v5506
        %v5508 = vpop.f32.mrf.mxu0
        %5509 = vmatprep.mubr.bf16.mxu0 0
        %5510 = vmatmul.mubr.bf16.gmra.mxu0 %v5348
        %v5511 = vpop.f32.mrf.mxu0
        %v5512 = vadd.f32 0.0, %v5511
        %v5513 = vpop.f32.mrf.mxu0
        %v5514 = vpop.f32.mrf.mxu0
        %v5515 = vadd.f32 0.0, %v5514
        %v5516 = vpop.f32.mrf.mxu0
        %5517 = vmatprep.mubr.bf16.mxu0 0
        %5518 = vmatmul.mubr.bf16.gmra.mxu0 %v5349
        %v5519 = vpop.f32.mrf.mxu0
        %v5520 = vadd.f32 0.0, %v5519
        %v5521 = vpop.f32.mrf.mxu0
        %v5522 = vpop.f32.mrf.mxu0
        %v5523 = vadd.f32 0.0, %v5522
        %v5524 = vpop.f32.mrf.mxu0
        %5525 = vmatprep.mubr.bf16.mxu0 0
        %5526 = vmatmul.mubr.bf16.gmra.mxu0 %v5350
        %v5527 = vpop.f32.mrf.mxu0
        %v5528 = vadd.f32 0.0, %v5527
        %v5529 = vpop.f32.mrf.mxu0
        %v5530 = vpop.f32.mrf.mxu0
        %v5531 = vadd.f32 0.0, %v5530
        %v5532 = vpop.f32.mrf.mxu0
        %5533 = vmatprep.mubr.bf16.mxu0 0
        %5534 = vmatmul.mubr.bf16.gmra.mxu0 %v5351
        %v5535 = vpop.f32.mrf.mxu0
        %v5536 = vadd.f32 0.0, %v5535
        %v5537 = vpop.f32.mrf.mxu0
        %v5538 = vpop.f32.mrf.mxu0
        %v5539 = vadd.f32 0.0, %v5538
        %v5540 = vpop.f32.mrf.mxu0
        %5541 = vmatprep.mubr.bf16.mxu0 0
        %5542 = vmatmul.mubr.bf16.gmra.mxu0 %v5352
        %v5543 = vpop.f32.mrf.mxu0
        %v5544 = vadd.f32 0.0, %v5543
        %v5545 = vpop.f32.mrf.mxu0
        %v5546 = vpop.f32.mrf.mxu0
        %v5547 = vadd.f32 0.0, %v5546
        %v5548 = vpop.f32.mrf.mxu0
        %5549 = vmatprep.mubr.bf16.mxu0 0
        %5550 = vmatmul.mubr.bf16.gmra.mxu0 %v5353
        %v5551 = vpop.f32.mrf.mxu0
        %v5552 = vadd.f32 0.0, %v5551
        %v5553 = vpop.f32.mrf.mxu0
        %v5554 = vpop.f32.mrf.mxu0
        %v5555 = vadd.f32 0.0, %v5554
        %v5556 = vpop.f32.mrf.mxu0
        %5557 = vmatprep.mubr.bf16.mxu0 0
        %5558 = vmatmul.mubr.bf16.gmra.mxu0 %v5354
        %v5559 = vpop.f32.mrf.mxu0
        %v5560 = vadd.f32 0.0, %v5559
        %v5561 = vpop.f32.mrf.mxu0
        %v5562 = vpop.f32.mrf.mxu0
        %v5563 = vadd.f32 0.0, %v5562
        %v5564 = vpop.f32.mrf.mxu0
        %5565 = vmatprep.mubr.bf16.mxu0 0
        %5566 = vmatmul.mubr.bf16.gmra.mxu0 %v5355
        %v5567 = vpop.f32.mrf.mxu0
        %v5568 = vadd.f32 0.0, %v5567
        %v5569 = vpop.f32.mrf.mxu0
        %v5570 = vpop.f32.mrf.mxu0
        %v5571 = vadd.f32 0.0, %v5570
        %v5572 = vpop.f32.mrf.mxu0
        %5573 = vmatprep.mubr.bf16.mxu0 0
        %5574 = vmatmul.mubr.bf16.gmra.mxu0 %v5356
        %v5575 = vpop.f32.mrf.mxu0
        %v5576 = vadd.f32 0.0, %v5575
        %v5577 = vpop.f32.mrf.mxu0
        %v5578 = vpop.f32.mrf.mxu0
        %v5579 = vadd.f32 0.0, %v5578
        %v5580 = vpop.f32.mrf.mxu0
        %5581 = vdwg.mxu0
        %v5582 = vadd.f32 %v5283, %v5456
        %v5583 = vadd.f32 %v5284, %v5459
        %v5584 = vadd.f32 %v5285, %v5464
        %v5585 = vadd.f32 %v5286, %v5467
        %v5586 = vadd.f32 %v5287, %v5472
        %v5587 = vadd.f32 %v5288, %v5475
        %v5588 = vadd.f32 %v5289, %v5480
        %v5589 = vadd.f32 %v5290, %v5483
        %v5590 = vadd.f32 %v5291, %v5488
        %v5591 = vadd.f32 %v5292, %v5491
        %v5592 = vadd.f32 %v5293, %v5496
        %v5593 = vadd.f32 %v5294, %v5499
        %v5594 = vadd.f32 %v5295, %v5504
        %v5595 = vadd.f32 %v5296, %v5507
        %v5596 = vadd.f32 %v5297, %v5512
        %v5597 = vadd.f32 %v5298, %v5515
        %v5598 = vadd.f32 %v5299, %v5520
        %v5599 = vadd.f32 %v5300, %v5523
        %v5600 = vadd.f32 %v5301, %v5528
        %v5601 = vadd.f32 %v5302, %v5531
        %v5602 = vadd.f32 %v5303, %v5536
        %v5603 = vadd.f32 %v5304, %v5539
        %v5604 = vadd.f32 %v5305, %v5544
        %v5605 = vadd.f32 %v5306, %v5547
        %v5606 = vadd.f32 %v5307, %v5552
        %v5607 = vadd.f32 %v5308, %v5555
        %v5608 = vadd.f32 %v5309, %v5560
        %v5609 = vadd.f32 %v5310, %v5563
        %v5610 = vadd.f32 %v5311, %v5568
        %v5611 = vadd.f32 %v5312, %v5571
        %v5612 = vadd.f32 %v5313, %v5576
        %v5613 = vadd.f32 %v5314, %v5579
        %s5614 = smul.addr %s2414, 4
        %s5615 = scalar_lea.vmem [#allocation4], %s5614
        %v5616 = vld [vmem:[%s5615] sm:$0xf]
        %v5617 = vld [vmem:[%s5615 + $0x4] sm:$0xf]
        %v5618 = vld [vmem:[%s5615 + $0x8] sm:$0xf]
        %v5619 = vld [vmem:[%s5615 + $0xc] sm:$0xf]
        %v5620 = vld [vmem:[%s5615 + $0x10] sm:$0xf]
        %v5621 = vld [vmem:[%s5615 + $0x14] sm:$0xf]
        %v5622 = vld [vmem:[%s5615 + $0x18] sm:$0xf]
        %v5623 = vld [vmem:[%s5615 + $0x1c] sm:$0xf]
        %v5624 = vld [vmem:[%s5615 + $0x20] sm:$0xf]
        %v5625 = vld [vmem:[%s5615 + $0x24] sm:$0xf]
        %v5626 = vld [vmem:[%s5615 + $0x28] sm:$0xf]
        %v5627 = vld [vmem:[%s5615 + $0x2c] sm:$0xf]
        %v5628 = vld [vmem:[%s5615 + $0x30] sm:$0xf]
        %v5629 = vld [vmem:[%s5615 + $0x34] sm:$0xf]
        %v5630 = vld [vmem:[%s5615 + $0x38] sm:$0xf]
        %v5631 = vld [vmem:[%s5615 + $0x3c] sm:$0xf]
        %v5636 = vunpack.c.l.b16 %v5012
        %v5637 = vunpack.c.l.b16 %v5013
        %v5638 = vunpack.c.l.b16 %v5014
        %v5639 = vunpack.c.l.b16 %v5015
        %v5640 = vpack.c.b16 %v4664, %v4663
        %v5641 = vpack.c.b16 %v4666, %v4665
        %v5642 = vpack.c.b16 %v4668, %v4667
        %v5643 = vpack.c.b16 %v5636, %v4669
        %v5644 = vpack.c.b16 %v4671, %v4670
        %v5645 = vpack.c.b16 %v4673, %v4672
        %v5646 = vpack.c.b16 %v4675, %v4674
        %v5647 = vpack.c.b16 %v5637, %v4676
        %v5648 = vpack.c.b16 %v4678, %v4677
        %v5649 = vpack.c.b16 %v4680, %v4679
        %v5650 = vpack.c.b16 %v4682, %v4681
        %v5651 = vpack.c.b16 %v5638, %v4683
        %v5652 = vpack.c.b16 %v4685, %v4684
        %v5653 = vpack.c.b16 %v4687, %v4686
        %v5654 = vpack.c.b16 %v4689, %v4688
        %v5655 = vpack.c.b16 %v5639, %v4690
        %v5688 = vunpack.c.l.b16 %v5616
        %v5689 = vunpack.c.l.b16 %v5617
        %v5690 = vunpack.c.l.b16 %v5618
        %v5691 = vunpack.c.l.b16 %v5619
        %v5692 = vunpack.c.l.b16 %v5620
        %v5693 = vunpack.c.l.b16 %v5621
        %v5694 = vunpack.c.l.b16 %v5622
        %v5695 = vunpack.c.l.b16 %v5623
        %v5696 = vunpack.c.l.b16 %v5624
        %v5697 = vunpack.c.l.b16 %v5625
        %v5698 = vunpack.c.l.b16 %v5626
        %v5699 = vunpack.c.l.b16 %v5627
        %v5700 = vunpack.c.l.b16 %v5628
        %v5701 = vunpack.c.l.b16 %v5629
        %v5702 = vunpack.c.l.b16 %v5630
        %v5703 = vunpack.c.l.b16 %v5631
        %v5704 = vpack.c.b16 %v5689, %v5688
        %v5705 = vpack.c.b16 %v5691, %v5690
        %v5706 = vpack.c.b16 %v5693, %v5692
        %v5707 = vpack.c.b16 %v5695, %v5694
        %v5708 = vpack.c.b16 %v5697, %v5696
        %v5709 = vpack.c.b16 %v5699, %v5698
        %v5710 = vpack.c.b16 %v5701, %v5700
        %v5711 = vpack.c.b16 %v5703, %v5702
        %5720 = vmatprep.subr.bf16.mxu0 0
        %5721 = vmatpush1.bf16.msra.mxu0 %v5711
        %5722 = vmatprep.subr.bf16.mxu0 0
        %5723 = vmatpush1.bf16.msra.mxu0 %v5710
        %5724 = vmatprep.subr.bf16.mxu0 0
        %5725 = vmatpush1.bf16.msra.mxu0 %v5709
        %5726 = vmatprep.subr.bf16.mxu0 0
        %5727 = vmatpush1.bf16.msra.mxu0 %v5708
        %5728 = vmatprep.subr.bf16.mxu0 0
        %5729 = vmatpush1.bf16.msra.mxu0 %v5707
        %5730 = vmatprep.subr.bf16.mxu0 0
        %5731 = vmatpush1.bf16.msra.mxu0 %v5706
        %5732 = vmatprep.subr.bf16.mxu0 0
        %5733 = vmatpush1.bf16.msra.mxu0 %v5705
        %5734 = vmatprep.subr.bf16.mxu0 0
        %5735 = vmatpush1.bf16.msra.mxu0 %v5704
        %5736 = vmatprep.subr.bf16.mxu0 0
        %5737 = vmatpush2.bf16.msra.mxu0 0
        %5738 = vmatprep.subr.bf16.mxu0 0
        %5739 = vmatpush2.bf16.msra.mxu0 0
        %5740 = vmatprep.subr.bf16.mxu0 0
        %5741 = vmatpush2.bf16.msra.mxu0 0
        %5742 = vmatprep.subr.bf16.mxu0 0
        %5743 = vmatpush2.bf16.msra.mxu0 0
        %5744 = vmatprep.subr.bf16.mxu0 0
        %5745 = vmatpush2.bf16.msra.mxu0 0
        %5746 = vmatprep.subr.bf16.mxu0 0
        %5747 = vmatpush2.bf16.msra.mxu0 0
        %5748 = vmatprep.subr.bf16.mxu0 0
        %5749 = vmatpush2.bf16.msra.mxu0 0
        %5750 = vmatprep.subr.bf16.mxu0 0
        %5751 = vmatpush2.bf16.msra.mxu0 0
        %5752 = vmatprep.mubr.bf16.mxu0 0
        %5753 = vmatmul.mubr.bf16.gmra.mxu0 %v5640
        %v5754 = vpop.f32.mrf.mxu0
        %v5755 = vadd.f32 0.0, %v5754
        %v5756 = vpop.f32.mrf.mxu0
        %v5757 = vpop.f32.mrf.mxu0
        %v5758 = vadd.f32 0.0, %v5757
        %v5759 = vpop.f32.mrf.mxu0
        %5760 = vmatprep.mubr.bf16.mxu0 0
        %5761 = vmatmul.mubr.bf16.gmra.mxu0 %v5641
        %v5762 = vpop.f32.mrf.mxu0
        %v5763 = vadd.f32 0.0, %v5762
        %v5764 = vpop.f32.mrf.mxu0
        %v5765 = vpop.f32.mrf.mxu0
        %v5766 = vadd.f32 0.0, %v5765
        %v5767 = vpop.f32.mrf.mxu0
        %5768 = vmatprep.mubr.bf16.mxu0 0
        %5769 = vmatmul.mubr.bf16.gmra.mxu0 %v5642
        %v5770 = vpop.f32.mrf.mxu0
        %v5771 = vadd.f32 0.0, %v5770
        %v5772 = vpop.f32.mrf.mxu0
        %v5773 = vpop.f32.mrf.mxu0
        %v5774 = vadd.f32 0.0, %v5773
        %v5775 = vpop.f32.mrf.mxu0
        %5776 = vmatprep.mubr.bf16.mxu0 0
        %5777 = vmatmul.mubr.bf16.gmra.mxu0 %v5643
        %v5778 = vpop.f32.mrf.mxu0
        %v5779 = vadd.f32 0.0, %v5778
        %v5780 = vpop.f32.mrf.mxu0
        %v5781 = vpop.f32.mrf.mxu0
        %v5782 = vadd.f32 0.0, %v5781
        %v5783 = vpop.f32.mrf.mxu0
        %5784 = vmatprep.mubr.bf16.mxu0 0
        %5785 = vmatmul.mubr.bf16.gmra.mxu0 %v5644
        %v5786 = vpop.f32.mrf.mxu0
        %v5787 = vadd.f32 0.0, %v5786
        %v5788 = vpop.f32.mrf.mxu0
        %v5789 = vpop.f32.mrf.mxu0
        %v5790 = vadd.f32 0.0, %v5789
        %v5791 = vpop.f32.mrf.mxu0
        %5792 = vmatprep.mubr.bf16.mxu0 0
        %5793 = vmatmul.mubr.bf16.gmra.mxu0 %v5645
        %v5794 = vpop.f32.mrf.mxu0
        %v5795 = vadd.f32 0.0, %v5794
        %v5796 = vpop.f32.mrf.mxu0
        %v5797 = vpop.f32.mrf.mxu0
        %v5798 = vadd.f32 0.0, %v5797
        %v5799 = vpop.f32.mrf.mxu0
        %5800 = vmatprep.mubr.bf16.mxu0 0
        %5801 = vmatmul.mubr.bf16.gmra.mxu0 %v5646
        %v5802 = vpop.f32.mrf.mxu0
        %v5803 = vadd.f32 0.0, %v5802
        %v5804 = vpop.f32.mrf.mxu0
        %v5805 = vpop.f32.mrf.mxu0
        %v5806 = vadd.f32 0.0, %v5805
        %v5807 = vpop.f32.mrf.mxu0
        %5808 = vmatprep.mubr.bf16.mxu0 0
        %5809 = vmatmul.mubr.bf16.gmra.mxu0 %v5647
        %v5810 = vpop.f32.mrf.mxu0
        %v5811 = vadd.f32 0.0, %v5810
        %v5812 = vpop.f32.mrf.mxu0
        %v5813 = vpop.f32.mrf.mxu0
        %v5814 = vadd.f32 0.0, %v5813
        %v5815 = vpop.f32.mrf.mxu0
        %5816 = vmatprep.mubr.bf16.mxu0 0
        %5817 = vmatmul.mubr.bf16.gmra.mxu0 %v5648
        %v5818 = vpop.f32.mrf.mxu0
        %v5819 = vadd.f32 0.0, %v5818
        %v5820 = vpop.f32.mrf.mxu0
        %v5821 = vpop.f32.mrf.mxu0
        %v5822 = vadd.f32 0.0, %v5821
        %v5823 = vpop.f32.mrf.mxu0
        %5824 = vmatprep.mubr.bf16.mxu0 0
        %5825 = vmatmul.mubr.bf16.gmra.mxu0 %v5649
        %v5826 = vpop.f32.mrf.mxu0
        %v5827 = vadd.f32 0.0, %v5826
        %v5828 = vpop.f32.mrf.mxu0
        %v5829 = vpop.f32.mrf.mxu0
        %v5830 = vadd.f32 0.0, %v5829
        %v5831 = vpop.f32.mrf.mxu0
        %5832 = vmatprep.mubr.bf16.mxu0 0
        %5833 = vmatmul.mubr.bf16.gmra.mxu0 %v5650
        %v5834 = vpop.f32.mrf.mxu0
        %v5835 = vadd.f32 0.0, %v5834
        %v5836 = vpop.f32.mrf.mxu0
        %v5837 = vpop.f32.mrf.mxu0
        %v5838 = vadd.f32 0.0, %v5837
        %v5839 = vpop.f32.mrf.mxu0
        %5840 = vmatprep.mubr.bf16.mxu0 0
        %5841 = vmatmul.mubr.bf16.gmra.mxu0 %v5651
        %v5842 = vpop.f32.mrf.mxu0
        %v5843 = vadd.f32 0.0, %v5842
        %v5844 = vpop.f32.mrf.mxu0
        %v5845 = vpop.f32.mrf.mxu0
        %v5846 = vadd.f32 0.0, %v5845
        %v5847 = vpop.f32.mrf.mxu0
        %5848 = vmatprep.mubr.bf16.mxu0 0
        %5849 = vmatmul.mubr.bf16.gmra.mxu0 %v5652
        %v5850 = vpop.f32.mrf.mxu0
        %v5851 = vadd.f32 0.0, %v5850
        %v5852 = vpop.f32.mrf.mxu0
        %v5853 = vpop.f32.mrf.mxu0
        %v5854 = vadd.f32 0.0, %v5853
        %v5855 = vpop.f32.mrf.mxu0
        %5856 = vmatprep.mubr.bf16.mxu0 0
        %5857 = vmatmul.mubr.bf16.gmra.mxu0 %v5653
        %v5858 = vpop.f32.mrf.mxu0
        %v5859 = vadd.f32 0.0, %v5858
        %v5860 = vpop.f32.mrf.mxu0
        %v5861 = vpop.f32.mrf.mxu0
        %v5862 = vadd.f32 0.0, %v5861
        %v5863 = vpop.f32.mrf.mxu0
        %5864 = vmatprep.mubr.bf16.mxu0 0
        %5865 = vmatmul.mubr.bf16.gmra.mxu0 %v5654
        %v5866 = vpop.f32.mrf.mxu0
        %v5867 = vadd.f32 0.0, %v5866
        %v5868 = vpop.f32.mrf.mxu0
        %v5869 = vpop.f32.mrf.mxu0
        %v5870 = vadd.f32 0.0, %v5869
        %v5871 = vpop.f32.mrf.mxu0
        %5872 = vmatprep.mubr.bf16.mxu0 0
        %5873 = vmatmul.mubr.bf16.gmra.mxu0 %v5655
        %v5874 = vpop.f32.mrf.mxu0
        %v5875 = vadd.f32 0.0, %v5874
        %v5876 = vpop.f32.mrf.mxu0
        %v5877 = vpop.f32.mrf.mxu0
        %v5878 = vadd.f32 0.0, %v5877
        %v5879 = vpop.f32.mrf.mxu0
        %5880 = vdwg.mxu0
        %v5881 = vadd.f32 %v5582, %v5755
        %v5882 = vadd.f32 %v5583, %v5758
        %v5883 = vadd.f32 %v5584, %v5763
        %v5884 = vadd.f32 %v5585, %v5766
        %v5885 = vadd.f32 %v5586, %v5771
        %v5886 = vadd.f32 %v5587, %v5774
        %v5887 = vadd.f32 %v5588, %v5779
        %v5888 = vadd.f32 %v5589, %v5782
        %v5889 = vadd.f32 %v5590, %v5787
        %v5890 = vadd.f32 %v5591, %v5790
        %v5891 = vadd.f32 %v5592, %v5795
        %v5892 = vadd.f32 %v5593, %v5798
        %v5893 = vadd.f32 %v5594, %v5803
        %v5894 = vadd.f32 %v5595, %v5806
        %v5895 = vadd.f32 %v5596, %v5811
        %v5896 = vadd.f32 %v5597, %v5814
        %v5897 = vadd.f32 %v5598, %v5819
        %v5898 = vadd.f32 %v5599, %v5822
        %v5899 = vadd.f32 %v5600, %v5827
        %v5900 = vadd.f32 %v5601, %v5830
        %v5901 = vadd.f32 %v5602, %v5835
        %v5902 = vadd.f32 %v5603, %v5838
        %v5903 = vadd.f32 %v5604, %v5843
        %v5904 = vadd.f32 %v5605, %v5846
        %v5905 = vadd.f32 %v5606, %v5851
        %v5906 = vadd.f32 %v5607, %v5854
        %v5907 = vadd.f32 %v5608, %v5859
        %v5908 = vadd.f32 %v5609, %v5862
        %v5909 = vadd.f32 %v5610, %v5867
        %v5910 = vadd.f32 %v5611, %v5870
        %v5911 = vadd.f32 %v5612, %v5875
        %v5912 = vadd.f32 %v5613, %v5878
        %s5913 = smul.addr %s2715, 4
        %s5914 = scalar_lea.vmem [#allocation4], %s5913
        %v5915 = vld [vmem:[%s5914] sm:$0xf]
        %v5916 = vld [vmem:[%s5914 + $0x4] sm:$0xf]
        %v5917 = vld [vmem:[%s5914 + $0x8] sm:$0xf]
        %v5918 = vld [vmem:[%s5914 + $0xc] sm:$0xf]
        %v5919 = vld [vmem:[%s5914 + $0x10] sm:$0xf]
        %v5920 = vld [vmem:[%s5914 + $0x14] sm:$0xf]
        %v5921 = vld [vmem:[%s5914 + $0x18] sm:$0xf]
        %v5922 = vld [vmem:[%s5914 + $0x1c] sm:$0xf]
        %v5923 = vld [vmem:[%s5914 + $0x20] sm:$0xf]
        %v5924 = vld [vmem:[%s5914 + $0x24] sm:$0xf]
        %v5925 = vld [vmem:[%s5914 + $0x28] sm:$0xf]
        %v5926 = vld [vmem:[%s5914 + $0x2c] sm:$0xf]
        %v5927 = vld [vmem:[%s5914 + $0x30] sm:$0xf]
        %v5928 = vld [vmem:[%s5914 + $0x34] sm:$0xf]
        %v5929 = vld [vmem:[%s5914 + $0x38] sm:$0xf]
        %v5930 = vld [vmem:[%s5914 + $0x3c] sm:$0xf]
        %v5931 = vpack.c.b16 %v1138, %v5038
        %v5932 = vpack.c.b16 %v1138, %v5039
        %v5933 = vpack.c.b16 %v1138, %v5040
        %v5934 = vpack.c.b16 %v1138, %v5041
        %v5955 = vunpack.c.l.b16 %v5915
        %v5956 = vunpack.c.l.b16 %v5916
        %v5957 = vunpack.c.l.b16 %v5917
        %v5958 = vunpack.c.l.b16 %v5918
        %v5959 = vunpack.c.l.b16 %v5919
        %v5960 = vunpack.c.l.b16 %v5920
        %v5961 = vunpack.c.l.b16 %v5921
        %v5962 = vunpack.c.l.b16 %v5922
        %v5963 = vunpack.c.l.b16 %v5923
        %v5964 = vunpack.c.l.b16 %v5924
        %v5965 = vunpack.c.l.b16 %v5925
        %v5966 = vunpack.c.l.b16 %v5926
        %v5967 = vunpack.c.l.b16 %v5927
        %v5968 = vunpack.c.l.b16 %v5928
        %v5969 = vunpack.c.l.b16 %v5929
        %v5970 = vunpack.c.l.b16 %v5930
        %v5971 = vpack.c.b16 %v5956, %v5955
        %v5972 = vpack.c.b16 %v5958, %v5957
        %v5973 = vpack.c.b16 %v5960, %v5959
        %v5974 = vpack.c.b16 %v5962, %v5961
        %v5975 = vpack.c.b16 %v5964, %v5963
        %v5976 = vpack.c.b16 %v5966, %v5965
        %v5977 = vpack.c.b16 %v5968, %v5967
        %v5978 = vpack.c.b16 %v5970, %v5969
        %5987 = vmatprep.subr.bf16.mxu0 0
        %5988 = vmatpush1.bf16.msra.mxu0 %v5978
        %5989 = vmatprep.subr.bf16.mxu0 0
        %5990 = vmatpush1.bf16.msra.mxu0 %v5977
        %5991 = vmatprep.subr.bf16.mxu0 0
        %5992 = vmatpush1.bf16.msra.mxu0 %v5976
        %5993 = vmatprep.subr.bf16.mxu0 0
        %5994 = vmatpush1.bf16.msra.mxu0 %v5975
        %5995 = vmatprep.subr.bf16.mxu0 0
        %5996 = vmatpush1.bf16.msra.mxu0 %v5974
        %5997 = vmatprep.subr.bf16.mxu0 0
        %5998 = vmatpush1.bf16.msra.mxu0 %v5973
        %5999 = vmatprep.subr.bf16.mxu0 0
        %6000 = vmatpush1.bf16.msra.mxu0 %v5972
        %6001 = vmatprep.subr.bf16.mxu0 0
        %6002 = vmatpush1.bf16.msra.mxu0 %v5971
        %6003 = vmatprep.subr.bf16.mxu0 0
        %6004 = vmatpush2.bf16.msra.mxu0 0
        %6005 = vmatprep.subr.bf16.mxu0 0
        %6006 = vmatpush2.bf16.msra.mxu0 0
        %6007 = vmatprep.subr.bf16.mxu0 0
        %6008 = vmatpush2.bf16.msra.mxu0 0
        %6009 = vmatprep.subr.bf16.mxu0 0
        %6010 = vmatpush2.bf16.msra.mxu0 0
        %6011 = vmatprep.subr.bf16.mxu0 0
        %6012 = vmatpush2.bf16.msra.mxu0 0
        %6013 = vmatprep.subr.bf16.mxu0 0
        %6014 = vmatpush2.bf16.msra.mxu0 0
        %6015 = vmatprep.subr.bf16.mxu0 0
        %6016 = vmatpush2.bf16.msra.mxu0 0
        %6017 = vmatprep.subr.bf16.mxu0 0
        %6018 = vmatpush2.bf16.msra.mxu0 0
        %6019 = vmatprep.mubr.bf16.mxu0 0
        %6020 = vmatmul.mubr.bf16.gmra.mxu0 %v4377
        %v6021 = vpop.f32.mrf.mxu0
        %v6022 = vadd.f32 0.0, %v6021
        %v6023 = vpop.f32.mrf.mxu0
        %v6024 = vpop.f32.mrf.mxu0
        %v6025 = vadd.f32 0.0, %v6024
        %v6026 = vpop.f32.mrf.mxu0
        %6027 = vmatprep.mubr.bf16.mxu0 0
        %6028 = vmatmul.mubr.bf16.gmra.mxu0 %v4378
        %v6029 = vpop.f32.mrf.mxu0
        %v6030 = vadd.f32 0.0, %v6029
        %v6031 = vpop.f32.mrf.mxu0
        %v6032 = vpop.f32.mrf.mxu0
        %v6033 = vadd.f32 0.0, %v6032
        %v6034 = vpop.f32.mrf.mxu0
        %6035 = vmatprep.mubr.bf16.mxu0 0
        %6036 = vmatmul.mubr.bf16.gmra.mxu0 %v4379
        %v6037 = vpop.f32.mrf.mxu0
        %v6038 = vadd.f32 0.0, %v6037
        %v6039 = vpop.f32.mrf.mxu0
        %v6040 = vpop.f32.mrf.mxu0
        %v6041 = vadd.f32 0.0, %v6040
        %v6042 = vpop.f32.mrf.mxu0
        %6043 = vmatprep.mubr.bf16.mxu0 0
        %6044 = vmatmul.mubr.bf16.gmra.mxu0 %v5931
        %v6045 = vpop.f32.mrf.mxu0
        %v6046 = vadd.f32 0.0, %v6045
        %v6047 = vpop.f32.mrf.mxu0
        %v6048 = vpop.f32.mrf.mxu0
        %v6049 = vadd.f32 0.0, %v6048
        %v6050 = vpop.f32.mrf.mxu0
        %6051 = vmatprep.mubr.bf16.mxu0 0
        %6052 = vmatmul.mubr.bf16.gmra.mxu0 %v4381
        %v6053 = vpop.f32.mrf.mxu0
        %v6054 = vadd.f32 0.0, %v6053
        %v6055 = vpop.f32.mrf.mxu0
        %v6056 = vpop.f32.mrf.mxu0
        %v6057 = vadd.f32 0.0, %v6056
        %v6058 = vpop.f32.mrf.mxu0
        %6059 = vmatprep.mubr.bf16.mxu0 0
        %6060 = vmatmul.mubr.bf16.gmra.mxu0 %v4382
        %v6061 = vpop.f32.mrf.mxu0
        %v6062 = vadd.f32 0.0, %v6061
        %v6063 = vpop.f32.mrf.mxu0
        %v6064 = vpop.f32.mrf.mxu0
        %v6065 = vadd.f32 0.0, %v6064
        %v6066 = vpop.f32.mrf.mxu0
        %6067 = vmatprep.mubr.bf16.mxu0 0
        %6068 = vmatmul.mubr.bf16.gmra.mxu0 %v4383
        %v6069 = vpop.f32.mrf.mxu0
        %v6070 = vadd.f32 0.0, %v6069
        %v6071 = vpop.f32.mrf.mxu0
        %v6072 = vpop.f32.mrf.mxu0
        %v6073 = vadd.f32 0.0, %v6072
        %v6074 = vpop.f32.mrf.mxu0
        %6075 = vmatprep.mubr.bf16.mxu0 0
        %6076 = vmatmul.mubr.bf16.gmra.mxu0 %v5932
        %v6077 = vpop.f32.mrf.mxu0
        %v6078 = vadd.f32 0.0, %v6077
        %v6079 = vpop.f32.mrf.mxu0
        %v6080 = vpop.f32.mrf.mxu0
        %v6081 = vadd.f32 0.0, %v6080
        %v6082 = vpop.f32.mrf.mxu0
        %6083 = vmatprep.mubr.bf16.mxu0 0
        %6084 = vmatmul.mubr.bf16.gmra.mxu0 %v4385
        %v6085 = vpop.f32.mrf.mxu0
        %v6086 = vadd.f32 0.0, %v6085
        %v6087 = vpop.f32.mrf.mxu0
        %v6088 = vpop.f32.mrf.mxu0
        %v6089 = vadd.f32 0.0, %v6088
        %v6090 = vpop.f32.mrf.mxu0
        %6091 = vmatprep.mubr.bf16.mxu0 0
        %6092 = vmatmul.mubr.bf16.gmra.mxu0 %v4386
        %v6093 = vpop.f32.mrf.mxu0
        %v6094 = vadd.f32 0.0, %v6093
        %v6095 = vpop.f32.mrf.mxu0
        %v6096 = vpop.f32.mrf.mxu0
        %v6097 = vadd.f32 0.0, %v6096
        %v6098 = vpop.f32.mrf.mxu0
        %6099 = vmatprep.mubr.bf16.mxu0 0
        %6100 = vmatmul.mubr.bf16.gmra.mxu0 %v4387
        %v6101 = vpop.f32.mrf.mxu0
        %v6102 = vadd.f32 0.0, %v6101
        %v6103 = vpop.f32.mrf.mxu0
        %v6104 = vpop.f32.mrf.mxu0
        %v6105 = vadd.f32 0.0, %v6104
        %v6106 = vpop.f32.mrf.mxu0
        %6107 = vmatprep.mubr.bf16.mxu0 0
        %6108 = vmatmul.mubr.bf16.gmra.mxu0 %v5933
        %v6109 = vpop.f32.mrf.mxu0
        %v6110 = vadd.f32 0.0, %v6109
        %v6111 = vpop.f32.mrf.mxu0
        %v6112 = vpop.f32.mrf.mxu0
        %v6113 = vadd.f32 0.0, %v6112
        %v6114 = vpop.f32.mrf.mxu0
        %6115 = vmatprep.mubr.bf16.mxu0 0
        %6116 = vmatmul.mubr.bf16.gmra.mxu0 %v4389
        %v6117 = vpop.f32.mrf.mxu0
        %v6118 = vadd.f32 0.0, %v6117
        %v6119 = vpop.f32.mrf.mxu0
        %v6120 = vpop.f32.mrf.mxu0
        %v6121 = vadd.f32 0.0, %v6120
        %v6122 = vpop.f32.mrf.mxu0
        %6123 = vmatprep.mubr.bf16.mxu0 0
        %6124 = vmatmul.mubr.bf16.gmra.mxu0 %v4390
        %v6125 = vpop.f32.mrf.mxu0
        %v6126 = vadd.f32 0.0, %v6125
        %v6127 = vpop.f32.mrf.mxu0
        %v6128 = vpop.f32.mrf.mxu0
        %v6129 = vadd.f32 0.0, %v6128
        %v6130 = vpop.f32.mrf.mxu0
        %6131 = vmatprep.mubr.bf16.mxu0 0
        %6132 = vmatmul.mubr.bf16.gmra.mxu0 %v4391
        %v6133 = vpop.f32.mrf.mxu0
        %v6134 = vadd.f32 0.0, %v6133
        %v6135 = vpop.f32.mrf.mxu0
        %v6136 = vpop.f32.mrf.mxu0
        %v6137 = vadd.f32 0.0, %v6136
        %v6138 = vpop.f32.mrf.mxu0
        %6139 = vmatprep.mubr.bf16.mxu0 0
        %6140 = vmatmul.mubr.bf16.gmra.mxu0 %v5934
        %v6141 = vpop.f32.mrf.mxu0
        %v6142 = vadd.f32 0.0, %v6141
        %v6143 = vpop.f32.mrf.mxu0
        %v6144 = vpop.f32.mrf.mxu0
        %v6145 = vadd.f32 0.0, %v6144
        %v6146 = vpop.f32.mrf.mxu0
        %6147 = vdwg.mxu0
        %v6148 = vadd.f32 %v5881, %v6022
        %v6149 = vadd.f32 %v5882, %v6025
        %v6150 = vadd.f32 %v5883, %v6030
        %v6151 = vadd.f32 %v5884, %v6033
        %v6152 = vadd.f32 %v5885, %v6038
        %v6153 = vadd.f32 %v5886, %v6041
        %v6154 = vadd.f32 %v5887, %v6046
        %v6155 = vadd.f32 %v5888, %v6049
        %v6156 = vadd.f32 %v5889, %v6054
        %v6157 = vadd.f32 %v5890, %v6057
        %v6158 = vadd.f32 %v5891, %v6062
        %v6159 = vadd.f32 %v5892, %v6065
        %v6160 = vadd.f32 %v5893, %v6070
        %v6161 = vadd.f32 %v5894, %v6073
        %v6162 = vadd.f32 %v5895, %v6078
        %v6163 = vadd.f32 %v5896, %v6081
        %v6164 = vadd.f32 %v5897, %v6086
        %v6165 = vadd.f32 %v5898, %v6089
        %v6166 = vadd.f32 %v5899, %v6094
        %v6167 = vadd.f32 %v5900, %v6097
        %v6168 = vadd.f32 %v5901, %v6102
        %v6169 = vadd.f32 %v5902, %v6105
        %v6170 = vadd.f32 %v5903, %v6110
        %v6171 = vadd.f32 %v5904, %v6113
        %v6172 = vadd.f32 %v5905, %v6118
        %v6173 = vadd.f32 %v5906, %v6121
        %v6174 = vadd.f32 %v5907, %v6126
        %v6175 = vadd.f32 %v5908, %v6129
        %v6176 = vadd.f32 %v5909, %v6134
        %v6177 = vadd.f32 %v5910, %v6137
        %v6178 = vadd.f32 %v5911, %v6142
        %v6179 = vadd.f32 %v5912, %v6145
        %s6180 = smul.addr %s2984, 4
        %s6181 = scalar_lea.vmem [#allocation4], %s6180
        %v6182 = vld [vmem:[%s6181] sm:$0xf]
        %v6183 = vld [vmem:[%s6181 + $0x4] sm:$0xf]
        %v6184 = vld [vmem:[%s6181 + $0x8] sm:$0xf]
        %v6185 = vld [vmem:[%s6181 + $0xc] sm:$0xf]
        %v6186 = vld [vmem:[%s6181 + $0x10] sm:$0xf]
        %v6187 = vld [vmem:[%s6181 + $0x14] sm:$0xf]
        %v6188 = vld [vmem:[%s6181 + $0x18] sm:$0xf]
        %v6189 = vld [vmem:[%s6181 + $0x1c] sm:$0xf]
        %v6190 = vld [vmem:[%s6181 + $0x20] sm:$0xf]
        %v6191 = vld [vmem:[%s6181 + $0x24] sm:$0xf]
        %v6192 = vld [vmem:[%s6181 + $0x28] sm:$0xf]
        %v6193 = vld [vmem:[%s6181 + $0x2c] sm:$0xf]
        %v6194 = vld [vmem:[%s6181 + $0x30] sm:$0xf]
        %v6195 = vld [vmem:[%s6181 + $0x34] sm:$0xf]
        %v6196 = vld [vmem:[%s6181 + $0x38] sm:$0xf]
        %v6197 = vld [vmem:[%s6181 + $0x3c] sm:$0xf]
        %v6198 = vpack.c.b16 %v839, %v5337
        %v6199 = vpack.c.b16 %v839, %v5338
        %v6200 = vpack.c.b16 %v839, %v5339
        %v6201 = vpack.c.b16 %v839, %v5340
        %v6222 = vunpack.c.l.b16 %v6182
        %v6223 = vunpack.c.l.b16 %v6183
        %v6224 = vunpack.c.l.b16 %v6184
        %v6225 = vunpack.c.l.b16 %v6185
        %v6226 = vunpack.c.l.b16 %v6186
        %v6227 = vunpack.c.l.b16 %v6187
        %v6228 = vunpack.c.l.b16 %v6188
        %v6229 = vunpack.c.l.b16 %v6189
        %v6230 = vunpack.c.l.b16 %v6190
        %v6231 = vunpack.c.l.b16 %v6191
        %v6232 = vunpack.c.l.b16 %v6192
        %v6233 = vunpack.c.l.b16 %v6193
        %v6234 = vunpack.c.l.b16 %v6194
        %v6235 = vunpack.c.l.b16 %v6195
        %v6236 = vunpack.c.l.b16 %v6196
        %v6237 = vunpack.c.l.b16 %v6197
        %v6238 = vpack.c.b16 %v6223, %v6222
        %v6239 = vpack.c.b16 %v6225, %v6224
        %v6240 = vpack.c.b16 %v6227, %v6226
        %v6241 = vpack.c.b16 %v6229, %v6228
        %v6242 = vpack.c.b16 %v6231, %v6230
        %v6243 = vpack.c.b16 %v6233, %v6232
        %v6244 = vpack.c.b16 %v6235, %v6234
        %v6245 = vpack.c.b16 %v6237, %v6236
        %6254 = vmatprep.subr.bf16.mxu0 0
        %6255 = vmatpush1.bf16.msra.mxu0 %v6245
        %6256 = vmatprep.subr.bf16.mxu0 0
        %6257 = vmatpush1.bf16.msra.mxu0 %v6244
        %6258 = vmatprep.subr.bf16.mxu0 0
        %6259 = vmatpush1.bf16.msra.mxu0 %v6243
        %6260 = vmatprep.subr.bf16.mxu0 0
        %6261 = vmatpush1.bf16.msra.mxu0 %v6242
        %6262 = vmatprep.subr.bf16.mxu0 0
        %6263 = vmatpush1.bf16.msra.mxu0 %v6241
        %6264 = vmatprep.subr.bf16.mxu0 0
        %6265 = vmatpush1.bf16.msra.mxu0 %v6240
        %6266 = vmatprep.subr.bf16.mxu0 0
        %6267 = vmatpush1.bf16.msra.mxu0 %v6239
        %6268 = vmatprep.subr.bf16.mxu0 0
        %6269 = vmatpush1.bf16.msra.mxu0 %v6238
        %6270 = vmatprep.subr.bf16.mxu0 0
        %6271 = vmatpush2.bf16.msra.mxu0 0
        %6272 = vmatprep.subr.bf16.mxu0 0
        %6273 = vmatpush2.bf16.msra.mxu0 0
        %6274 = vmatprep.subr.bf16.mxu0 0
        %6275 = vmatpush2.bf16.msra.mxu0 0
        %6276 = vmatprep.subr.bf16.mxu0 0
        %6277 = vmatpush2.bf16.msra.mxu0 0
        %6278 = vmatprep.subr.bf16.mxu0 0
        %6279 = vmatpush2.bf16.msra.mxu0 0
        %6280 = vmatprep.subr.bf16.mxu0 0
        %6281 = vmatpush2.bf16.msra.mxu0 0
        %6282 = vmatprep.subr.bf16.mxu0 0
        %6283 = vmatpush2.bf16.msra.mxu0 0
        %6284 = vmatprep.subr.bf16.mxu0 0
        %6285 = vmatpush2.bf16.msra.mxu0 0
        %6286 = vmatprep.mubr.bf16.mxu0 0
        %6287 = vmatmul.mubr.bf16.gmra.mxu0 %v4080
        %v6288 = vpop.f32.mrf.mxu0
        %v6289 = vadd.f32 0.0, %v6288
        %v6290 = vpop.f32.mrf.mxu0
        %v6291 = vpop.f32.mrf.mxu0
        %v6292 = vadd.f32 0.0, %v6291
        %v6293 = vpop.f32.mrf.mxu0
        %6294 = vmatprep.mubr.bf16.mxu0 0
        %6295 = vmatmul.mubr.bf16.gmra.mxu0 %v4081
        %v6296 = vpop.f32.mrf.mxu0
        %v6297 = vadd.f32 0.0, %v6296
        %v6298 = vpop.f32.mrf.mxu0
        %v6299 = vpop.f32.mrf.mxu0
        %v6300 = vadd.f32 0.0, %v6299
        %v6301 = vpop.f32.mrf.mxu0
        %6302 = vmatprep.mubr.bf16.mxu0 0
        %6303 = vmatmul.mubr.bf16.gmra.mxu0 %v4082
        %v6304 = vpop.f32.mrf.mxu0
        %v6305 = vadd.f32 0.0, %v6304
        %v6306 = vpop.f32.mrf.mxu0
        %v6307 = vpop.f32.mrf.mxu0
        %v6308 = vadd.f32 0.0, %v6307
        %v6309 = vpop.f32.mrf.mxu0
        %6310 = vmatprep.mubr.bf16.mxu0 0
        %6311 = vmatmul.mubr.bf16.gmra.mxu0 %v6198
        %v6312 = vpop.f32.mrf.mxu0
        %v6313 = vadd.f32 0.0, %v6312
        %v6314 = vpop.f32.mrf.mxu0
        %v6315 = vpop.f32.mrf.mxu0
        %v6316 = vadd.f32 0.0, %v6315
        %v6317 = vpop.f32.mrf.mxu0
        %6318 = vmatprep.mubr.bf16.mxu0 0
        %6319 = vmatmul.mubr.bf16.gmra.mxu0 %v4084
        %v6320 = vpop.f32.mrf.mxu0
        %v6321 = vadd.f32 0.0, %v6320
        %v6322 = vpop.f32.mrf.mxu0
        %v6323 = vpop.f32.mrf.mxu0
        %v6324 = vadd.f32 0.0, %v6323
        %v6325 = vpop.f32.mrf.mxu0
        %6326 = vmatprep.mubr.bf16.mxu0 0
        %6327 = vmatmul.mubr.bf16.gmra.mxu0 %v4085
        %v6328 = vpop.f32.mrf.mxu0
        %v6329 = vadd.f32 0.0, %v6328
        %v6330 = vpop.f32.mrf.mxu0
        %v6331 = vpop.f32.mrf.mxu0
        %v6332 = vadd.f32 0.0, %v6331
        %v6333 = vpop.f32.mrf.mxu0
        %6334 = vmatprep.mubr.bf16.mxu0 0
        %6335 = vmatmul.mubr.bf16.gmra.mxu0 %v4086
        %v6336 = vpop.f32.mrf.mxu0
        %v6337 = vadd.f32 0.0, %v6336
        %v6338 = vpop.f32.mrf.mxu0
        %v6339 = vpop.f32.mrf.mxu0
        %v6340 = vadd.f32 0.0, %v6339
        %v6341 = vpop.f32.mrf.mxu0
        %6342 = vmatprep.mubr.bf16.mxu0 0
        %6343 = vmatmul.mubr.bf16.gmra.mxu0 %v6199
        %v6344 = vpop.f32.mrf.mxu0
        %v6345 = vadd.f32 0.0, %v6344
        %v6346 = vpop.f32.mrf.mxu0
        %v6347 = vpop.f32.mrf.mxu0
        %v6348 = vadd.f32 0.0, %v6347
        %v6349 = vpop.f32.mrf.mxu0
        %6350 = vmatprep.mubr.bf16.mxu0 0
        %6351 = vmatmul.mubr.bf16.gmra.mxu0 %v4088
        %v6352 = vpop.f32.mrf.mxu0
        %v6353 = vadd.f32 0.0, %v6352
        %v6354 = vpop.f32.mrf.mxu0
        %v6355 = vpop.f32.mrf.mxu0
        %v6356 = vadd.f32 0.0, %v6355
        %v6357 = vpop.f32.mrf.mxu0
        %6358 = vmatprep.mubr.bf16.mxu0 0
        %6359 = vmatmul.mubr.bf16.gmra.mxu0 %v4089
        %v6360 = vpop.f32.mrf.mxu0
        %v6361 = vadd.f32 0.0, %v6360
        %v6362 = vpop.f32.mrf.mxu0
        %v6363 = vpop.f32.mrf.mxu0
        %v6364 = vadd.f32 0.0, %v6363
        %v6365 = vpop.f32.mrf.mxu0
        %6366 = vmatprep.mubr.bf16.mxu0 0
        %6367 = vmatmul.mubr.bf16.gmra.mxu0 %v4090
        %v6368 = vpop.f32.mrf.mxu0
        %v6369 = vadd.f32 0.0, %v6368
        %v6370 = vpop.f32.mrf.mxu0
        %v6371 = vpop.f32.mrf.mxu0
        %v6372 = vadd.f32 0.0, %v6371
        %v6373 = vpop.f32.mrf.mxu0
        %6374 = vmatprep.mubr.bf16.mxu0 0
        %6375 = vmatmul.mubr.bf16.gmra.mxu0 %v6200
        %v6376 = vpop.f32.mrf.mxu0
        %v6377 = vadd.f32 0.0, %v6376
        %v6378 = vpop.f32.mrf.mxu0
        %v6379 = vpop.f32.mrf.mxu0
        %v6380 = vadd.f32 0.0, %v6379
        %v6381 = vpop.f32.mrf.mxu0
        %6382 = vmatprep.mubr.bf16.mxu0 0
        %6383 = vmatmul.mubr.bf16.gmra.mxu0 %v4092
        %v6384 = vpop.f32.mrf.mxu0
        %v6385 = vadd.f32 0.0, %v6384
        %v6386 = vpop.f32.mrf.mxu0
        %v6387 = vpop.f32.mrf.mxu0
        %v6388 = vadd.f32 0.0, %v6387
        %v6389 = vpop.f32.mrf.mxu0
        %6390 = vmatprep.mubr.bf16.mxu0 0
        %6391 = vmatmul.mubr.bf16.gmra.mxu0 %v4093
        %v6392 = vpop.f32.mrf.mxu0
        %v6393 = vadd.f32 0.0, %v6392
        %v6394 = vpop.f32.mrf.mxu0
        %v6395 = vpop.f32.mrf.mxu0
        %v6396 = vadd.f32 0.0, %v6395
        %v6397 = vpop.f32.mrf.mxu0
        %6398 = vmatprep.mubr.bf16.mxu0 0
        %6399 = vmatmul.mubr.bf16.gmra.mxu0 %v4094
        %v6400 = vpop.f32.mrf.mxu0
        %v6401 = vadd.f32 0.0, %v6400
        %v6402 = vpop.f32.mrf.mxu0
        %v6403 = vpop.f32.mrf.mxu0
        %v6404 = vadd.f32 0.0, %v6403
        %v6405 = vpop.f32.mrf.mxu0
        %6406 = vmatprep.mubr.bf16.mxu0 0
        %6407 = vmatmul.mubr.bf16.gmra.mxu0 %v6201
        %v6408 = vpop.f32.mrf.mxu0
        %v6409 = vadd.f32 0.0, %v6408
        %v6410 = vpop.f32.mrf.mxu0
        %v6411 = vpop.f32.mrf.mxu0
        %v6412 = vadd.f32 0.0, %v6411
        %v6413 = vpop.f32.mrf.mxu0
        %6414 = vdwg.mxu0
        %v6415 = vadd.f32 %v6148, %v6289
        %v6416 = vadd.f32 %v6149, %v6292
        %v6417 = vadd.f32 %v6150, %v6297
        %v6418 = vadd.f32 %v6151, %v6300
        %v6419 = vadd.f32 %v6152, %v6305
        %v6420 = vadd.f32 %v6153, %v6308
        %v6421 = vadd.f32 %v6154, %v6313
        %v6422 = vadd.f32 %v6155, %v6316
        %v6423 = vadd.f32 %v6156, %v6321
        %v6424 = vadd.f32 %v6157, %v6324
        %v6425 = vadd.f32 %v6158, %v6329
        %v6426 = vadd.f32 %v6159, %v6332
        %v6427 = vadd.f32 %v6160, %v6337
        %v6428 = vadd.f32 %v6161, %v6340
        %v6429 = vadd.f32 %v6162, %v6345
        %v6430 = vadd.f32 %v6163, %v6348
        %v6431 = vadd.f32 %v6164, %v6353
        %v6432 = vadd.f32 %v6165, %v6356
        %v6433 = vadd.f32 %v6166, %v6361
        %v6434 = vadd.f32 %v6167, %v6364
        %v6435 = vadd.f32 %v6168, %v6369
        %v6436 = vadd.f32 %v6169, %v6372
        %v6437 = vadd.f32 %v6170, %v6377
        %v6438 = vadd.f32 %v6171, %v6380
        %v6439 = vadd.f32 %v6172, %v6385
        %v6440 = vadd.f32 %v6173, %v6388
        %v6441 = vadd.f32 %v6174, %v6393
        %v6442 = vadd.f32 %v6175, %v6396
        %v6443 = vadd.f32 %v6176, %v6401
        %v6444 = vadd.f32 %v6177, %v6404
        %v6445 = vadd.f32 %v6178, %v6409
        %v6446 = vadd.f32 %v6179, %v6412
        %s6447 = smul.addr %s3253, 4
        %s6448 = scalar_lea.vmem [#allocation4], %s6447
        %v6449 = vld [vmem:[%s6448] sm:$0xf]
        %v6450 = vld [vmem:[%s6448 + $0x4] sm:$0xf]
        %v6451 = vld [vmem:[%s6448 + $0x8] sm:$0xf]
        %v6452 = vld [vmem:[%s6448 + $0xc] sm:$0xf]
        %v6453 = vld [vmem:[%s6448 + $0x10] sm:$0xf]
        %v6454 = vld [vmem:[%s6448 + $0x14] sm:$0xf]
        %v6455 = vld [vmem:[%s6448 + $0x18] sm:$0xf]
        %v6456 = vld [vmem:[%s6448 + $0x1c] sm:$0xf]
        %v6457 = vld [vmem:[%s6448 + $0x20] sm:$0xf]
        %v6458 = vld [vmem:[%s6448 + $0x24] sm:$0xf]
        %v6459 = vld [vmem:[%s6448 + $0x28] sm:$0xf]
        %v6460 = vld [vmem:[%s6448 + $0x2c] sm:$0xf]
        %v6461 = vld [vmem:[%s6448 + $0x30] sm:$0xf]
        %v6462 = vld [vmem:[%s6448 + $0x34] sm:$0xf]
        %v6463 = vld [vmem:[%s6448 + $0x38] sm:$0xf]
        %v6464 = vld [vmem:[%s6448 + $0x3c] sm:$0xf]
        %v6465 = vpack.c.b16 %v1457, %v5636
        %v6466 = vpack.c.b16 %v1457, %v5637
        %v6467 = vpack.c.b16 %v1457, %v5638
        %v6468 = vpack.c.b16 %v1457, %v5639
        %v6489 = vunpack.c.l.b16 %v6449
        %v6490 = vunpack.c.l.b16 %v6450
        %v6491 = vunpack.c.l.b16 %v6451
        %v6492 = vunpack.c.l.b16 %v6452
        %v6493 = vunpack.c.l.b16 %v6453
        %v6494 = vunpack.c.l.b16 %v6454
        %v6495 = vunpack.c.l.b16 %v6455
        %v6496 = vunpack.c.l.b16 %v6456
        %v6497 = vunpack.c.l.b16 %v6457
        %v6498 = vunpack.c.l.b16 %v6458
        %v6499 = vunpack.c.l.b16 %v6459
        %v6500 = vunpack.c.l.b16 %v6460
        %v6501 = vunpack.c.l.b16 %v6461
        %v6502 = vunpack.c.l.b16 %v6462
        %v6503 = vunpack.c.l.b16 %v6463
        %v6504 = vunpack.c.l.b16 %v6464
        %v6505 = vpack.c.b16 %v6490, %v6489
        %v6506 = vpack.c.b16 %v6492, %v6491
        %v6507 = vpack.c.b16 %v6494, %v6493
        %v6508 = vpack.c.b16 %v6496, %v6495
        %v6509 = vpack.c.b16 %v6498, %v6497
        %v6510 = vpack.c.b16 %v6500, %v6499
        %v6511 = vpack.c.b16 %v6502, %v6501
        %v6512 = vpack.c.b16 %v6504, %v6503
        %6521 = vmatprep.subr.bf16.mxu0 0
        %6522 = vmatpush1.bf16.msra.mxu0 %v6512
        %6523 = vmatprep.subr.bf16.mxu0 0
        %6524 = vmatpush1.bf16.msra.mxu0 %v6511
        %6525 = vmatprep.subr.bf16.mxu0 0
        %6526 = vmatpush1.bf16.msra.mxu0 %v6510
        %6527 = vmatprep.subr.bf16.mxu0 0
        %6528 = vmatpush1.bf16.msra.mxu0 %v6509
        %6529 = vmatprep.subr.bf16.mxu0 0
        %6530 = vmatpush1.bf16.msra.mxu0 %v6508
        %6531 = vmatprep.subr.bf16.mxu0 0
        %6532 = vmatpush1.bf16.msra.mxu0 %v6507
        %6533 = vmatprep.subr.bf16.mxu0 0
        %6534 = vmatpush1.bf16.msra.mxu0 %v6506
        %6535 = vmatprep.subr.bf16.mxu0 0
        %6536 = vmatpush1.bf16.msra.mxu0 %v6505
        %6537 = vmatprep.subr.bf16.mxu0 0
        %6538 = vmatpush2.bf16.msra.mxu0 0
        %6539 = vmatprep.subr.bf16.mxu0 0
        %6540 = vmatpush2.bf16.msra.mxu0 0
        %6541 = vmatprep.subr.bf16.mxu0 0
        %6542 = vmatpush2.bf16.msra.mxu0 0
        %6543 = vmatprep.subr.bf16.mxu0 0
        %6544 = vmatpush2.bf16.msra.mxu0 0
        %6545 = vmatprep.subr.bf16.mxu0 0
        %6546 = vmatpush2.bf16.msra.mxu0 0
        %6547 = vmatprep.subr.bf16.mxu0 0
        %6548 = vmatpush2.bf16.msra.mxu0 0
        %6549 = vmatprep.subr.bf16.mxu0 0
        %6550 = vmatpush2.bf16.msra.mxu0 0
        %6551 = vmatprep.subr.bf16.mxu0 0
        %6552 = vmatpush2.bf16.msra.mxu0 0
        %6553 = vmatprep.mubr.bf16.mxu0 0
        %6554 = vmatmul.mubr.bf16.gmra.mxu0 %v4692
        %v6555 = vpop.f32.mrf.mxu0
        %v6556 = vadd.f32 0.0, %v6555
        %v6557 = vpop.f32.mrf.mxu0
        %v6558 = vpop.f32.mrf.mxu0
        %v6559 = vadd.f32 0.0, %v6558
        %v6560 = vpop.f32.mrf.mxu0
        %6561 = vmatprep.mubr.bf16.mxu0 0
        %6562 = vmatmul.mubr.bf16.gmra.mxu0 %v4693
        %v6563 = vpop.f32.mrf.mxu0
        %v6564 = vadd.f32 0.0, %v6563
        %v6565 = vpop.f32.mrf.mxu0
        %v6566 = vpop.f32.mrf.mxu0
        %v6567 = vadd.f32 0.0, %v6566
        %v6568 = vpop.f32.mrf.mxu0
        %6569 = vmatprep.mubr.bf16.mxu0 0
        %6570 = vmatmul.mubr.bf16.gmra.mxu0 %v4694
        %v6571 = vpop.f32.mrf.mxu0
        %v6572 = vadd.f32 0.0, %v6571
        %v6573 = vpop.f32.mrf.mxu0
        %v6574 = vpop.f32.mrf.mxu0
        %v6575 = vadd.f32 0.0, %v6574
        %v6576 = vpop.f32.mrf.mxu0
        %6577 = vmatprep.mubr.bf16.mxu0 0
        %6578 = vmatmul.mubr.bf16.gmra.mxu0 %v6465
        %v6579 = vpop.f32.mrf.mxu0
        %v6580 = vadd.f32 0.0, %v6579
        %v6581 = vpop.f32.mrf.mxu0
        %v6582 = vpop.f32.mrf.mxu0
        %v6583 = vadd.f32 0.0, %v6582
        %v6584 = vpop.f32.mrf.mxu0
        %6585 = vmatprep.mubr.bf16.mxu0 0
        %6586 = vmatmul.mubr.bf16.gmra.mxu0 %v4696
        %v6587 = vpop.f32.mrf.mxu0
        %v6588 = vadd.f32 0.0, %v6587
        %v6589 = vpop.f32.mrf.mxu0
        %v6590 = vpop.f32.mrf.mxu0
        %v6591 = vadd.f32 0.0, %v6590
        %v6592 = vpop.f32.mrf.mxu0
        %6593 = vmatprep.mubr.bf16.mxu0 0
        %6594 = vmatmul.mubr.bf16.gmra.mxu0 %v4697
        %v6595 = vpop.f32.mrf.mxu0
        %v6596 = vadd.f32 0.0, %v6595
        %v6597 = vpop.f32.mrf.mxu0
        %v6598 = vpop.f32.mrf.mxu0
        %v6599 = vadd.f32 0.0, %v6598
        %v6600 = vpop.f32.mrf.mxu0
        %6601 = vmatprep.mubr.bf16.mxu0 0
        %6602 = vmatmul.mubr.bf16.gmra.mxu0 %v4698
        %v6603 = vpop.f32.mrf.mxu0
        %v6604 = vadd.f32 0.0, %v6603
        %v6605 = vpop.f32.mrf.mxu0
        %v6606 = vpop.f32.mrf.mxu0
        %v6607 = vadd.f32 0.0, %v6606
        %v6608 = vpop.f32.mrf.mxu0
        %6609 = vmatprep.mubr.bf16.mxu0 0
        %6610 = vmatmul.mubr.bf16.gmra.mxu0 %v6466
        %v6611 = vpop.f32.mrf.mxu0
        %v6612 = vadd.f32 0.0, %v6611
        %v6613 = vpop.f32.mrf.mxu0
        %v6614 = vpop.f32.mrf.mxu0
        %v6615 = vadd.f32 0.0, %v6614
        %v6616 = vpop.f32.mrf.mxu0
        %6617 = vmatprep.mubr.bf16.mxu0 0
        %6618 = vmatmul.mubr.bf16.gmra.mxu0 %v4700
        %v6619 = vpop.f32.mrf.mxu0
        %v6620 = vadd.f32 0.0, %v6619
        %v6621 = vpop.f32.mrf.mxu0
        %v6622 = vpop.f32.mrf.mxu0
        %v6623 = vadd.f32 0.0, %v6622
        %v6624 = vpop.f32.mrf.mxu0
        %6625 = vmatprep.mubr.bf16.mxu0 0
        %6626 = vmatmul.mubr.bf16.gmra.mxu0 %v4701
        %v6627 = vpop.f32.mrf.mxu0
        %v6628 = vadd.f32 0.0, %v6627
        %v6629 = vpop.f32.mrf.mxu0
        %v6630 = vpop.f32.mrf.mxu0
        %v6631 = vadd.f32 0.0, %v6630
        %v6632 = vpop.f32.mrf.mxu0
        %6633 = vmatprep.mubr.bf16.mxu0 0
        %6634 = vmatmul.mubr.bf16.gmra.mxu0 %v4702
        %v6635 = vpop.f32.mrf.mxu0
        %v6636 = vadd.f32 0.0, %v6635
        %v6637 = vpop.f32.mrf.mxu0
        %v6638 = vpop.f32.mrf.mxu0
        %v6639 = vadd.f32 0.0, %v6638
        %v6640 = vpop.f32.mrf.mxu0
        %6641 = vmatprep.mubr.bf16.mxu0 0
        %6642 = vmatmul.mubr.bf16.gmra.mxu0 %v6467
        %v6643 = vpop.f32.mrf.mxu0
        %v6644 = vadd.f32 0.0, %v6643
        %v6645 = vpop.f32.mrf.mxu0
        %v6646 = vpop.f32.mrf.mxu0
        %v6647 = vadd.f32 0.0, %v6646
        %v6648 = vpop.f32.mrf.mxu0
        %6649 = vmatprep.mubr.bf16.mxu0 0
        %6650 = vmatmul.mubr.bf16.gmra.mxu0 %v4704
        %v6651 = vpop.f32.mrf.mxu0
        %v6652 = vadd.f32 0.0, %v6651
        %v6653 = vpop.f32.mrf.mxu0
        %v6654 = vpop.f32.mrf.mxu0
        %v6655 = vadd.f32 0.0, %v6654
        %v6656 = vpop.f32.mrf.mxu0
        %6657 = vmatprep.mubr.bf16.mxu0 0
        %6658 = vmatmul.mubr.bf16.gmra.mxu0 %v4705
        %v6659 = vpop.f32.mrf.mxu0
        %v6660 = vadd.f32 0.0, %v6659
        %v6661 = vpop.f32.mrf.mxu0
        %v6662 = vpop.f32.mrf.mxu0
        %v6663 = vadd.f32 0.0, %v6662
        %v6664 = vpop.f32.mrf.mxu0
        %6665 = vmatprep.mubr.bf16.mxu0 0
        %6666 = vmatmul.mubr.bf16.gmra.mxu0 %v4706
        %v6667 = vpop.f32.mrf.mxu0
        %v6668 = vadd.f32 0.0, %v6667
        %v6669 = vpop.f32.mrf.mxu0
        %v6670 = vpop.f32.mrf.mxu0
        %v6671 = vadd.f32 0.0, %v6670
        %v6672 = vpop.f32.mrf.mxu0
        %6673 = vmatprep.mubr.bf16.mxu0 0
        %6674 = vmatmul.mubr.bf16.gmra.mxu0 %v6468
        %v6675 = vpop.f32.mrf.mxu0
        %v6676 = vadd.f32 0.0, %v6675
        %v6677 = vpop.f32.mrf.mxu0
        %v6678 = vpop.f32.mrf.mxu0
        %v6679 = vadd.f32 0.0, %v6678
        %v6680 = vpop.f32.mrf.mxu0
        %6681 = vdwg.mxu0
        %v6682 = vadd.f32 %v6415, %v6556
        %v6683 = vadd.f32 %v6416, %v6559
        %v6684 = vadd.f32 %v6417, %v6564
        %v6685 = vadd.f32 %v6418, %v6567
        %v6686 = vadd.f32 %v6419, %v6572
        %v6687 = vadd.f32 %v6420, %v6575
        %v6688 = vadd.f32 %v6421, %v6580
        %v6689 = vadd.f32 %v6422, %v6583
        %v6690 = vadd.f32 %v6423, %v6588
        %v6691 = vadd.f32 %v6424, %v6591
        %v6692 = vadd.f32 %v6425, %v6596
        %v6693 = vadd.f32 %v6426, %v6599
        %v6694 = vadd.f32 %v6427, %v6604
        %v6695 = vadd.f32 %v6428, %v6607
        %v6696 = vadd.f32 %v6429, %v6612
        %v6697 = vadd.f32 %v6430, %v6615
        %v6698 = vadd.f32 %v6431, %v6620
        %v6699 = vadd.f32 %v6432, %v6623
        %v6700 = vadd.f32 %v6433, %v6628
        %v6701 = vadd.f32 %v6434, %v6631
        %v6702 = vadd.f32 %v6435, %v6636
        %v6703 = vadd.f32 %v6436, %v6639
        %v6704 = vadd.f32 %v6437, %v6644
        %v6705 = vadd.f32 %v6438, %v6647
        %v6706 = vadd.f32 %v6439, %v6652
        %v6707 = vadd.f32 %v6440, %v6655
        %v6708 = vadd.f32 %v6441, %v6660
        %v6709 = vadd.f32 %v6442, %v6663
        %v6710 = vadd.f32 %v6443, %v6668
        %v6711 = vadd.f32 %v6444, %v6671
        %v6712 = vadd.f32 %v6445, %v6676
        %v6713 = vadd.f32 %v6446, %v6679
        %v6715 = vlaneseq
        %v6716 = vshrl.u32 %v6715, 7
        %v6717 = vsub.s32 0, %v6716
        %v6718 = vrot.slane %v354, %v6717
        %v6720 = vadd.f32 %v6682, %v6718
        %v6721 = vadd.f32 %v6683, %v6718
        %v6722 = vadd.f32 %v6684, %v6718
        %v6723 = vadd.f32 %v6685, %v6718
        %v6724 = vadd.f32 %v6686, %v6718
        %v6725 = vadd.f32 %v6687, %v6718
        %v6726 = vadd.f32 %v6688, %v6718
        %v6727 = vadd.f32 %v6689, %v6718
        %v6728 = vadd.f32 %v6690, %v6718
        %v6729 = vadd.f32 %v6691, %v6718
        %v6730 = vadd.f32 %v6692, %v6718
        %v6731 = vadd.f32 %v6693, %v6718
        %v6732 = vadd.f32 %v6694, %v6718
        %v6733 = vadd.f32 %v6695, %v6718
        %v6734 = vadd.f32 %v6696, %v6718
        %v6735 = vadd.f32 %v6697, %v6718
        %v6736 = vadd.f32 %v6698, %v6718
        %v6737 = vadd.f32 %v6699, %v6718
        %v6738 = vadd.f32 %v6700, %v6718
        %v6739 = vadd.f32 %v6701, %v6718
        %v6740 = vadd.f32 %v6702, %v6718
        %v6741 = vadd.f32 %v6703, %v6718
        %v6742 = vadd.f32 %v6704, %v6718
        %v6743 = vadd.f32 %v6705, %v6718
        %v6744 = vadd.f32 %v6706, %v6718
        %v6745 = vadd.f32 %v6707, %v6718
        %v6746 = vadd.f32 %v6708, %v6718
        %v6747 = vadd.f32 %v6709, %v6718
        %v6748 = vadd.f32 %v6710, %v6718
        %v6749 = vadd.f32 %v6711, %v6718
        %v6750 = vadd.f32 %v6712, %v6718
        %v6751 = vadd.f32 %v6713, %v6718
        %v6752 = vadd.f32 %v6720, %v317
        %v6753 = vadd.f32 %v6721, %v318
        %v6754 = vadd.f32 %v6722, %v319
        %v6755 = vadd.f32 %v6723, %v320
        %v6756 = vadd.f32 %v6724, %v321
        %v6757 = vadd.f32 %v6725, %v322
        %v6758 = vadd.f32 %v6726, %v323
        %v6759 = vadd.f32 %v6727, %v324
        %v6760 = vadd.f32 %v6728, %v325
        %v6761 = vadd.f32 %v6729, %v326
        %v6762 = vadd.f32 %v6730, %v327
        %v6763 = vadd.f32 %v6731, %v328
        %v6764 = vadd.f32 %v6732, %v329
        %v6765 = vadd.f32 %v6733, %v330
        %v6766 = vadd.f32 %v6734, %v331
        %v6767 = vadd.f32 %v6735, %v332
        %v6768 = vadd.f32 %v6736, %v333
        %v6769 = vadd.f32 %v6737, %v334
        %v6770 = vadd.f32 %v6738, %v335
        %v6771 = vadd.f32 %v6739, %v336
        %v6772 = vadd.f32 %v6740, %v337
        %v6773 = vadd.f32 %v6741, %v338
        %v6774 = vadd.f32 %v6742, %v339
        %v6775 = vadd.f32 %v6743, %v340
        %v6776 = vadd.f32 %v6744, %v341
        %v6777 = vadd.f32 %v6745, %v342
        %v6778 = vadd.f32 %v6746, %v343
        %v6779 = vadd.f32 %v6747, %v344
        %v6780 = vadd.f32 %v6748, %v345
        %v6781 = vadd.f32 %v6749, %v346
        %v6782 = vadd.f32 %v6750, %v347
        %v6783 = vadd.f32 %v6751, %v348
        %v6784 = vmax.f32 %v6752, 0.0
        %v6785 = vmax.f32 %v6753, 0.0
        %v6786 = vmax.f32 %v6754, 0.0
        %v6787 = vmax.f32 %v6755, 0.0
        %v6788 = vmax.f32 %v6756, 0.0
        %v6789 = vmax.f32 %v6757, 0.0
        %v6790 = vmax.f32 %v6758, 0.0
        %v6791 = vmax.f32 %v6759, 0.0
        %v6792 = vmax.f32 %v6760, 0.0
        %v6793 = vmax.f32 %v6761, 0.0
        %v6794 = vmax.f32 %v6762, 0.0
        %v6795 = vmax.f32 %v6763, 0.0
        %v6796 = vmax.f32 %v6764, 0.0
        %v6797 = vmax.f32 %v6765, 0.0
        %v6798 = vmax.f32 %v6766, 0.0
        %v6799 = vmax.f32 %v6767, 0.0
        %v6800 = vmax.f32 %v6768, 0.0
        %v6801 = vmax.f32 %v6769, 0.0
        %v6802 = vmax.f32 %v6770, 0.0
        %v6803 = vmax.f32 %v6771, 0.0
        %v6804 = vmax.f32 %v6772, 0.0
        %v6805 = vmax.f32 %v6773, 0.0
        %v6806 = vmax.f32 %v6774, 0.0
        %v6807 = vmax.f32 %v6775, 0.0
        %v6808 = vmax.f32 %v6776, 0.0
        %v6809 = vmax.f32 %v6777, 0.0
        %v6810 = vmax.f32 %v6778, 0.0
        %v6811 = vmax.f32 %v6779, 0.0
        %v6812 = vmax.f32 %v6780, 0.0
        %v6813 = vmax.f32 %v6781, 0.0
        %v6814 = vmax.f32 %v6782, 0.0
        %v6815 = vmax.f32 %v6783, 0.0
        %6816 = vst [vmem:[%s246] sm:$0xff] %v6784
        %6817 = vst [vmem:[%s246 + $0x8] sm:$0xff] %v6785
        %6818 = vst [vmem:[%s246 + $0x10] sm:$0xff] %v6786
        %6819 = vst [vmem:[%s246 + $0x18] sm:$0xff] %v6787
        %6820 = vst [vmem:[%s246 + $0x20] sm:$0xff] %v6788
        %6821 = vst [vmem:[%s246 + $0x28] sm:$0xff] %v6789
        %6822 = vst [vmem:[%s246 + $0x30] sm:$0xff] %v6790
        %6823 = vst [vmem:[%s246 + $0x38] sm:$0xff] %v6791
        %6824 = vst [vmem:[%s246 + $0x40] sm:$0xff] %v6792
        %6825 = vst [vmem:[%s246 + $0x48] sm:$0xff] %v6793
        %6826 = vst [vmem:[%s246 + $0x50] sm:$0xff] %v6794
        %6827 = vst [vmem:[%s246 + $0x58] sm:$0xff] %v6795
        %6828 = vst [vmem:[%s246 + $0x60] sm:$0xff] %v6796
        %6829 = vst [vmem:[%s246 + $0x68] sm:$0xff] %v6797
        %6830 = vst [vmem:[%s246 + $0x70] sm:$0xff] %v6798
        %6831 = vst [vmem:[%s246 + $0x78] sm:$0xff] %v6799
        %6832 = vst [vmem:[%s246 + $0x80] sm:$0xff] %v6800
        %6833 = vst [vmem:[%s246 + $0x88] sm:$0xff] %v6801
        %6834 = vst [vmem:[%s246 + $0x90] sm:$0xff] %v6802
        %6835 = vst [vmem:[%s246 + $0x98] sm:$0xff] %v6803
        %6836 = vst [vmem:[%s246 + $0xa0] sm:$0xff] %v6804
        %6837 = vst [vmem:[%s246 + $0xa8] sm:$0xff] %v6805
        %6838 = vst [vmem:[%s246 + $0xb0] sm:$0xff] %v6806
        %6839 = vst [vmem:[%s246 + $0xb8] sm:$0xff] %v6807
        %6840 = vst [vmem:[%s246 + $0xc0] sm:$0xff] %v6808
        %6841 = vst [vmem:[%s246 + $0xc8] sm:$0xff] %v6809
        %6842 = vst [vmem:[%s246 + $0xd0] sm:$0xff] %v6810
        %6843 = vst [vmem:[%s246 + $0xd8] sm:$0xff] %v6811
        %6844 = vst [vmem:[%s246 + $0xe0] sm:$0xff] %v6812
        %6845 = vst [vmem:[%s246 + $0xe8] sm:$0xff] %v6813
        %6846 = vst [vmem:[%s246 + $0xf0] sm:$0xff] %v6814
        %6847 = vst [vmem:[%s246 + $0xf8] sm:$0xff] %v6815
        %s6848 = smul.u32 4, %s21
        %p6849 = scmp.lt.s32.totalorder %s6848, 7
        %s6850 = scalar_select %p6849, %s6848, 7
        %s6851 = smul.addr %s6850, 8
        %s6852 = smul.addr %s6851, 8
        %s6853 = scalar_lea.vmem %s4, %s6852
        // Predicated region
        $region49: #{res_layers_forward.1} parent=35 // pred_check
          %p6854 = pneg %p136
        $region50: #{res_layers_forward.1} parent=35 // pred_check_branch
          %6856 = sbr.rel (%p6854) target = $region52
        $region51: #{res_layers_forward.1} parent=35 // pred_region
          %s6857 = smul.u32 4, %s21
        $region52: #{res_layers_forward.1} parent=35 // pred_fallthru
          _
      $region36: #{res_layers_forward.1} parent=5 // pred_fallthru
        _
      %p6858 = scmp.le.s32.totalorder 2, %s12
      // Predicated region
      $region53: #{res_layers_forward.1} parent=5 // pred_check
        %p6859 = pneg %p6858
      $region54: #{res_layers_forward.1} parent=5 // pred_check_branch
        %6861 = sbr.rel (%p6859) target = $region56
      $region55: #{res_layers_forward.1} parent=5 // pred_region
        %s6862 = ssub.s32 %s12, 2
        // Predicated region
        $region57: #{res_layers_forward.1} parent=55 // pred_check
          %p6863 = pneg %p142
        $region58: #{res_layers_forward.1} parent=55 // pred_check_branch
          %6865 = sbr.rel (%p6863) target = $region60
        $region59: #{res_layers_forward.1} parent=55 // pred_region
          %s6866 = smul.u32 4, %s23
          %p6867 = scmp.lt.s32.totalorder %s6866, 7
          %s6868 = scalar_select %p6867, %s6866, 7
          %s6869 = smul.addr %s6868, 8
          %s6870 = smul.addr %s6869, 8
          %s6871 = scalar_lea.vmem %s4, %s6870
        $region60: #{res_layers_forward.1} parent=55 // pred_fallthru
          _
      $region56: #{res_layers_forward.1} parent=5 // pred_fallthru
        _
    $region6: #{res_layers_forward.1} parent=1 // loop_footer
      %s16 = sadd.s32 1, %s12
    $region7: #{res_layers_forward.1} parent=1 // loop_footer_branch
      %11 = sbr.rel target = $region3
    $region8: #{res_layers_forward.1} parent=1 // loop_exit
      _
    %6872 = vsyncpa [#allocation3], 1
    %s6873 = scalar_lea.sflag [#allocation3], 1
    %6874 = vsyncpa %s6873, 1
    %6875 = vsyncpa [#allocation5], 1

</llo_original>
